<compile_context>
chip_gen: v7x
topology: tpu7x:2x2x1
jax: 0.10.0
libtpu: 0.0.40
codegen_flags: <defaults>
</compile_context>

<pallas_src>
import functools

import jax
import jax.numpy as jnp
from jax import lax
from jax.experimental import pallas as pl
from jax.experimental.pallas import tpu as pltpu


_BN_EPS = 1e-5
_MAX_TM = 65536


def _round_up(x, m):
    return -(-x // m) * m


def _tpu_vmem_bytes():
    """Physical per-core VMEM (falls back to the v7x value, the smallest)."""
    try:
        info = pltpu.get_tpu_info()
        for name in ("vmem_capacity_bytes", "vmem_bytes", "vmem_size_bytes"):
            v = getattr(info, name, None)
            if v:
                return int(v)
    except Exception:
        pass
    return 64 * 1024 * 1024


_PHYS_VMEM = _tpu_vmem_bytes()
# Working-set target for one pipelined grid step (leave headroom for the
# compiler's own scratch): ~32 MiB on v7x (64 MiB VMEM), ~64 MiB on v5e/v6e.
_TILE_BUDGET = min(_PHYS_VMEM // 2, 64 * 1024 * 1024)
_VMEM_LIMIT = min((_PHYS_VMEM * 3) // 4, 96 * 1024 * 1024)


def _pick_tile(total, target, quantum=128):
    """Largest divisor of `total` that is a multiple of `quantum` and <= target
    (falls back to `total` if `total` is not a multiple of `quantum`)."""
    if total <= quantum or total % quantum != 0:
        return total
    d = (min(max(target, quantum), total) // quantum) * quantum
    while d >= quantum:
        if total % d == 0:
            return d
        d -= quantum
    return total


def _pick_m_tile(total, bytes_per_lane, fixed_bytes=0):
    """Channel-aware lane-tile: biggest tile whose working set fits the VMEM
    budget; keeps >= 2 tiles when possible so the v7x megacore has work."""
    budget = max(_TILE_BUDGET - fixed_bytes, 2 * 1024 * 1024)
    target = max(128, min(budget // max(bytes_per_lane, 1), _MAX_TM))
    if total >= 256:
        target = min(target, total // 2)
    return _pick_tile(total, target)


# ----------------------------------------------------------------------------
# Pallas kernels (channel-major: activations are [C, M], M on lanes)
# ----------------------------------------------------------------------------
def _gram_kernel(x_ref, g_ref, r_ref):
    """Per-tile Gram stats of the input: G = x x^T, r = sum_m x."""
    x = x_ref[...]                                            # [C, TM] bf16
    g_ref[...] = lax.dot_general(
        x, x, (((1,), (1,)), ((), ())),
        preferred_element_type=jnp.float32)[None]             # [1, C, C]
    r_ref[...] = jnp.sum(x.astype(jnp.float32), axis=1,
                         keepdims=True)[None]                 # [1, C, 1]


def _apply_gram_kernel(x_ref, w_ref, sc_ref, sh_ref, act_ref, g_ref, r_ref,
                       *, tm, bs, bsp, use_mask):
    """Apply folded BN+ReLU of the previous layer (one per-channel FMA), write
    the bf16 activation, and emit its per-tile Gram stats (for the next BN)."""
    z = jnp.dot(w_ref[...], x_ref[...], preferred_element_type=jnp.float32)
    a = jnp.maximum(z * sc_ref[...] + sh_ref[...], 0.0)       # [Co, TM] f32
    if use_mask:
        # zero the (b,s)-pad columns so they never contaminate BN statistics
        col = lax.broadcasted_iota(jnp.int32, (1, tm), 1) + pl.program_id(0) * tm
        a = jnp.where((col % bsp) < bs, a, 0.0)
    a_bf = a.astype(jnp.bfloat16)
    act_ref[...] = a_bf
    g_ref[...] = lax.dot_general(
        a_bf, a_bf, (((1,), (1,)), ((), ())),
        preferred_element_type=jnp.float32)[None]             # [1, Co, Co]
    r_ref[...] = jnp.sum(a_bf.astype(jnp.float32), axis=1,
                         keepdims=True)[None]                 # [1, Co, 1]


def _final_kernel(x_ref, w_ref, sc_ref, sh_ref, o_ref):
    """Last layer (folded BN + ReLU) fused with the max-pool over K.
    K is the inner ("arbitrary") grid axis; o_ref is the resident accumulator."""
    k = pl.program_id(1)
    z = jnp.dot(w_ref[...], x_ref[...], preferred_element_type=jnp.float32)
    a = jnp.maximum(z * sc_ref[...] + sh_ref[...], 0.0)

    @pl.when(k == 0)
    def _():
        o_ref[...] = a

    @pl.when(k > 0)
    def _():
        o_ref[...] = jnp.maximum(o_ref[...], a)


# ----------------------------------------------------------------------------
# Pallas pass wrappers
# ----------------------------------------------------------------------------
def _gram_pass(x):
    cp, mp = x.shape
    tm = _pick_m_tile(mp, 8 * cp, fixed_bytes=8 * cp * cp + 65536)
    nt = mp // tm
    g, r = pl.pallas_call(
        _gram_kernel,
        grid=(nt,),
        in_specs=[pl.BlockSpec((cp, tm), lambda i: (0, i))],
        out_specs=(pl.BlockSpec((1, cp, cp), lambda i: (i, 0, 0)),
                   pl.BlockSpec((1, cp, 1), lambda i: (i, 0, 0))),
        out_shape=(jax.ShapeDtypeStruct((nt, cp, cp), jnp.float32),
                   jax.ShapeDtypeStruct((nt, cp, 1), jnp.float32)),
        compiler_params=pltpu.CompilerParams(
            dimension_semantics=("parallel",), vmem_limit_bytes=_VMEM_LIMIT),
    )(x)
    return jnp.sum(g, axis=0), jnp.sum(r, axis=0)[:, 0]


def _apply_gram_pass(x, w, sc, sh, use_mask, bs, bsp):
    cin, mp = x.shape
    co = w.shape[0]
    fixed = 8 * co * co + 2 * co * cin + 65536
    tm = _pick_m_tile(mp, 4 * cin + 12 * co, fixed_bytes=fixed)
    nt = mp // tm
    kern = functools.partial(_apply_gram_kernel, tm=tm, bs=bs, bsp=bsp,
                             use_mask=use_mask)
    act, g, r = pl.pallas_call(
        kern,
        grid=(nt,),
        in_specs=[pl.BlockSpec((cin, tm), lambda i: (0, i)),
                  pl.BlockSpec(w.shape, lambda i: (0, 0)),
                  pl.BlockSpec(sc.shape, lambda i: (0, 0)),
                  pl.BlockSpec(sh.shape, lambda i: (0, 0))],
        out_specs=(pl.BlockSpec((co, tm), lambda i: (0, i)),
                   pl.BlockSpec((1, co, co), lambda i: (i, 0, 0)),
                   pl.BlockSpec((1, co, 1), lambda i: (i, 0, 0))),
        out_shape=(jax.ShapeDtypeStruct((co, mp), jnp.bfloat16),
                   jax.ShapeDtypeStruct((nt, co, co), jnp.float32),
                   jax.ShapeDtypeStruct((nt, co, 1), jnp.float32)),
        compiler_params=pltpu.CompilerParams(
            dimension_semantics=("parallel",), vmem_limit_bytes=_VMEM_LIMIT),
    )(x, w, sc, sh)
    return act, jnp.sum(g, axis=0), jnp.sum(r, axis=0)[:, 0]


def _final_pass(x, w, sc, sh, *, K, BSp):
    cin, _ = x.shape
    co = w.shape[0]
    fixed = 2 * co * cin + 65536
    t_bs = _pick_m_tile(BSp, 4 * cin + 12 * co, fixed_bytes=fixed)
    nbs = BSp // t_bs
    return pl.pallas_call(
        _final_kernel,
        grid=(nbs, K),
        in_specs=[pl.BlockSpec((cin, t_bs), lambda i, k: (0, k * nbs + i)),
                  pl.BlockSpec(w.shape, lambda i, k: (0, 0)),
                  pl.BlockSpec(sc.shape, lambda i, k: (0, 0)),
                  pl.BlockSpec(sh.shape, lambda i, k: (0, 0))],
        out_specs=pl.BlockSpec((co, t_bs), lambda i, k: (0, i)),
        out_shape=jax.ShapeDtypeStruct((co, BSp), jnp.float32),
        compiler_params=pltpu.CompilerParams(
            dimension_semantics=("parallel", "arbitrary"),
            vmem_limit_bytes=_VMEM_LIMIT),
    )(x, w, sc, sh)


def _fold_bn_gram(w_f32, G, r, gamma, beta, n):
    """Fold train-mode BN of z = W a into a per-channel FMA, using the Gram
    identity sum(z) = W r, sumsq(z) = diag(W G W^T).  Conv bias cancels."""
    sum_z = w_f32 @ r
    sumsq_z = jnp.sum((w_f32 @ G) * w_f32, axis=1)
    mean = sum_z / n
    var = jnp.maximum(sumsq_z / n - mean * mean, 0.0)          # biased variance
    scale = gamma * lax.rsqrt(var + _BN_EPS)
    shift = beta - mean * scale
    return scale.reshape(-1, 1).astype(jnp.float32), \
           shift.reshape(-1, 1).astype(jnp.float32)


def sa_mlp_pallas(x0, params, *, K, BS, BSp):
    """x0: [C0p, K*BSp] bf16, channel-major, k-major columns (pad cols are 0).
    params: list of (W [C_out, C_in], bias, gamma, beta) (unpadded f32).
    Returns [C_lastp, BSp] f32 = max over K of the conv/BN(train)/ReLU MLP."""
    c0p, _ = x0.shape
    n_true = K * BS
    L = len(params)
    use_mask = (BSp != BS)

    # Pad every layer's channel dims to multiples of 16 (bf16 sublane packing).
    ws_bf, ws_f32, gammas, betas = [], [], [], []
    cin_p = c0p
    for (w, _b, g, bt) in params:
        co, ci = w.shape
        co_p = _round_up(co, 16)
        wp = jnp.zeros((co_p, cin_p), jnp.float32).at[:co, :ci].set(w)
        w_bf = wp.astype(jnp.bfloat16)
        ws_bf.append(w_bf)
        ws_f32.append(w_bf.astype(jnp.float32))   # fold uses the rounded weights
        gammas.append(jnp.zeros((co_p,), jnp.float32).at[:co].set(g))
        betas.append(jnp.zeros((co_p,), jnp.float32).at[:co].set(bt))
        cin_p = co_p

    # Pass 0: Gram statistics of the input -> folded BN of layer 0.
    G, r = _gram_pass(x0)
    sc, sh = _fold_bn_gram(ws_f32[0], G, r, gammas[0], betas[0], n_true)

    # Passes 1 .. L-1: apply layer l-1, emit Gram stats of its activation.
    act = x0
    for l in range(1, L):
        act, G, r = _apply_gram_pass(act, ws_bf[l - 1], sc, sh, use_mask, BS, BSp)
        sc, sh = _fold_bn_gram(ws_f32[l], G, r, gammas[l], betas[l], n_true)

    # Final pass: apply layer L-1 fused with the max-pool over K.
    return _final_pass(act, ws_bf[L - 1], sc, sh, K=K, BSp=BSp)


# ----------------------------------------------------------------------------
# JAX glue: FPS / ball query / grouping (data-dependent gathers stay in JAX)
# ----------------------------------------------------------------------------
def square_distance(src, dst):
    # src [B,S,3], dst [B,N,3] -> [B,S,N]
    s2 = jnp.sum(src * src, axis=-1, keepdims=True)
    d2 = jnp.sum(dst * dst, axis=-1, keepdims=True)
    cross = jnp.einsum("bsc,bnc->bsn", src, dst)
    return s2 - 2.0 * cross + jnp.swapaxes(d2, -1, -2)


def index_points(points, idx):
    # points [B,N,C]; idx [B,S] or [B,S,K] (int32)
    if idx.ndim == 2:
        return jnp.take_along_axis(points, idx[:, :, None], axis=1)
    B, S, Kn = idx.shape
    flat = idx.reshape(B, S * Kn)
    out = jnp.take_along_axis(points, flat[:, :, None], axis=1)
    return out.reshape(B, S, Kn, points.shape[-1])


def farthest_point_sample(xyz, npoint):
    # xyz [B,N,3] -> [B,npoint] int32.  Deterministic start at index 0.
    B, N, _ = xyz.shape

    def body(i, carry):
        distance, farthest, centroids = carry
        centroids = centroids.at[:, i].set(farthest)
        centroid = jnp.take_along_axis(xyz, farthest[:, None, None], axis=1)
        dist = jnp.sum((xyz - centroid) ** 2, axis=-1)
        distance = jnp.minimum(distance, dist)
        farthest = jnp.argmax(distance, axis=-1).astype(jnp.int32)
        return distance, farthest, centroids

    carry = (jnp.full((B, N), 1e10, jnp.float32),
             jnp.zeros((B,), jnp.int32),
             jnp.zeros((B, npoint), jnp.int32))
    _, _, centroids = lax.fori_loop(0, npoint, body, carry)
    return centroids


def query_ball_point(radius, nsample, xyz, new_xyz):
    # xyz [B,N,3], new_xyz [B,S,3] -> [B,S,nsample] int32
    B, N, _ = xyz.shape
    sqrdists = square_distance(new_xyz, xyz)
    cand = jnp.broadcast_to(jnp.arange(N, dtype=jnp.int32), sqrdists.shape)
    cand = jnp.where(sqrdists > radius ** 2, jnp.int32(N), cand)
    vals, _ = lax.top_k(-cand, nsample)       # nsample smallest in-ball indices
    group_idx = -vals
    group_first = group_idx[:, :, :1]
    return jnp.where(group_idx == N, group_first, group_idx)


# ----------------------------------------------------------------------------
# PointNetSetAbstraction.forward
# ----------------------------------------------------------------------------
@functools.partial(jax.jit, static_argnames=("npoint", "nsample", "group_all"))
def pointnet_set_abstraction(xyz, points, params, radius, *, npoint, nsample,
                             group_all):
    """xyz [B,3,N], points [B,D,N] or None -> (new_xyz [B,3,S], feats [B,C_last,S])."""
    B, _, N = xyz.shape
    xyz_cm = xyz.astype(jnp.float32)                      # [B, 3, N] channel-major
    pts_cm = points.astype(jnp.float32) if points is not None else None

    if group_all:
        new_xyz_bsc = jnp.zeros((B, 1, 3), jnp.float32)
        S, K = 1, N
        parts = [xyz_cm[:, :, None, :]]                   # [B, 3, 1, N]
        if pts_cm is not None:
            parts.append(pts_cm[:, :, None, :])           # [B, D, 1, N]
    else:
        xyz_t = jnp.transpose(xyz_cm, (0, 2, 1))          # [B, N, 3]
        fps_idx = farthest_point_sample(xyz_t, npoint)    # [B, S]
        new_xyz_bsc = index_points(xyz_t, fps_idx)        # [B, S, 3]
        idx = query_ball_point(radius, nsample, xyz_t, new_xyz_bsc)  # [B, S, K]
        S, K = npoint, nsample
        idx_flat = idx.reshape(B, S * K)
        # Gather directly from the channel-major inputs (no [B,S,K,C] detour).
        g_xyz = jnp.take_along_axis(xyz_cm, idx_flat[:, None, :], axis=2)
        g_xyz = g_xyz.reshape(B, 3, S, K)
        g_xyz = g_xyz - jnp.transpose(new_xyz_bsc, (0, 2, 1))[:, :, :, None]
        parts = [g_xyz]
        if pts_cm is not None:
            g_pts = jnp.take_along_axis(pts_cm, idx_flat[:, None, :], axis=2)
            parts.append(g_pts.reshape(B, -1, S, K))

    C0 = sum(p.shape[1] for p in parts)
    C0p = _round_up(C0, 16)
    if C0p != C0:
        parts.append(jnp.zeros((B, C0p - C0, S, K), jnp.float32))
    new_cm = jnp.concatenate(parts, axis=1)               # [B, C0p, S, K] f32

    BS = B * S
    BSp = _round_up(BS, 128)
    # [C0p, K, B, S] in bf16 (halves the pre-Pallas relayout traffic), pad the
    # flattened (b,s) axis to BSp so every Pallas tile is 128-lane dense.
    x0 = jnp.transpose(new_cm.astype(jnp.bfloat16), (1, 3, 0, 2)).reshape(C0p, K, BS)
    if BSp != BS:
        x0 = jnp.pad(x0, ((0, 0), (0, 0), (0, BSp - BS)))
    x0 = x0.reshape(C0p, K * BSp)

    feats2d = sa_mlp_pallas(x0, params, K=K, BS=BS, BSp=BSp)   # [C_lastp, BSp] f32
    C_last = params[-1][0].shape[0]
    feats = feats2d[:C_last, :BS].reshape(C_last, B, S).transpose(1, 0, 2)
    new_xyz_out = jnp.transpose(new_xyz_bsc, (0, 2, 1))        # [B, 3, S]
    return new_xyz_out, feats


# ----------------------------------------------------------------------------
# Pure-JAX f32 reference (train-mode BN), for a loose correctness check
# ----------------------------------------------------------------------------
def pointnet_sa_reference(xyz, points, params, radius, *, npoint, nsample,
                          group_all):
    B, _, N = xyz.shape
    xyz_t = jnp.transpose(xyz, (0, 2, 1)).astype(jnp.float32)
    pts_t = (jnp.transpose(points, (0, 2, 1)).astype(jnp.float32)
             if points is not None else None)
    if group_all:
        new_xyz = jnp.zeros((B, 1, 3), jnp.float32)
        grouped = xyz_t[:, None, :, :]
        new_points = (jnp.concatenate([grouped, pts_t[:, None, :, :]], -1)
                      if pts_t is not None else grouped)
    else:
        fps_idx = farthest_point_sample(xyz_t, npoint)
        new_xyz = index_points(xyz_t, fps_idx)
        idx = query_ball_point(radius, nsample, xyz_t, new_xyz)
        g_xyz = index_points(xyz_t, idx) - new_xyz[:, :, None, :]
        new_points = (jnp.concatenate([g_xyz, index_points(pts_t, idx)], -1)
                      if pts_t is not None else g_xyz)
    x = jnp.transpose(new_points, (0, 3, 2, 1))            # [B, C, K, S]
    for (w, b, gamma, beta) in params:
        z = jnp.einsum("oc,bcks->boks", w, x) + b[None, :, None, None]
        mean = z.mean(axis=(0, 2, 3))
        var = z.var(axis=(0, 2, 3))
        z = ((z - mean[None, :, None, None])
             * (gamma * lax.rsqrt(var + _BN_EPS))[None, :, None, None]
             + beta[None, :, None, None])
        x = jnp.maximum(z, 0.0)
    feats = jnp.max(x, axis=2)                             # [B, C_last, S]
    return jnp.transpose(new_xyz, (0, 2, 1)), feats


def init_params(key, in_channel, mlp):
    """Deterministic Conv2d(1x1)+BatchNorm2d parameters (PyTorch default init).
    Conv bias is generated for parity but cancels exactly under train-mode BN."""
    params = []
    last = in_channel
    for out in mlp:
        key, kw, kb = jax.random.split(key, 3)
        bound = 1.0 / (last ** 0.5)
        w = jax.random.uniform(kw, (out, last), jnp.float32, -bound, bound)
        b = jax.random.uniform(kb, (out,), jnp.float32, -bound, bound)
        params.append((w, b, jnp.ones((out,), jnp.float32),
                       jnp.zeros((out,), jnp.float32)))
        last = out
    return params


if __name__ == "__main__":
    key = jax.random.PRNGKey(0)
    keys = jax.random.split(key, 6)

    B, N, D = 2, 16, 4
    mlp = [16, 32, 32]
    in_channel = 3 + D
    params = init_params(keys[0], in_channel, mlp)

    # ---- config 1: tiny shapes, B*S=16 (<128) -> padded+masked (b,s) path ----
    npoint, radius, nsample = 8, 0.4, 8
    xyz = jax.random.uniform(keys[1], (B, 3, N), jnp.float32)
    pts = jax.random.normal(keys[2], (B, D, N), jnp.float32)
    new_xyz, feats = pointnet_set_abstraction(
        xyz, pts, params, radius, npoint=npoint, nsample=nsample, group_all=False)
    jax.block_until_ready((new_xyz, feats))
    assert new_xyz.shape == (B, 3, npoint), new_xyz.shape
    assert feats.shape == (B, mlp[-1], npoint), feats.shape
    assert bool(jnp.all(jnp.isfinite(feats)))
    ref_xyz, ref_feats = pointnet_sa_reference(
        xyz, pts, params, radius, npoint=npoint, nsample=nsample, group_all=False)
    assert bool(jnp.allclose(new_xyz, ref_xyz, atol=1e-5))
    max_err = float(jnp.max(jnp.abs(feats - ref_feats)))
    assert max_err < 0.3, f"config1 max_err={max_err}"     # bf16 kernel vs f32 ref

    # ---- config 2: B*S=256 -> unmasked path, >=2 parallel tiles in final pass ----
    B2, N2, npoint2, nsample2 = 4, 128, 64, 8
    xyz2 = jax.random.uniform(keys[3], (B2, 3, N2), jnp.float32)
    pts2 = jax.random.normal(keys[4], (B2, D, N2), jnp.float32)
    new_xyz2, feats2 = pointnet_set_abstraction(
        xyz2, pts2, params, radius, npoint=npoint2, nsample=nsample2,
        group_all=False)
    jax.block_until_ready((new_xyz2, feats2))
    assert new_xyz2.shape == (B2, 3, npoint2), new_xyz2.shape
    assert feats2.shape == (B2, mlp[-1], npoint2), feats2.shape
    assert bool(jnp.all(jnp.isfinite(feats2)))

    # ---- config 3: group_all -> S=1, K=N reduction ----
    new_xyz3, feats3 = pointnet_set_abstraction(
        xyz, pts, params, radius, npoint=None, nsample=None, group_all=True)
    jax.block_until_ready((new_xyz3, feats3))
    assert new_xyz3.shape == (B, 3, 1), new_xyz3.shape
    assert feats3.shape == (B, mlp[-1], 1), feats3.shape
    ref_xyz3, ref_feats3 = pointnet_sa_reference(
        xyz, pts, params, radius, npoint=None, nsample=None, group_all=True)
    max_err3 = float(jnp.max(jnp.abs(feats3 - ref_feats3)))
    assert max_err3 < 0.3, f"config3 max_err={max_err3}"

    print("KERNEL_OK")
</pallas_src>

<mosaic_0001>
module attributes {stable_mosaic.version = 11 : i64} {
  func.func @_gram_kernel(%arg0: i32, %arg1: memref<16x512xbf16, #tpu.memory_space<vmem>>, %arg2: memref<1x16x16xf32, #tpu.memory_space<vmem>>, %arg3: memref<1x16x1xf32, #tpu.memory_space<vmem>>) attributes {dimension_semantics = [#tpu.dimension_semantics<parallel>], iteration_bounds = array<i64: 2>, scalar_prefetch = 0 : i64, scratch_operands = 0 : i64, tpu.core_type = #tpu.core_type<tc>, window_params = [{transform_indices = @transform_0, window_bounds = array<i64: 16, 512>}, {transform_indices = @transform_1, window_bounds = array<i64: 1, 16, 16>}, {transform_indices = @transform_2, window_bounds = array<i64: 1, 16, 1>}]} {
    %c0 = arith.constant 0 : index
    %c0_0 = arith.constant 0 : index
    %0 = vector.load %arg1[%c0, %c0_0] : memref<16x512xbf16, #tpu.memory_space<vmem>>, vector<16x512xbf16>
    %cst = arith.constant dense<0.000000e+00> : vector<16x16xf32>
    %1 = tpu.matmul %0, %0, %cst {dimension_numbers = #tpu.dot_dimension_numbers<[1], [1], [0], [0], [0, 0, 1, 0], [], []>} : vector<16x512xbf16>, vector<16x512xbf16>, vector<16x16xf32> -> vector<16x16xf32>
    %2 = vector.shape_cast %1 : vector<16x16xf32> to vector<1x16x16xf32>
    %c0_1 = arith.constant 0 : index
    %c0_2 = arith.constant 0 : index
    %c0_3 = arith.constant 0 : index
    %3 = vector.load %arg2[%c0_1, %c0_2, %c0_3] : memref<1x16x16xf32, #tpu.memory_space<vmem>>, vector<1x16x16xf32>
    tpu.vector_store %arg2[%c0_1, %c0_2, %c0_3], %2 {strides = array<i32>} : memref<1x16x16xf32, #tpu.memory_space<vmem>>, vector<1x16x16xf32>,
    %4 = arith.extf %0 : vector<16x512xbf16> to vector<16x512xf32>
    %cst_4 = arith.constant dense<0.000000e+00> : vector<16xf32>
    %5 = vector.multi_reduction <add>, %4, %cst_4 [1] : vector<16x512xf32> to vector<16xf32>
    %6 = vector.shape_cast %5 : vector<16xf32> to vector<16x1xf32>
    %7 = vector.shape_cast %6 : vector<16x1xf32> to vector<1x16x1xf32>
    %c0_5 = arith.constant 0 : index
    %c0_6 = arith.constant 0 : index
    %c0_7 = arith.constant 0 : index
    %8 = vector.load %arg3[%c0_5, %c0_6, %c0_7] : memref<1x16x1xf32, #tpu.memory_space<vmem>>, vector<1x16x1xf32>
    tpu.vector_store %arg3[%c0_5, %c0_6, %c0_7], %7 {strides = array<i32>} : memref<1x16x1xf32, #tpu.memory_space<vmem>>, vector<1x16x1xf32>,
    return
  }
  func.func @transform_0(%arg0: i32) -> (i32, i32) {
    %c0_i32 = arith.constant 0 : i32
    %c0_i32_0 = arith.constant 0 : i32
    return %c0_i32, %arg0 : i32, i32
  }
  func.func @transform_1(%arg0: i32) -> (i32, i32, i32) {
    %c0_i32 = arith.constant 0 : i32
    %c0_i32_0 = arith.constant 0 : i32
    %c0_i32_1 = arith.constant 0 : i32
    return %arg0, %c0_i32, %c0_i32_0 : i32, i32, i32
  }
  func.func @transform_2(%arg0: i32) -> (i32, i32, i32) {
    %c0_i32 = arith.constant 0 : i32
    %c0_i32_0 = arith.constant 0 : i32
    %c0_i32_1 = arith.constant 0 : i32
    return %arg0, %c0_i32, %c0_i32_0 : i32, i32, i32
  }
}

module attributes {stable_mosaic.version = 11 : i64} {
  func.func @_apply_gram_kernel(%arg0: i32, %arg1: memref<16x512xbf16, #tpu.memory_space<vmem>>, %arg2: memref<16x16xbf16, #tpu.memory_space<vmem>>, %arg3: memref<16x1xf32, #tpu.memory_space<vmem>>, %arg4: memref<16x1xf32, #tpu.memory_space<vmem>>, %arg5: memref<16x512xbf16, #tpu.memory_space<vmem>>, %arg6: memref<1x16x16xf32, #tpu.memory_space<vmem>>, %arg7: memref<1x16x1xf32, #tpu.memory_space<vmem>>) attributes {dimension_semantics = [#tpu.dimension_semantics<parallel>], iteration_bounds = array<i64: 2>, scalar_prefetch = 0 : i64, scratch_operands = 0 : i64, tpu.core_type = #tpu.core_type<tc>, window_params = [{transform_indices = @transform_0, window_bounds = array<i64: 16, 512>}, {pipeline_mode = #tpu.pipeline_mode<synchronous>, transform_indices = @transform_1, window_bounds = array<i64: 16, 16>}, {pipeline_mode = #tpu.pipeline_mode<synchronous>, transform_indices = @transform_2, window_bounds = array<i64: 16, 1>}, {pipeline_mode = #tpu.pipeline_mode<synchronous>, transform_indices = @transform_3, window_bounds = array<i64: 16, 1>}, {transform_indices = @transform_4, window_bounds = array<i64: 16, 512>}, {transform_indices = @transform_5, window_bounds = array<i64: 1, 16, 16>}, {transform_indices = @transform_6, window_bounds = array<i64: 1, 16, 1>}]} {
    %c0 = arith.constant 0 : index
    %c0_0 = arith.constant 0 : index
    %0 = vector.load %arg2[%c0, %c0_0] : memref<16x16xbf16, #tpu.memory_space<vmem>>, vector<16x16xbf16>
    %c0_1 = arith.constant 0 : index
    %c0_2 = arith.constant 0 : index
    %1 = vector.load %arg1[%c0_1, %c0_2] : memref<16x512xbf16, #tpu.memory_space<vmem>>, vector<16x512xbf16>
    %cst = arith.constant dense<0.000000e+00> : vector<16x512xf32>
    %2 = tpu.matmul %0, %1, %cst {dimension_numbers = #tpu.dot_dimension_numbers<[1], [0], [0], [1], [0, 0, 1, 1], [], []>} : vector<16x16xbf16>, vector<16x512xbf16>, vector<16x512xf32> -> vector<16x512xf32>
    %c0_3 = arith.constant 0 : index
    %c0_4 = arith.constant 0 : index
    %3 = vector.load %arg3[%c0_3, %c0_4] : memref<16x1xf32, #tpu.memory_space<vmem>>, vector<16x1xf32>
    %4 = vector.broadcast %3 : vector<16x1xf32> to vector<16x512xf32>
    %5 = arith.mulf %2, %4 : vector<16x512xf32>
    %c0_5 = arith.constant 0 : index
    %c0_6 = arith.constant 0 : index
    %6 = vector.load %arg4[%c0_5, %c0_6] : memref<16x1xf32, #tpu.memory_space<vmem>>, vector<16x1xf32>
    %7 = vector.broadcast %6 : vector<16x1xf32> to vector<16x512xf32>
    %8 = arith.addf %5, %7 : vector<16x512xf32>
    %cst_7 = arith.constant 0.000000e+00 : f32
    %9 = vector.broadcast %cst_7 : f32 to vector<16x512xf32>
    %10 = arith.maximumf %8, %9 : vector<16x512xf32>
    %11 = tpu.iota {dimensions = array<i32: 1>} : vector<1x512xi32>
    %c512_i32 = arith.constant 512 : i32
    %12 = arith.muli %arg0, %c512_i32 : i32
    %13 = vector.broadcast %12 : i32 to vector<1x512xi32>
    %14 = arith.addi %11, %13 : vector<1x512xi32>
    %c128_i32 = arith.constant 128 : i32
    %c0_i32 = arith.constant 0 : i32
    %15 = arith.cmpi eq, %c128_i32, %c0_i32 : i32
    %c1_i32 = arith.constant 1 : i32
    %16 = arith.select %15, %c1_i32, %c128_i32 : i32
    %17 = vector.broadcast %16 : i32 to vector<1x512xi32>
    %18 = arith.remsi %14, %17 : vector<1x512xi32>
    %c0_i32_8 = arith.constant 0 : i32
    %19 = vector.broadcast %c0_i32_8 : i32 to vector<1x512xi32>
    %20 = arith.cmpi ne, %18, %19 : vector<1x512xi32>
    %c0_i32_9 = arith.constant 0 : i32
    %21 = vector.broadcast %c0_i32_9 : i32 to vector<1x512xi32>
    %22 = arith.cmpi slt, %18, %21 : vector<1x512xi32>
    %c0_i32_10 = arith.constant 0 : i32
    %23 = arith.cmpi slt, %16, %c0_i32_10 : i32
    %24 = vector.broadcast %23 : i1 to vector<1x512xi1>
    %25 = vector.broadcast %24 : vector<1x512xi1> to vector<1x512xi1>
    %26 = arith.xori %22, %25 : vector<1x512xi1>
    %27 = arith.andi %26, %20 : vector<1x512xi1>
    %28 = vector.broadcast %16 : i32 to vector<1x512xi32>
    %29 = arith.addi %18, %28 : vector<1x512xi32>
    %30 = arith.select %27, %29, %18 : vector<1x512xi1>, vector<1x512xi32>
    %c16_i32 = arith.constant 16 : i32
    %31 = vector.broadcast %c16_i32 : i32 to vector<1x512xi32>
    %32 = arith.cmpi slt, %30, %31 : vector<1x512xi32>
    %cst_11 = arith.constant 0.000000e+00 : f32
    %33 = vector.shape_cast %32 : vector<1x512xi1> to vector<1x512xi1>
    %34 = vector.broadcast %33 : vector<1x512xi1> to vector<16x512xi1>
    %35 = vector.broadcast %cst_11 : f32 to vector<16x512xf32>
    %36 = arith.select %34, %10, %35 : vector<16x512xi1>, vector<16x512xf32>
    %37 = arith.truncf %36 : vector<16x512xf32> to vector<16x512xbf16>
    %c0_12 = arith.constant 0 : index
    %c0_13 = arith.constant 0 : index
    %38 = vector.load %arg5[%c0_12, %c0_13] : memref<16x512xbf16, #tpu.memory_space<vmem>>, vector<16x512xbf16>
    tpu.vector_store %arg5[%c0_12, %c0_13], %37 {strides = array<i32>} : memref<16x512xbf16, #tpu.memory_space<vmem>>, vector<16x512xbf16>,
    %cst_14 = arith.constant dense<0.000000e+00> : vector<16x16xf32>
    %39 = tpu.matmul %37, %37, %cst_14 {dimension_numbers = #tpu.dot_dimension_numbers<[1], [1], [0], [0], [0, 0, 1, 0], [], []>} : vector<16x512xbf16>, vector<16x512xbf16>, vector<16x16xf32> -> vector<16x16xf32>
    %40 = vector.shape_cast %39 : vector<16x16xf32> to vector<1x16x16xf32>
    %c0_15 = arith.constant 0 : index
    %c0_16 = arith.constant 0 : index
    %c0_17 = arith.constant 0 : index
    %41 = vector.load %arg6[%c0_15, %c0_16, %c0_17] : memref<1x16x16xf32, #tpu.memory_space<vmem>>, vector<1x16x16xf32>
    tpu.vector_store %arg6[%c0_15, %c0_16, %c0_17], %40 {strides = array<i32>} : memref<1x16x16xf32, #tpu.memory_space<vmem>>, vector<1x16x16xf32>,
    %42 = arith.extf %37 : vector<16x512xbf16> to vector<16x512xf32>
    %cst_18 = arith.constant dense<0.000000e+00> : vector<16xf32>
    %43 = vector.multi_reduction <add>, %42, %cst_18 [1] : vector<16x512xf32> to vector<16xf32>
    %44 = vector.shape_cast %43 : vector<16xf32> to vector<16x1xf32>
    %45 = vector.shape_cast %44 : vector<16x1xf32> to vector<1x16x1xf32>
    %c0_19 = arith.constant 0 : index
    %c0_20 = arith.constant 0 : index
    %c0_21 = arith.constant 0 : index
    %46 = vector.load %arg7[%c0_19, %c0_20, %c0_21] : memref<1x16x1xf32, #tpu.memory_space<vmem>>, vector<1x16x1xf32>
    tpu.vector_store %arg7[%c0_19, %c0_20, %c0_21], %45 {strides = array<i32>} : memref<1x16x1xf32, #tpu.memory_space<vmem>>, vector<1x16x1xf32>,
    return
  }
  func.func @transform_0(%arg0: i32) -> (i32, i32) {
    %c0_i32 = arith.constant 0 : i32
    %c0_i32_0 = arith.constant 0 : i32
    return %c0_i32, %arg0 : i32, i32
  }
  func.func @transform_1(%arg0: i32) -> (i32, i32) {
    %c0_i32 = arith.constant 0 : i32
    %c0_i32_0 = arith.constant 0 : i32
    %c0_i32_1 = arith.constant 0 : i32
    return %c0_i32, %c0_i32_0 : i32, i32
  }
  func.func @transform_2(%arg0: i32) -> (i32, i32) {
    %c0_i32 = arith.constant 0 : i32
    %c0_i32_0 = arith.constant 0 : i32
    %c0_i32_1 = arith.constant 0 : i32
    return %c0_i32, %c0_i32_0 : i32, i32
  }
  func.func @transform_3(%arg0: i32) -> (i32, i32) {
    %c0_i32 = arith.constant 0 : i32
    %c0_i32_0 = arith.constant 0 : i32
    %c0_i32_1 = arith.constant 0 : i32
    return %c0_i32, %c0_i32_0 : i32, i32
  }
  func.func @transform_4(%arg0: i32) -> (i32, i32) {
    %c0_i32 = arith.constant 0 : i32
    %c0_i32_0 = arith.constant 0 : i32
    return %c0_i32, %arg0 : i32, i32
  }
  func.func @transform_5(%arg0: i32) -> (i32, i32, i32) {
    %c0_i32 = arith.constant 0 : i32
    %c0_i32_0 = arith.constant 0 : i32
    %c0_i32_1 = arith.constant 0 : i32
    return %arg0, %c0_i32, %c0_i32_0 : i32, i32, i32
  }
  func.func @transform_6(%arg0: i32) -> (i32, i32, i32) {
    %c0_i32 = arith.constant 0 : i32
    %c0_i32_0 = arith.constant 0 : i32
    %c0_i32_1 = arith.constant 0 : i32
    return %arg0, %c0_i32, %c0_i32_0 : i32, i32, i32
  }
}

module attributes {stable_mosaic.version = 11 : i64} {
  func.func @_apply_gram_kernel(%arg0: i32, %arg1: memref<16x512xbf16, #tpu.memory_space<vmem>>, %arg2: memref<32x16xbf16, #tpu.memory_space<vmem>>, %arg3: memref<32x1xf32, #tpu.memory_space<vmem>>, %arg4: memref<32x1xf32, #tpu.memory_space<vmem>>, %arg5: memref<32x512xbf16, #tpu.memory_space<vmem>>, %arg6: memref<1x32x32xf32, #tpu.memory_space<vmem>>, %arg7: memref<1x32x1xf32, #tpu.memory_space<vmem>>) attributes {dimension_semantics = [#tpu.dimension_semantics<parallel>], iteration_bounds = array<i64: 2>, scalar_prefetch = 0 : i64, scratch_operands = 0 : i64, tpu.core_type = #tpu.core_type<tc>, window_params = [{transform_indices = @transform_0, window_bounds = array<i64: 16, 512>}, {pipeline_mode = #tpu.pipeline_mode<synchronous>, transform_indices = @transform_1, window_bounds = array<i64: 32, 16>}, {pipeline_mode = #tpu.pipeline_mode<synchronous>, transform_indices = @transform_2, window_bounds = array<i64: 32, 1>}, {pipeline_mode = #tpu.pipeline_mode<synchronous>, transform_indices = @transform_3, window_bounds = array<i64: 32, 1>}, {transform_indices = @transform_4, window_bounds = array<i64: 32, 512>}, {transform_indices = @transform_5, window_bounds = array<i64: 1, 32, 32>}, {transform_indices = @transform_6, window_bounds = array<i64: 1, 32, 1>}]} {
    %c0 = arith.constant 0 : index
    %c0_0 = arith.constant 0 : index
    %0 = vector.load %arg2[%c0, %c0_0] : memref<32x16xbf16, #tpu.memory_space<vmem>>, vector<32x16xbf16>
    %c0_1 = arith.constant 0 : index
    %c0_2 = arith.constant 0 : index
    %1 = vector.load %arg1[%c0_1, %c0_2] : memref<16x512xbf16, #tpu.memory_space<vmem>>, vector<16x512xbf16>
    %cst = arith.constant dense<0.000000e+00> : vector<32x512xf32>
    %2 = tpu.matmul %0, %1, %cst {dimension_numbers = #tpu.dot_dimension_numbers<[1], [0], [0], [1], [0, 0, 1, 1], [], []>} : vector<32x16xbf16>, vector<16x512xbf16>, vector<32x512xf32> -> vector<32x512xf32>
    %c0_3 = arith.constant 0 : index
    %c0_4 = arith.constant 0 : index
    %3 = vector.load %arg3[%c0_3, %c0_4] : memref<32x1xf32, #tpu.memory_space<vmem>>, vector<32x1xf32>
    %4 = vector.broadcast %3 : vector<32x1xf32> to vector<32x512xf32>
    %5 = arith.mulf %2, %4 : vector<32x512xf32>
    %c0_5 = arith.constant 0 : index
    %c0_6 = arith.constant 0 : index
    %6 = vector.load %arg4[%c0_5, %c0_6] : memref<32x1xf32, #tpu.memory_space<vmem>>, vector<32x1xf32>
    %7 = vector.broadcast %6 : vector<32x1xf32> to vector<32x512xf32>
    %8 = arith.addf %5, %7 : vector<32x512xf32>
    %cst_7 = arith.constant 0.000000e+00 : f32
    %9 = vector.broadcast %cst_7 : f32 to vector<32x512xf32>
    %10 = arith.maximumf %8, %9 : vector<32x512xf32>
    %11 = tpu.iota {dimensions = array<i32: 1>} : vector<1x512xi32>
    %c512_i32 = arith.constant 512 : i32
    %12 = arith.muli %arg0, %c512_i32 : i32
    %13 = vector.broadcast %12 : i32 to vector<1x512xi32>
    %14 = arith.addi %11, %13 : vector<1x512xi32>
    %c128_i32 = arith.constant 128 : i32
    %c0_i32 = arith.constant 0 : i32
    %15 = arith.cmpi eq, %c128_i32, %c0_i32 : i32
    %c1_i32 = arith.constant 1 : i32
    %16 = arith.select %15, %c1_i32, %c128_i32 : i32
    %17 = vector.broadcast %16 : i32 to vector<1x512xi32>
    %18 = arith.remsi %14, %17 : vector<1x512xi32>
    %c0_i32_8 = arith.constant 0 : i32
    %19 = vector.broadcast %c0_i32_8 : i32 to vector<1x512xi32>
    %20 = arith.cmpi ne, %18, %19 : vector<1x512xi32>
    %c0_i32_9 = arith.constant 0 : i32
    %21 = vector.broadcast %c0_i32_9 : i32 to vector<1x512xi32>
    %22 = arith.cmpi slt, %18, %21 : vector<1x512xi32>
    %c0_i32_10 = arith.constant 0 : i32
    %23 = arith.cmpi slt, %16, %c0_i32_10 : i32
    %24 = vector.broadcast %23 : i1 to vector<1x512xi1>
    %25 = vector.broadcast %24 : vector<1x512xi1> to vector<1x512xi1>
    %26 = arith.xori %22, %25 : vector<1x512xi1>
    %27 = arith.andi %26, %20 : vector<1x512xi1>
    %28 = vector.broadcast %16 : i32 to vector<1x512xi32>
    %29 = arith.addi %18, %28 : vector<1x512xi32>
    %30 = arith.select %27, %29, %18 : vector<1x512xi1>, vector<1x512xi32>
    %c16_i32 = arith.constant 16 : i32
    %31 = vector.broadcast %c16_i32 : i32 to vector<1x512xi32>
    %32 = arith.cmpi slt, %30, %31 : vector<1x512xi32>
    %cst_11 = arith.constant 0.000000e+00 : f32
    %33 = vector.shape_cast %32 : vector<1x512xi1> to vector<1x512xi1>
    %34 = vector.broadcast %33 : vector<1x512xi1> to vector<32x512xi1>
    %35 = vector.broadcast %cst_11 : f32 to vector<32x512xf32>
    %36 = arith.select %34, %10, %35 : vector<32x512xi1>, vector<32x512xf32>
    %37 = arith.truncf %36 : vector<32x512xf32> to vector<32x512xbf16>
    %c0_12 = arith.constant 0 : index
    %c0_13 = arith.constant 0 : index
    %38 = vector.load %arg5[%c0_12, %c0_13] : memref<32x512xbf16, #tpu.memory_space<vmem>>, vector<32x512xbf16>
    tpu.vector_store %arg5[%c0_12, %c0_13], %37 {strides = array<i32>} : memref<32x512xbf16, #tpu.memory_space<vmem>>, vector<32x512xbf16>,
    %cst_14 = arith.constant dense<0.000000e+00> : vector<32x32xf32>
    %39 = tpu.matmul %37, %37, %cst_14 {dimension_numbers = #tpu.dot_dimension_numbers<[1], [1], [0], [0], [0, 0, 1, 0], [], []>} : vector<32x512xbf16>, vector<32x512xbf16>, vector<32x32xf32> -> vector<32x32xf32>
    %40 = vector.shape_cast %39 : vector<32x32xf32> to vector<1x32x32xf32>
    %c0_15 = arith.constant 0 : index
    %c0_16 = arith.constant 0 : index
    %c0_17 = arith.constant 0 : index
    %41 = vector.load %arg6[%c0_15, %c0_16, %c0_17] : memref<1x32x32xf32, #tpu.memory_space<vmem>>, vector<1x32x32xf32>
    tpu.vector_store %arg6[%c0_15, %c0_16, %c0_17], %40 {strides = array<i32>} : memref<1x32x32xf32, #tpu.memory_space<vmem>>, vector<1x32x32xf32>,
    %42 = arith.extf %37 : vector<32x512xbf16> to vector<32x512xf32>
    %cst_18 = arith.constant dense<0.000000e+00> : vector<32xf32>
    %43 = vector.multi_reduction <add>, %42, %cst_18 [1] : vector<32x512xf32> to vector<32xf32>
    %44 = vector.shape_cast %43 : vector<32xf32> to vector<32x1xf32>
    %45 = vector.shape_cast %44 : vector<32x1xf32> to vector<1x32x1xf32>
    %c0_19 = arith.constant 0 : index
    %c0_20 = arith.constant 0 : index
    %c0_21 = arith.constant 0 : index
    %46 = vector.load %arg7[%c0_19, %c0_20, %c0_21] : memref<1x32x1xf32, #tpu.memory_space<vmem>>, vector<1x32x1xf32>
    tpu.vector_store %arg7[%c0_19, %c0_20, %c0_21], %45 {strides = array<i32>} : memref<1x32x1xf32, #tpu.memory_space<vmem>>, vector<1x32x1xf32>,
    return
  }
  func.func @transform_0(%arg0: i32) -> (i32, i32) {
    %c0_i32 = arith.constant 0 : i32
    %c0_i32_0 = arith.constant 0 : i32
    return %c0_i32, %arg0 : i32, i32
  }
  func.func @transform_1(%arg0: i32) -> (i32, i32) {
    %c0_i32 = arith.constant 0 : i32
    %c0_i32_0 = arith.constant 0 : i32
    %c0_i32_1 = arith.constant 0 : i32
    return %c0_i32, %c0_i32_0 : i32, i32
  }
  func.func @transform_2(%arg0: i32) -> (i32, i32) {
    %c0_i32 = arith.constant 0 : i32
    %c0_i32_0 = arith.constant 0 : i32
    %c0_i32_1 = arith.constant 0 : i32
    return %c0_i32, %c0_i32_0 : i32, i32
  }
  func.func @transform_3(%arg0: i32) -> (i32, i32) {
    %c0_i32 = arith.constant 0 : i32
    %c0_i32_0 = arith.constant 0 : i32
    %c0_i32_1 = arith.constant 0 : i32
    return %c0_i32, %c0_i32_0 : i32, i32
  }
  func.func @transform_4(%arg0: i32) -> (i32, i32) {
    %c0_i32 = arith.constant 0 : i32
    %c0_i32_0 = arith.constant 0 : i32
    return %c0_i32, %arg0 : i32, i32
  }
  func.func @transform_5(%arg0: i32) -> (i32, i32, i32) {
    %c0_i32 = arith.constant 0 : i32
    %c0_i32_0 = arith.constant 0 : i32
    %c0_i32_1 = arith.constant 0 : i32
    return %arg0, %c0_i32, %c0_i32_0 : i32, i32, i32
  }
  func.func @transform_6(%arg0: i32) -> (i32, i32, i32) {
    %c0_i32 = arith.constant 0 : i32
    %c0_i32_0 = arith.constant 0 : i32
    %c0_i32_1 = arith.constant 0 : i32
    return %arg0, %c0_i32, %c0_i32_0 : i32, i32, i32
  }
}

module attributes {stable_mosaic.version = 11 : i64} {
  func.func @_final_kernel(%arg0: i32, %arg1: i32, %arg2: memref<32x128xbf16, #tpu.memory_space<vmem>>, %arg3: memref<32x32xbf16, #tpu.memory_space<vmem>>, %arg4: memref<32x1xf32, #tpu.memory_space<vmem>>, %arg5: memref<32x1xf32, #tpu.memory_space<vmem>>, %arg6: memref<32x128xf32, #tpu.memory_space<vmem>>) attributes {dimension_semantics = [#tpu.dimension_semantics<parallel>, #tpu.dimension_semantics<arbitrary>], iteration_bounds = array<i64: 1, 8>, scalar_prefetch = 0 : i64, scratch_operands = 0 : i64, tpu.core_type = #tpu.core_type<tc>, window_params = [{transform_indices = @transform_0, window_bounds = array<i64: 32, 128>}, {pipeline_mode = #tpu.pipeline_mode<synchronous>, transform_indices = @transform_1, window_bounds = array<i64: 32, 32>}, {pipeline_mode = #tpu.pipeline_mode<synchronous>, transform_indices = @transform_2, window_bounds = array<i64: 32, 1>}, {pipeline_mode = #tpu.pipeline_mode<synchronous>, transform_indices = @transform_3, window_bounds = array<i64: 32, 1>}, {transform_indices = @transform_4, window_bounds = array<i64: 32, 128>}]} {
    %c0 = arith.constant 0 : index
    %c0_0 = arith.constant 0 : index
    %0 = vector.load %arg3[%c0, %c0_0] : memref<32x32xbf16, #tpu.memory_space<vmem>>, vector<32x32xbf16>
    %c0_1 = arith.constant 0 : index
    %c0_2 = arith.constant 0 : index
    %1 = vector.load %arg2[%c0_1, %c0_2] : memref<32x128xbf16, #tpu.memory_space<vmem>>, vector<32x128xbf16>
    %cst = arith.constant dense<0.000000e+00> : vector<32x128xf32>
    %2 = tpu.matmul %0, %1, %cst {dimension_numbers = #tpu.dot_dimension_numbers<[1], [0], [0], [1], [0, 0, 1, 1], [], []>} : vector<32x32xbf16>, vector<32x128xbf16>, vector<32x128xf32> -> vector<32x128xf32>
    %c0_3 = arith.constant 0 : index
    %c0_4 = arith.constant 0 : index
    %3 = vector.load %arg4[%c0_3, %c0_4] : memref<32x1xf32, #tpu.memory_space<vmem>>, vector<32x1xf32>
    %4 = vector.broadcast %3 : vector<32x1xf32> to vector<32x128xf32>
    %5 = arith.mulf %2, %4 : vector<32x128xf32>
    %c0_5 = arith.constant 0 : index
    %c0_6 = arith.constant 0 : index
    %6 = vector.load %arg5[%c0_5, %c0_6] : memref<32x1xf32, #tpu.memory_space<vmem>>, vector<32x1xf32>
    %7 = vector.broadcast %6 : vector<32x1xf32> to vector<32x128xf32>
    %8 = arith.addf %5, %7 : vector<32x128xf32>
    %cst_7 = arith.constant 0.000000e+00 : f32
    %9 = vector.broadcast %cst_7 : f32 to vector<32x128xf32>
    %10 = arith.maximumf %8, %9 : vector<32x128xf32>
    %c0_i32 = arith.constant 0 : i32
    %11 = arith.cmpi eq, %arg1, %c0_i32 : i32
    %12 = arith.extui %11 : i1 to i32
    %c0_i32_8 = arith.constant 0 : i32
    %13 = arith.cmpi ne, %12, %c0_i32_8 : i32
    scf.if %13 {
      %c0_11 = arith.constant 0 : index
      %c0_12 = arith.constant 0 : index
      %17 = vector.load %arg6[%c0_11, %c0_12] : memref<32x128xf32, #tpu.memory_space<vmem>>, vector<32x128xf32>
      tpu.vector_store %arg6[%c0_11, %c0_12], %10 {strides = array<i32>} : memref<32x128xf32, #tpu.memory_space<vmem>>, vector<32x128xf32>,
    } else {
    }
    %c0_i32_9 = arith.constant 0 : i32
    %14 = arith.cmpi sgt, %arg1, %c0_i32_9 : i32
    %15 = arith.extui %14 : i1 to i32
    %c0_i32_10 = arith.constant 0 : i32
    %16 = arith.cmpi ne, %15, %c0_i32_10 : i32
    scf.if %16 {
      %c0_11 = arith.constant 0 : index
      %c0_12 = arith.constant 0 : index
      %17 = vector.load %arg6[%c0_11, %c0_12] : memref<32x128xf32, #tpu.memory_space<vmem>>, vector<32x128xf32>
      %18 = arith.maximumf %17, %10 : vector<32x128xf32>
      %c0_13 = arith.constant 0 : index
      %c0_14 = arith.constant 0 : index
      %19 = vector.load %arg6[%c0_13, %c0_14] : memref<32x128xf32, #tpu.memory_space<vmem>>, vector<32x128xf32>
      tpu.vector_store %arg6[%c0_13, %c0_14], %18 {strides = array<i32>} : memref<32x128xf32, #tpu.memory_space<vmem>>, vector<32x128xf32>,
    } else {
    }
    return
  }
  func.func @transform_0(%arg0: i32, %arg1: i32) -> (i32, i32) {
    %c1_i32 = arith.constant 1 : i32
    %0 = arith.muli %arg1, %c1_i32 : i32
    %1 = arith.addi %0, %arg0 : i32
    %c0_i32 = arith.constant 0 : i32
    %c0_i32_0 = arith.constant 0 : i32
    return %c0_i32, %1 : i32, i32
  }
  func.func @transform_1(%arg0: i32, %arg1: i32) -> (i32, i32) {
    %c0_i32 = arith.constant 0 : i32
    %c0_i32_0 = arith.constant 0 : i32
    %c0_i32_1 = arith.constant 0 : i32
    return %c0_i32, %c0_i32_0 : i32, i32
  }
  func.func @transform_2(%arg0: i32, %arg1: i32) -> (i32, i32) {
    %c0_i32 = arith.constant 0 : i32
    %c0_i32_0 = arith.constant 0 : i32
    %c0_i32_1 = arith.constant 0 : i32
    return %c0_i32, %c0_i32_0 : i32, i32
  }
  func.func @transform_3(%arg0: i32, %arg1: i32) -> (i32, i32) {
    %c0_i32 = arith.constant 0 : i32
    %c0_i32_0 = arith.constant 0 : i32
    %c0_i32_1 = arith.constant 0 : i32
    return %c0_i32, %c0_i32_0 : i32, i32
  }
  func.func @transform_4(%arg0: i32, %arg1: i32) -> (i32, i32) {
    %c0_i32 = arith.constant 0 : i32
    %c0_i32_0 = arith.constant 0 : i32
    return %c0_i32, %arg0 : i32, i32
  }
}

</mosaic_0001>

<llo_original>
// kernel: custom-call.8
$region0: #{custom-call.8}
  %s0 = inlined_call_operand.vmem [shape: f32[2,16], index: 0, kind: output, shape index: {}]

// kernel: pointnet_set_abstraction.4
$region0: #{pointnet_set_abstraction.4}
  #allocation0 [shape = 'u32[]', space=smem, size = 0x4, offset = 0x4, fixed_abs, tag = 'smem constant byte address 0x4 - core index']
  #allocation1 [shape = 'u32[144,128]{1,0:T(1,128)}', space=vmem, size = 0x12000, scoped, tag = 'internal scratch']
  %s0 = inlined_call_operand.vmem [shape: bf16[16,1024], index: 0, kind: input, shape index: {}]
  %s1 = inlined_call_operand.vmem [shape: f32[2,16,16], index: 1, kind: output, shape index: {0}]
  %s2 = inlined_call_operand.vmem [shape: f32[2,16,1], index: 2, kind: output, shape index: {1}]
  %3 = xla_tuple %s1, %s2
  %s4 = sld [smem:[#allocation0]]
  $region68: #{pointnet_set_abstraction.4} parent=0
    _
  %s6 = ssub.s32 1, %s4
  %s7 = scalar_select 0, %s6, %s4
  $region1: #{pointnet_set_abstraction.4} parent=0
    #allocation2 [shape = 'u8[32768]{0}', space=vmem, size = 0x8000, scoped, tag = 'input window, operand 0']
    loop: start=0, step=1, limit=4
    $region2: #{pointnet_set_abstraction.4} parent=1 // loop_pre_header
      _
    $region3: #{pointnet_set_abstraction.4} parent=1 // loop_header
      %s9 = sphi 0, %s13
      %p10 = scmp.ge.s32.totalorder %s9, 4
      %s19 = sphi 0, %s21
      %s22 = sphi 0, %s19
      %s23 = sphi 0, %s22
      %s39 = sphi 0, %s23
      %s45 = sphi 0, %s47
      %s48 = sphi 0, %s45
      %s49 = sphi 0, %s48
      %s65 = sphi 0, %s49
      %s71 = sphi 0, %s73
      %s74 = sphi 0, %s71
      %s75 = sphi 0, %s74
      %s91 = sphi 0, %s75
    $region4: #{pointnet_set_abstraction.4} parent=1 // loop_header_branch
      %12 = sbr.rel (%p10) target = $region8
    $region5: #{pointnet_set_abstraction.4} parent=1 // loop_body
      %s14 = ssub.s32 %s9, 1
      %s15 = ssub.s32 %s9, 2
      %s16 = sadd.s32 %s9, 1
      %s17 = ssub.s32 %s9, %s16
      %p18 = scmp.eq.s32.totalorder %s17, 0
      %s20 = sadd.s32 %s19, 1
      %s21 = scalar_select %p18, %s19, %s20
      %p24 = pneg %p18
      %p25 = scmp.eq.s32.totalorder %s9, 1
      %p26 = por %p24, %p25
      %p27 = scmp.ne.s32.totalorder %s19, %s22
      %p28 = scmp.eq.s32.totalorder %s9, 0
      %p29 = por %p27, %p28
      %p30 = scmp.ne.s32.totalorder %s19, %s22
      %p31 = scmp.eq.s32.totalorder %s14, 1
      %p32 = por %p30, %p31
      %p33 = scmp.ne.s32.totalorder %s22, %s23
      %p34 = scmp.eq.s32.totalorder %s14, 0
      %p35 = por %p33, %p34
      %p36 = scmp.ne.s32.totalorder %s22, %s23
      %p37 = scmp.eq.s32.totalorder %s15, 1
      %p38 = por %p36, %p37
      %p40 = scmp.ne.s32.totalorder %s23, %s39
      %p41 = scmp.eq.s32.totalorder %s15, 0
      %p42 = por %p40, %p41
      %s43 = ssub.s32 %s9, %s16
      %p44 = scmp.eq.s32.totalorder %s43, 0
      %s46 = sadd.s32 %s45, 1
      %s47 = scalar_select %p44, %s45, %s46
      %p50 = pneg %p44
      %p51 = scmp.eq.s32.totalorder %s9, 1
      %p52 = por %p50, %p51
      %p53 = scmp.ne.s32.totalorder %s45, %s48
      %p54 = scmp.eq.s32.totalorder %s9, 0
      %p55 = por %p53, %p54
      %p56 = scmp.ne.s32.totalorder %s45, %s48
      %p57 = scmp.eq.s32.totalorder %s14, 1
      %p58 = por %p56, %p57
      %p59 = scmp.ne.s32.totalorder %s48, %s49
      %p60 = scmp.eq.s32.totalorder %s14, 0
      %p61 = por %p59, %p60
      %p62 = scmp.ne.s32.totalorder %s48, %s49
      %p63 = scmp.eq.s32.totalorder %s15, 1
      %p64 = por %p62, %p63
      %p66 = scmp.ne.s32.totalorder %s49, %s65
      %p67 = scmp.eq.s32.totalorder %s15, 0
      %p68 = por %p66, %p67
      %s69 = ssub.s32 %s9, %s16
      %p70 = scmp.eq.s32.totalorder %s69, 0
      %s72 = sadd.s32 %s71, 1
      %s73 = scalar_select %p70, %s71, %s72
      %p76 = pneg %p70
      %p77 = scmp.eq.s32.totalorder %s9, 1
      %p78 = por %p76, %p77
      %p79 = scmp.ne.s32.totalorder %s71, %s74
      %p80 = scmp.eq.s32.totalorder %s9, 0
      %p81 = por %p79, %p80
      %p82 = scmp.ne.s32.totalorder %s71, %s74
      %p83 = scmp.eq.s32.totalorder %s14, 1
      %p84 = por %p82, %p83
      %p85 = scmp.ne.s32.totalorder %s74, %s75
      %p86 = scmp.eq.s32.totalorder %s14, 0
      %p87 = por %p85, %p86
      %p88 = scmp.ne.s32.totalorder %s74, %s75
      %p89 = scmp.eq.s32.totalorder %s15, 1
      %p90 = por %p88, %p89
      %p92 = scmp.ne.s32.totalorder %s75, %s91
      %p93 = scmp.eq.s32.totalorder %s15, 0
      %p94 = por %p92, %p93
      %p95 = scmp.le.s32.totalorder 1, %s9
      %p96 = scmp.lt.s32.totalorder %s9, 3
      %p97 = pnand %p95, %p96
      %p98 = pneg %p97
      // Predicated region
      $region9: #{pointnet_set_abstraction.4} parent=5 // pred_check
        _
      $region10: #{pointnet_set_abstraction.4} parent=5 // pred_check_branch
        %100 = sbr.rel (%p97) target = $region12
      $region11: #{pointnet_set_abstraction.4} parent=5 // pred_region
        %s101 = ssub.s32 %s9, 1
      $region12: #{pointnet_set_abstraction.4} parent=5 // pred_fallthru
        _
      %p102 = scmp.lt.s32.totalorder %s9, 2
      // Predicated region
      $region13: #{pointnet_set_abstraction.4} parent=5 // pred_check
        %p103 = pneg %p102
      $region14: #{pointnet_set_abstraction.4} parent=5 // pred_check_branch
        %105 = sbr.rel (%p103) target = $region16
      $region15: #{pointnet_set_abstraction.4} parent=5 // pred_region
        // Predicated region
        $region17: #{pointnet_set_abstraction.4} parent=15 // pred_check
          %p106 = pneg %p29
        $region18: #{pointnet_set_abstraction.4} parent=15 // pred_check_branch
          %108 = sbr.rel (%p106) target = $region20
        $region19: #{pointnet_set_abstraction.4} parent=15 // pred_region
          %s109 = sand.u32 %s19, 1
          %s110 = sand.u32 %s19, 1
          %s111 = smul.addr %s110, 32
          %s112 = scalar_lea.vmem [#allocation2], %s111
          %s113 = smul.u32 4, %s9
          %s114 = smul.addr %s113, 4
          %s115 = scalar_lea.vmem %s0, %s114
          // Predicated region
          $region21: #{pointnet_set_abstraction.4} parent=19 // pred_check
            _
          $region22: #{pointnet_set_abstraction.4} parent=19 // pred_check_branch
            %117 = sbr.rel (0) target = $region24
          $region23: #{pointnet_set_abstraction.4} parent=19 // pred_region
            // Predicated region
            $region25: #{pointnet_set_abstraction.4} parent=23 // pred_check
              _
            $region26: #{pointnet_set_abstraction.4} parent=23 // pred_check_branch
              %119 = sbr.rel (0) target = $region28
            $region27: #{pointnet_set_abstraction.4} parent=23 // pred_region
              loop: start=0, step=1, limit=1
              $region29: #{pointnet_set_abstraction.4} parent=27 // loop_pre_header
                _
              $region30: #{pointnet_set_abstraction.4} parent=27 // loop_header
                %s121 = sphi 0, %s125
                %p122 = scmp.ge.s32.totalorder %s121, 1
                %s126 = sphi %s115, %s115
                %s127 = sphi %s112, %s112
              $region31: #{pointnet_set_abstraction.4} parent=27 // loop_header_branch
                %124 = sbr.rel (%p122) target = $region35
              $region32: #{pointnet_set_abstraction.4} parent=27 // loop_body
                %v128 = vld [vmem:[%s126] sm:$0xff]
                %129 = vst [vmem:[%s127] sm:$0xff] %v128
                %v130 = vld [vmem:[%s126 + $0x8] sm:$0xff]
                %131 = vst [vmem:[%s127 + $0x8] sm:$0xff] %v130
                %v132 = vld [vmem:[%s126 + $0x20] sm:$0xff]
                %133 = vst [vmem:[%s127 + $0x10] sm:$0xff] %v132
                %v134 = vld [vmem:[%s126 + $0x28] sm:$0xff]
                %135 = vst [vmem:[%s127 + $0x18] sm:$0xff] %v134
              $region33: #{pointnet_set_abstraction.4} parent=27 // loop_footer
                %s125 = sadd.s32 1, %s121
              $region34: #{pointnet_set_abstraction.4} parent=27 // loop_footer_branch
                %120 = sbr.rel target = $region30
              $region35: #{pointnet_set_abstraction.4} parent=27 // loop_exit
                _
            $region28: #{pointnet_set_abstraction.4} parent=23 // pred_fallthru
              _
            // Predicated region
            $region36: #{pointnet_set_abstraction.4} parent=23 // pred_check
              _
            $region37: #{pointnet_set_abstraction.4} parent=23 // pred_check_branch
              %137 = sbr.rel target = $region39
            $region38: #{pointnet_set_abstraction.4} parent=23 // pred_region
              _
            $region39: #{pointnet_set_abstraction.4} parent=23 // pred_fallthru
              _
          $region24: #{pointnet_set_abstraction.4} parent=19 // pred_fallthru
            _
          %138 = vnop
        $region20: #{pointnet_set_abstraction.4} parent=15 // pred_fallthru
          _
      $region16: #{pointnet_set_abstraction.4} parent=5 // pred_fallthru
        _
      %p139 = scmp.le.s32.totalorder 1, %s9
      %p140 = scmp.lt.s32.totalorder %s9, 3
      %p141 = pnand %p139, %p140
      %p142 = pneg %p141
      // Predicated region
      $region40: #{pointnet_set_abstraction.4} parent=5 // pred_check
        _
      $region41: #{pointnet_set_abstraction.4} parent=5 // pred_check_branch
        %144 = sbr.rel (%p141) target = $region43
      $region42: #{pointnet_set_abstraction.4} parent=5 // pred_region
        %s145 = ssub.s32 %s9, 1
        %s146 = sand.u32 %s22, 1
        %s147 = sand.u32 %s22, 1
        %s148 = smul.addr %s147, 32
        %s149 = scalar_lea.vmem [#allocation2], %s148
        // Predicated region
        $region44: #{pointnet_set_abstraction.4} parent=42 // pred_check
          %p150 = pneg %p35
        $region45: #{pointnet_set_abstraction.4} parent=42 // pred_check_branch
          %152 = sbr.rel (%p150) target = $region47
        $region46: #{pointnet_set_abstraction.4} parent=42 // pred_region
          _
        $region47: #{pointnet_set_abstraction.4} parent=42 // pred_fallthru
          _
        %s153 = sand.u32 %s22, 1
        %s154 = sand.u32 %s22, 1
        %s155 = smul.addr %s154, 32
        %s156 = scalar_lea.vmem [#allocation2], %s155
        %p157 = pneg %p35
        %p158 = pneg %p32
        %p159 = pneg %p61
        %p160 = pneg %p58
        %p161 = scmp.lt.s32.totalorder %s14, 1
        %s162 = scalar_select %p161, %s14, 1
        %s163 = smul.addr %s162, 2
        %s164 = smul.addr %s163, 8
        %s165 = scalar_lea.vmem %s1, %s164
        %p166 = pneg %p87
        %p167 = pneg %p84
        %p168 = scmp.lt.s32.totalorder %s14, 1
        %s169 = scalar_select %p168, %s14, 1
        %s170 = smul.addr %s169, 2
        %s171 = smul.addr %s170, 8
        %s172 = scalar_lea.vmem %s2, %s171
        %s173 = smul.u32 4, %s14
        %p174 = scmp.lt.s32.totalorder %s14, 1
        %s175 = scalar_select %p174, %s14, 1
        %s176 = smul.addr %s175, 2
        %s177 = smul.addr %s176, 8
        %s178 = scalar_lea.vmem %s1, %s177
        %p179 = scmp.lt.s32.totalorder %s14, 1
        %s180 = scalar_select %p179, %s14, 1
        %s181 = smul.addr %s180, 2
        %s182 = smul.addr %s181, 8
        %s183 = scalar_lea.vmem %s2, %s182
        %v185 = vld [vmem:[%s149] sm:$0xff]
        %v186 = vld [vmem:[%s149 + $0x8] sm:$0xff]
        %v187 = vld [vmem:[%s149 + $0x10] sm:$0xff]
        %v188 = vld [vmem:[%s149 + $0x18] sm:$0xff]
        %v193 = vunpack.c.l.b16 %v185
        %v194 = vunpack.c.h.b16 %v185
        %v195 = vunpack.c.l.b16 %v186
        %v196 = vunpack.c.h.b16 %v186
        %v197 = vunpack.c.l.b16 %v187
        %v198 = vunpack.c.h.b16 %v187
        %v199 = vunpack.c.l.b16 %v188
        %v200 = vunpack.c.h.b16 %v188
        %v201 = vpack.c.b16 %v197, %v193
        %v202 = vpack.c.b16 %v198, %v194
        %v203 = vpack.c.b16 %v199, %v195
        %v204 = vpack.c.b16 %v200, %v196
        %209 = vmatprep.subr.bf16.mxu0 %v202
        %210 = vmatpush1.bf16.xpose.msra.mxu0 %v201
        %211 = vmatprep.subr.bf16.mxu0 0
        %212 = vmatpush1.bf16.xpose.msra.mxu0 0
        %213 = vmatprep.subr.bf16.mxu0 0
        %214 = vmatpush1.bf16.xpose.msra.mxu0 0
        %215 = vmatprep.subr.bf16.mxu0 0
        %216 = vmatpush1.bf16.xpose.msra.mxu0 0
        %217 = vmatprep.subr.bf16.mxu0 0
        %218 = vmatpush1.bf16.xpose.msra.mxu0 0
        %219 = vmatprep.subr.bf16.mxu0 0
        %220 = vmatpush1.bf16.xpose.msra.mxu0 0
        %221 = vmatprep.subr.bf16.mxu0 0
        %222 = vmatpush1.bf16.xpose.msra.mxu0 0
        %223 = vmatprep.subr.bf16.mxu0 0
        %224 = vmatpush1.bf16.xpose.msra.mxu0 0
        %225 = vmatprep.subr.bf16.mxu0 0
        %226 = vmatpush1.bf16.xpose.msra.mxu0 0
        %227 = vmatprep.subr.bf16.mxu0 0
        %228 = vmatpush1.bf16.xpose.msra.mxu0 0
        %229 = vmatprep.subr.bf16.mxu0 0
        %230 = vmatpush1.bf16.xpose.msra.mxu0 0
        %231 = vmatprep.subr.bf16.mxu0 0
        %232 = vmatpush1.bf16.xpose.msra.mxu0 0
        %233 = vmatprep.subr.bf16.mxu0 0
        %234 = vmatpush1.bf16.xpose.msra.mxu0 0
        %235 = vmatprep.subr.bf16.mxu0 0
        %236 = vmatpush1.bf16.xpose.msra.mxu0 0
        %237 = vmatprep.subr.bf16.mxu0 0
        %238 = vmatpush1.bf16.xpose.msra.mxu0 0
        %239 = vmatprep.subr.bf16.mxu0 0
        %240 = vmatpush1.bf16.xpose.msra.mxu0 0
        %241 = vmatprep.mubr.bf16.mxu0 %v202
        %242 = vmatmul.mubr.bf16.gmra.mrb[0].mxu0 %v201
        %v243 = vpop.f32.mrb[0].mxu0
        %v244 = vadd.f32 0.0, %v243
        %v245 = vpop.f32.mrb[0].mxu0
        %v246 = vpop.f32.mrb[0].mxu0
        %v247 = vadd.f32 0.0, %v246
        %v248 = vpop.f32.mrb[0].mxu0
        %249 = vdwg.mxu0
        %250 = vmatprep.subr.bf16.mxu0 %v204
        %251 = vmatpush1.bf16.xpose.msra.mxu0 %v203
        %252 = vmatprep.subr.bf16.mxu0 0
        %253 = vmatpush1.bf16.xpose.msra.mxu0 0
        %254 = vmatprep.subr.bf16.mxu0 0
        %255 = vmatpush1.bf16.xpose.msra.mxu0 0
        %256 = vmatprep.subr.bf16.mxu0 0
        %257 = vmatpush1.bf16.xpose.msra.mxu0 0
        %258 = vmatprep.subr.bf16.mxu0 0
        %259 = vmatpush1.bf16.xpose.msra.mxu0 0
        %260 = vmatprep.subr.bf16.mxu0 0
        %261 = vmatpush1.bf16.xpose.msra.mxu0 0
        %262 = vmatprep.subr.bf16.mxu0 0
        %263 = vmatpush1.bf16.xpose.msra.mxu0 0
        %264 = vmatprep.subr.bf16.mxu0 0
        %265 = vmatpush1.bf16.xpose.msra.mxu0 0
        %266 = vmatprep.subr.bf16.mxu0 0
        %267 = vmatpush1.bf16.xpose.msra.mxu0 0
        %268 = vmatprep.subr.bf16.mxu0 0
        %269 = vmatpush1.bf16.xpose.msra.mxu0 0
        %270 = vmatprep.subr.bf16.mxu0 0
        %271 = vmatpush1.bf16.xpose.msra.mxu0 0
        %272 = vmatprep.subr.bf16.mxu0 0
        %273 = vmatpush1.bf16.xpose.msra.mxu0 0
        %274 = vmatprep.subr.bf16.mxu0 0
        %275 = vmatpush1.bf16.xpose.msra.mxu0 0
        %276 = vmatprep.subr.bf16.mxu0 0
        %277 = vmatpush1.bf16.xpose.msra.mxu0 0
        %278 = vmatprep.subr.bf16.mxu0 0
        %279 = vmatpush1.bf16.xpose.msra.mxu0 0
        %280 = vmatprep.subr.bf16.mxu0 0
        %281 = vmatpush1.bf16.xpose.msra.mxu0 0
        %282 = vmatprep.mubr.bf16.mxu0 %v204
        %283 = vmatmul.mubr.bf16.gmra.mrb[0].mxu0 %v203
        %v284 = vpop.f32.mrb[0].mxu0
        %v285 = vadd.f32 %v244, %v284
        %v286 = vpop.f32.mrb[0].mxu0
        %v287 = vpop.f32.mrb[0].mxu0
        %v288 = vadd.f32 %v247, %v287
        %v289 = vpop.f32.mrb[0].mxu0
        %290 = vdwg.mxu0
        %vm291 = vcmask 130048
        %292 = vst.msk [vmem:[%s178] sm:$0xff] %vm291, %v285
        %293 = vst.msk [vmem:[%s178 + $0x8] sm:$0xff] %vm291, %v288
        %v294 = vunpack.c.l.bf16 %v185
        %v295 = vunpack.c.h.bf16 %v185
        %v296 = vunpack.c.l.bf16 %v186
        %v297 = vunpack.c.h.bf16 %v186
        %v298 = vunpack.c.l.bf16 %v187
        %v299 = vunpack.c.h.bf16 %v187
        %v300 = vunpack.c.l.bf16 %v188
        %v301 = vunpack.c.h.bf16 %v188
        %v302 = vadd.f32 %v294, %v295
        %v303 = vadd.f32 %v302, %v296
        %v304 = vadd.f32 %v303, %v297
        %305 = vadd.xlane.f32.xlu0 %v304
        %v306 = vpop.xlane.xlu0 %305
        %v307 = vadd.f32 %v298, %v299
        %v308 = vadd.f32 %v307, %v300
        %v309 = vadd.f32 %v308, %v301
        %310 = vadd.xlane.f32.xlu0 %v309
        %v311 = vpop.xlane.xlu0 %310
        %vm312 = vcmask 7168
        %313 = vst.msk [vmem:[%s183] sm:$0xff] %vm312, %v306
        %314 = vst.msk [vmem:[%s183 + $0x8] sm:$0xff] %vm312, %v311
        %p315 = scmp.lt.s32.totalorder %s14, 1
        %s316 = scalar_select %p315, %s14, 1
        %s317 = smul.addr %s316, 2
        %s318 = smul.addr %s317, 8
        %s319 = scalar_lea.vmem %s1, %s318
        %p320 = scmp.lt.s32.totalorder %s14, 1
        %s321 = scalar_select %p320, %s14, 1
        %s322 = smul.addr %s321, 2
        %s323 = smul.addr %s322, 8
        %s324 = scalar_lea.vmem %s2, %s323
        // Predicated region
        $region48: #{pointnet_set_abstraction.4} parent=42 // pred_check
          %p325 = pneg %p58
        $region49: #{pointnet_set_abstraction.4} parent=42 // pred_check_branch
          %327 = sbr.rel (%p325) target = $region51
        $region50: #{pointnet_set_abstraction.4} parent=42 // pred_region
          _
        $region51: #{pointnet_set_abstraction.4} parent=42 // pred_fallthru
          _
        // Predicated region
        $region52: #{pointnet_set_abstraction.4} parent=42 // pred_check
          %p328 = pneg %p84
        $region53: #{pointnet_set_abstraction.4} parent=42 // pred_check_branch
          %330 = sbr.rel (%p328) target = $region55
        $region54: #{pointnet_set_abstraction.4} parent=42 // pred_region
          _
        $region55: #{pointnet_set_abstraction.4} parent=42 // pred_fallthru
          _
      $region43: #{pointnet_set_abstraction.4} parent=5 // pred_fallthru
        _
      %p331 = scmp.le.s32.totalorder 2, %s9
      // Predicated region
      $region56: #{pointnet_set_abstraction.4} parent=5 // pred_check
        %p332 = pneg %p331
      $region57: #{pointnet_set_abstraction.4} parent=5 // pred_check_branch
        %334 = sbr.rel (%p332) target = $region59
      $region58: #{pointnet_set_abstraction.4} parent=5 // pred_region
        %s335 = ssub.s32 %s9, 2
        // Predicated region
        $region60: #{pointnet_set_abstraction.4} parent=58 // pred_check
          %p336 = pneg %p64
        $region61: #{pointnet_set_abstraction.4} parent=58 // pred_check_branch
          %338 = sbr.rel (%p336) target = $region63
        $region62: #{pointnet_set_abstraction.4} parent=58 // pred_region
          %p339 = scmp.lt.s32.totalorder %s15, 1
          %s340 = scalar_select %p339, %s15, 1
          %s341 = smul.addr %s340, 2
          %s342 = smul.addr %s341, 8
          %s343 = scalar_lea.vmem %s1, %s342
        $region63: #{pointnet_set_abstraction.4} parent=58 // pred_fallthru
          _
        // Predicated region
        $region64: #{pointnet_set_abstraction.4} parent=58 // pred_check
          %p344 = pneg %p90
        $region65: #{pointnet_set_abstraction.4} parent=58 // pred_check_branch
          %346 = sbr.rel (%p344) target = $region67
        $region66: #{pointnet_set_abstraction.4} parent=58 // pred_region
          %p347 = scmp.lt.s32.totalorder %s15, 1
          %s348 = scalar_select %p347, %s15, 1
          %s349 = smul.addr %s348, 2
          %s350 = smul.addr %s349, 8
          %s351 = scalar_lea.vmem %s2, %s350
        $region67: #{pointnet_set_abstraction.4} parent=58 // pred_fallthru
          _
      $region59: #{pointnet_set_abstraction.4} parent=5 // pred_fallthru
        _
    $region6: #{pointnet_set_abstraction.4} parent=1 // loop_footer
      %s13 = sadd.s32 1, %s9
    $region7: #{pointnet_set_abstraction.4} parent=1 // loop_footer_branch
      %8 = sbr.rel target = $region3
    $region8: #{pointnet_set_abstraction.4} parent=1 // loop_exit
      _

// kernel: pointnet_set_abstraction.5
$region0: #{pointnet_set_abstraction.5}
  #allocation0 [shape = 'u32[]', space=smem, size = 0x4, offset = 0x4, fixed_abs, tag = 'smem constant byte address 0x4 - core index']
  #allocation1 [shape = 'u32[144,128]{1,0:T(1,128)}', space=vmem, size = 0x12000, scoped, tag = 'internal scratch']
  %s0 = inlined_call_operand.vmem [shape: bf16[16,1024], index: 0, kind: input, shape index: {}]
  %s1 = inlined_call_operand.vmem [shape: bf16[16,16], index: 1, kind: input, shape index: {}]
  %s2 = inlined_call_operand.vmem [shape: f32[16,1], index: 2, kind: input, shape index: {}]
  %s3 = inlined_call_operand.vmem [shape: f32[16,1], index: 3, kind: input, shape index: {}]
  %s4 = inlined_call_operand.vmem [shape: bf16[16,1024], index: 4, kind: output, shape index: {0}]
  %s5 = inlined_call_operand.vmem [shape: f32[2,16,16], index: 5, kind: output, shape index: {1}]
  %s6 = inlined_call_operand.vmem [shape: f32[2,16,1], index: 6, kind: output, shape index: {2}]
  %7 = xla_tuple %s4, %s5, %s6
  %s8 = sld [smem:[#allocation0]]
  $region107: #{pointnet_set_abstraction.5} parent=0
    _
  %s10 = ssub.s32 1, %s8
  %s11 = scalar_select 0, %s10, %s8
  $region1: #{pointnet_set_abstraction.5} parent=0
    #allocation2 [shape = 'u8[32768]{0}', space=vmem, size = 0x8000, scoped, tag = 'input window, operand 0']
    #allocation3 [shape = 'u8[32768]{0}', space=vmem, size = 0x8000, scoped, tag = 'output window, operand 0']
    loop: start=0, step=1, limit=4
    $region2: #{pointnet_set_abstraction.5} parent=1 // loop_pre_header
      _
    $region3: #{pointnet_set_abstraction.5} parent=1 // loop_header
      %s13 = sphi 0, %s17
      %p14 = scmp.ge.s32.totalorder %s13, 4
      %s23 = sphi 0, %s25
      %s26 = sphi 0, %s23
      %s27 = sphi 0, %s26
      %s43 = sphi 0, %s27
      %s47 = sphi 0, %s47
      %s49 = sphi 0, %s47
      %s50 = sphi 0, %s49
      %s64 = sphi 0, %s50
      %s68 = sphi 0, %s68
      %s70 = sphi 0, %s68
      %s71 = sphi 0, %s70
      %s85 = sphi 0, %s71
      %s89 = sphi 0, %s89
      %s91 = sphi 0, %s89
      %s92 = sphi 0, %s91
      %s106 = sphi 0, %s92
      %s112 = sphi 0, %s114
      %s115 = sphi 0, %s112
      %s116 = sphi 0, %s115
      %s132 = sphi 0, %s116
      %s138 = sphi 0, %s140
      %s141 = sphi 0, %s138
      %s142 = sphi 0, %s141
      %s158 = sphi 0, %s142
      %s164 = sphi 0, %s166
      %s167 = sphi 0, %s164
      %s168 = sphi 0, %s167
      %s184 = sphi 0, %s168
    $region4: #{pointnet_set_abstraction.5} parent=1 // loop_header_branch
      %16 = sbr.rel (%p14) target = $region8
    $region5: #{pointnet_set_abstraction.5} parent=1 // loop_body
      %s18 = ssub.s32 %s13, 1
      %s19 = ssub.s32 %s13, 2
      %s20 = sadd.s32 %s13, 1
      %s21 = ssub.s32 %s13, %s20
      %p22 = scmp.eq.s32.totalorder %s21, 0
      %s24 = sadd.s32 %s23, 1
      %s25 = scalar_select %p22, %s23, %s24
      %p28 = pneg %p22
      %p29 = scmp.eq.s32.totalorder %s13, 1
      %p30 = por %p28, %p29
      %p31 = scmp.ne.s32.totalorder %s23, %s26
      %p32 = scmp.eq.s32.totalorder %s13, 0
      %p33 = por %p31, %p32
      %p34 = scmp.ne.s32.totalorder %s23, %s26
      %p35 = scmp.eq.s32.totalorder %s18, 1
      %p36 = por %p34, %p35
      %p37 = scmp.ne.s32.totalorder %s26, %s27
      %p38 = scmp.eq.s32.totalorder %s18, 0
      %p39 = por %p37, %p38
      %p40 = scmp.ne.s32.totalorder %s26, %s27
      %p41 = scmp.eq.s32.totalorder %s19, 1
      %p42 = por %p40, %p41
      %p44 = scmp.ne.s32.totalorder %s27, %s43
      %p45 = scmp.eq.s32.totalorder %s19, 0
      %p46 = por %p44, %p45
      %s48 = sadd.s32 %s47, 1
      %p51 = scmp.eq.s32.totalorder %s13, 1
      %p52 = scmp.ne.s32.totalorder %s47, %s49
      %p53 = scmp.eq.s32.totalorder %s13, 0
      %p54 = por %p52, %p53
      %p55 = scmp.ne.s32.totalorder %s47, %s49
      %p56 = scmp.eq.s32.totalorder %s18, 1
      %p57 = por %p55, %p56
      %p58 = scmp.ne.s32.totalorder %s49, %s50
      %p59 = scmp.eq.s32.totalorder %s18, 0
      %p60 = por %p58, %p59
      %p61 = scmp.ne.s32.totalorder %s49, %s50
      %p62 = scmp.eq.s32.totalorder %s19, 1
      %p63 = por %p61, %p62
      %p65 = scmp.ne.s32.totalorder %s50, %s64
      %p66 = scmp.eq.s32.totalorder %s19, 0
      %p67 = por %p65, %p66
      %s69 = sadd.s32 %s68, 1
      %p72 = scmp.eq.s32.totalorder %s13, 1
      %p73 = scmp.ne.s32.totalorder %s68, %s70
      %p74 = scmp.eq.s32.totalorder %s13, 0
      %p75 = por %p73, %p74
      %p76 = scmp.ne.s32.totalorder %s68, %s70
      %p77 = scmp.eq.s32.totalorder %s18, 1
      %p78 = por %p76, %p77
      %p79 = scmp.ne.s32.totalorder %s70, %s71
      %p80 = scmp.eq.s32.totalorder %s18, 0
      %p81 = por %p79, %p80
      %p82 = scmp.ne.s32.totalorder %s70, %s71
      %p83 = scmp.eq.s32.totalorder %s19, 1
      %p84 = por %p82, %p83
      %p86 = scmp.ne.s32.totalorder %s71, %s85
      %p87 = scmp.eq.s32.totalorder %s19, 0
      %p88 = por %p86, %p87
      %s90 = sadd.s32 %s89, 1
      %p93 = scmp.eq.s32.totalorder %s13, 1
      %p94 = scmp.ne.s32.totalorder %s89, %s91
      %p95 = scmp.eq.s32.totalorder %s13, 0
      %p96 = por %p94, %p95
      %p97 = scmp.ne.s32.totalorder %s89, %s91
      %p98 = scmp.eq.s32.totalorder %s18, 1
      %p99 = por %p97, %p98
      %p100 = scmp.ne.s32.totalorder %s91, %s92
      %p101 = scmp.eq.s32.totalorder %s18, 0
      %p102 = por %p100, %p101
      %p103 = scmp.ne.s32.totalorder %s91, %s92
      %p104 = scmp.eq.s32.totalorder %s19, 1
      %p105 = por %p103, %p104
      %p107 = scmp.ne.s32.totalorder %s92, %s106
      %p108 = scmp.eq.s32.totalorder %s19, 0
      %p109 = por %p107, %p108
      %s110 = ssub.s32 %s13, %s20
      %p111 = scmp.eq.s32.totalorder %s110, 0
      %s113 = sadd.s32 %s112, 1
      %s114 = scalar_select %p111, %s112, %s113
      %p117 = pneg %p111
      %p118 = scmp.eq.s32.totalorder %s13, 1
      %p119 = por %p117, %p118
      %p120 = scmp.ne.s32.totalorder %s112, %s115
      %p121 = scmp.eq.s32.totalorder %s13, 0
      %p122 = por %p120, %p121
      %p123 = scmp.ne.s32.totalorder %s112, %s115
      %p124 = scmp.eq.s32.totalorder %s18, 1
      %p125 = por %p123, %p124
      %p126 = scmp.ne.s32.totalorder %s115, %s116
      %p127 = scmp.eq.s32.totalorder %s18, 0
      %p128 = por %p126, %p127
      %p129 = scmp.ne.s32.totalorder %s115, %s116
      %p130 = scmp.eq.s32.totalorder %s19, 1
      %p131 = por %p129, %p130
      %p133 = scmp.ne.s32.totalorder %s116, %s132
      %p134 = scmp.eq.s32.totalorder %s19, 0
      %p135 = por %p133, %p134
      %s136 = ssub.s32 %s13, %s20
      %p137 = scmp.eq.s32.totalorder %s136, 0
      %s139 = sadd.s32 %s138, 1
      %s140 = scalar_select %p137, %s138, %s139
      %p143 = pneg %p137
      %p144 = scmp.eq.s32.totalorder %s13, 1
      %p145 = por %p143, %p144
      %p146 = scmp.ne.s32.totalorder %s138, %s141
      %p147 = scmp.eq.s32.totalorder %s13, 0
      %p148 = por %p146, %p147
      %p149 = scmp.ne.s32.totalorder %s138, %s141
      %p150 = scmp.eq.s32.totalorder %s18, 1
      %p151 = por %p149, %p150
      %p152 = scmp.ne.s32.totalorder %s141, %s142
      %p153 = scmp.eq.s32.totalorder %s18, 0
      %p154 = por %p152, %p153
      %p155 = scmp.ne.s32.totalorder %s141, %s142
      %p156 = scmp.eq.s32.totalorder %s19, 1
      %p157 = por %p155, %p156
      %p159 = scmp.ne.s32.totalorder %s142, %s158
      %p160 = scmp.eq.s32.totalorder %s19, 0
      %p161 = por %p159, %p160
      %s162 = ssub.s32 %s13, %s20
      %p163 = scmp.eq.s32.totalorder %s162, 0
      %s165 = sadd.s32 %s164, 1
      %s166 = scalar_select %p163, %s164, %s165
      %p169 = pneg %p163
      %p170 = scmp.eq.s32.totalorder %s13, 1
      %p171 = por %p169, %p170
      %p172 = scmp.ne.s32.totalorder %s164, %s167
      %p173 = scmp.eq.s32.totalorder %s13, 0
      %p174 = por %p172, %p173
      %p175 = scmp.ne.s32.totalorder %s164, %s167
      %p176 = scmp.eq.s32.totalorder %s18, 1
      %p177 = por %p175, %p176
      %p178 = scmp.ne.s32.totalorder %s167, %s168
      %p179 = scmp.eq.s32.totalorder %s18, 0
      %p180 = por %p178, %p179
      %p181 = scmp.ne.s32.totalorder %s167, %s168
      %p182 = scmp.eq.s32.totalorder %s19, 1
      %p183 = por %p181, %p182
      %p185 = scmp.ne.s32.totalorder %s168, %s184
      %p186 = scmp.eq.s32.totalorder %s19, 0
      %p187 = por %p185, %p186
      %p188 = scmp.le.s32.totalorder 1, %s13
      %p189 = scmp.lt.s32.totalorder %s13, 3
      %p190 = pnand %p188, %p189
      %p191 = pneg %p190
      // Predicated region
      $region9: #{pointnet_set_abstraction.5} parent=5 // pred_check
        _
      $region10: #{pointnet_set_abstraction.5} parent=5 // pred_check_branch
        %193 = sbr.rel (%p190) target = $region12
      $region11: #{pointnet_set_abstraction.5} parent=5 // pred_region
        %s194 = ssub.s32 %s13, 1
        // Predicated region
        $region13: #{pointnet_set_abstraction.5} parent=11 // pred_check
          %p195 = pneg %p60
        $region14: #{pointnet_set_abstraction.5} parent=11 // pred_check_branch
          %197 = sbr.rel (%p195) target = $region16
        $region15: #{pointnet_set_abstraction.5} parent=11 // pred_region
          _
        $region16: #{pointnet_set_abstraction.5} parent=11 // pred_fallthru
          _
        // Predicated region
        $region17: #{pointnet_set_abstraction.5} parent=11 // pred_check
          %p198 = pneg %p81
        $region18: #{pointnet_set_abstraction.5} parent=11 // pred_check_branch
          %200 = sbr.rel (%p198) target = $region20
        $region19: #{pointnet_set_abstraction.5} parent=11 // pred_region
          _
        $region20: #{pointnet_set_abstraction.5} parent=11 // pred_fallthru
          _
        // Predicated region
        $region21: #{pointnet_set_abstraction.5} parent=11 // pred_check
          %p201 = pneg %p102
        $region22: #{pointnet_set_abstraction.5} parent=11 // pred_check_branch
          %203 = sbr.rel (%p201) target = $region24
        $region23: #{pointnet_set_abstraction.5} parent=11 // pred_region
          _
        $region24: #{pointnet_set_abstraction.5} parent=11 // pred_fallthru
          _
      $region12: #{pointnet_set_abstraction.5} parent=5 // pred_fallthru
        _
      %p204 = scmp.lt.s32.totalorder %s13, 2
      // Predicated region
      $region25: #{pointnet_set_abstraction.5} parent=5 // pred_check
        %p205 = pneg %p204
      $region26: #{pointnet_set_abstraction.5} parent=5 // pred_check_branch
        %207 = sbr.rel (%p205) target = $region28
      $region27: #{pointnet_set_abstraction.5} parent=5 // pred_region
        // Predicated region
        $region29: #{pointnet_set_abstraction.5} parent=27 // pred_check
          %p208 = pneg %p33
        $region30: #{pointnet_set_abstraction.5} parent=27 // pred_check_branch
          %210 = sbr.rel (%p208) target = $region32
        $region31: #{pointnet_set_abstraction.5} parent=27 // pred_region
          %s211 = sand.u32 %s23, 1
          %s212 = sand.u32 %s23, 1
          %s213 = smul.addr %s212, 32
          %s214 = scalar_lea.vmem [#allocation2], %s213
          %s215 = smul.u32 4, %s13
          %s216 = smul.addr %s215, 4
          %s217 = scalar_lea.vmem %s0, %s216
          // Predicated region
          $region33: #{pointnet_set_abstraction.5} parent=31 // pred_check
            _
          $region34: #{pointnet_set_abstraction.5} parent=31 // pred_check_branch
            %219 = sbr.rel (0) target = $region36
          $region35: #{pointnet_set_abstraction.5} parent=31 // pred_region
            // Predicated region
            $region37: #{pointnet_set_abstraction.5} parent=35 // pred_check
              _
            $region38: #{pointnet_set_abstraction.5} parent=35 // pred_check_branch
              %221 = sbr.rel (0) target = $region40
            $region39: #{pointnet_set_abstraction.5} parent=35 // pred_region
              loop: start=0, step=1, limit=1
              $region41: #{pointnet_set_abstraction.5} parent=39 // loop_pre_header
                _
              $region42: #{pointnet_set_abstraction.5} parent=39 // loop_header
                %s223 = sphi 0, %s227
                %p224 = scmp.ge.s32.totalorder %s223, 1
                %s228 = sphi %s217, %s217
                %s229 = sphi %s214, %s214
              $region43: #{pointnet_set_abstraction.5} parent=39 // loop_header_branch
                %226 = sbr.rel (%p224) target = $region47
              $region44: #{pointnet_set_abstraction.5} parent=39 // loop_body
                %v230 = vld [vmem:[%s228] sm:$0xff]
                %231 = vst [vmem:[%s229] sm:$0xff] %v230
                %v232 = vld [vmem:[%s228 + $0x8] sm:$0xff]
                %233 = vst [vmem:[%s229 + $0x8] sm:$0xff] %v232
                %v234 = vld [vmem:[%s228 + $0x20] sm:$0xff]
                %235 = vst [vmem:[%s229 + $0x10] sm:$0xff] %v234
                %v236 = vld [vmem:[%s228 + $0x28] sm:$0xff]
                %237 = vst [vmem:[%s229 + $0x18] sm:$0xff] %v236
              $region45: #{pointnet_set_abstraction.5} parent=39 // loop_footer
                %s227 = sadd.s32 1, %s223
              $region46: #{pointnet_set_abstraction.5} parent=39 // loop_footer_branch
                %222 = sbr.rel target = $region42
              $region47: #{pointnet_set_abstraction.5} parent=39 // loop_exit
                _
            $region40: #{pointnet_set_abstraction.5} parent=35 // pred_fallthru
              _
            // Predicated region
            $region48: #{pointnet_set_abstraction.5} parent=35 // pred_check
              _
            $region49: #{pointnet_set_abstraction.5} parent=35 // pred_check_branch
              %239 = sbr.rel target = $region51
            $region50: #{pointnet_set_abstraction.5} parent=35 // pred_region
              _
            $region51: #{pointnet_set_abstraction.5} parent=35 // pred_fallthru
              _
          $region36: #{pointnet_set_abstraction.5} parent=31 // pred_fallthru
            _
          %240 = vnop
        $region32: #{pointnet_set_abstraction.5} parent=27 // pred_fallthru
          _
      $region28: #{pointnet_set_abstraction.5} parent=5 // pred_fallthru
        _
      %p241 = scmp.le.s32.totalorder 1, %s13
      %p242 = scmp.lt.s32.totalorder %s13, 3
      %p243 = pnand %p241, %p242
      %p244 = pneg %p243
      // Predicated region
      $region52: #{pointnet_set_abstraction.5} parent=5 // pred_check
        _
      $region53: #{pointnet_set_abstraction.5} parent=5 // pred_check_branch
        %246 = sbr.rel (%p243) target = $region55
      $region54: #{pointnet_set_abstraction.5} parent=5 // pred_region
        %s247 = ssub.s32 %s13, 1
        %s248 = sand.u32 %s26, 1
        %s249 = sand.u32 %s26, 1
        %s250 = smul.addr %s249, 32
        %s251 = scalar_lea.vmem [#allocation2], %s250
        // Predicated region
        $region56: #{pointnet_set_abstraction.5} parent=54 // pred_check
          %p252 = pneg %p39
        $region57: #{pointnet_set_abstraction.5} parent=54 // pred_check_branch
          %254 = sbr.rel (%p252) target = $region59
        $region58: #{pointnet_set_abstraction.5} parent=54 // pred_region
          _
        $region59: #{pointnet_set_abstraction.5} parent=54 // pred_fallthru
          _
        %s255 = sand.u32 %s26, 1
        %s256 = sand.u32 %s26, 1
        %s257 = smul.addr %s256, 32
        %s258 = scalar_lea.vmem [#allocation2], %s257
        %p259 = pneg %p39
        %p260 = pneg %p36
        %p261 = pneg %p60
        %p262 = pneg %p57
        %p263 = pneg %p81
        %p264 = pneg %p78
        %p265 = pneg %p102
        %p266 = pneg %p99
        %p267 = pneg %p128
        %p268 = pneg %p125
        %s269 = sand.u32 %s115, 1
        %s270 = sand.u32 %s115, 1
        %s271 = smul.addr %s270, 32
        %s272 = scalar_lea.vmem [#allocation3], %s271
        %p273 = pneg %p154
        %p274 = pneg %p151
        %p275 = scmp.lt.s32.totalorder %s18, 1
        %s276 = scalar_select %p275, %s18, 1
        %s277 = smul.addr %s276, 2
        %s278 = smul.addr %s277, 8
        %s279 = scalar_lea.vmem %s5, %s278
        %p280 = pneg %p180
        %p281 = pneg %p177
        %p282 = scmp.lt.s32.totalorder %s18, 1
        %s283 = scalar_select %p282, %s18, 1
        %s284 = smul.addr %s283, 2
        %s285 = smul.addr %s284, 8
        %s286 = scalar_lea.vmem %s6, %s285
        %s287 = smul.u32 4, %s18
        %s288 = smul.u32 4, %s18
        %p289 = scmp.lt.s32.totalorder %s18, 1
        %s290 = scalar_select %p289, %s18, 1
        %s291 = smul.addr %s290, 2
        %s292 = smul.addr %s291, 8
        %s293 = scalar_lea.vmem %s5, %s292
        %p294 = scmp.lt.s32.totalorder %s18, 1
        %s295 = scalar_select %p294, %s18, 1
        %s296 = smul.addr %s295, 2
        %s297 = smul.addr %s296, 8
        %s298 = scalar_lea.vmem %s6, %s297
        %v300 = vld [vmem:[%s1] sm:$0xf]
        %v301 = vld [vmem:[%s1 + $0x4] sm:$0xf]
        %v302 = vld [vmem:[%s251] sm:$0xff]
        %v303 = vld [vmem:[%s251 + $0x8] sm:$0xff]
        %v304 = vld [vmem:[%s251 + $0x10] sm:$0xff]
        %v305 = vld [vmem:[%s251 + $0x18] sm:$0xff]
        %v308 = vunpack.c.l.b16 %v300
        %v309 = vunpack.c.l.b16 %v301
        %v310 = vpack.c.b16 %v309, %v308
        %v315 = vunpack.c.l.b16 %v302
        %v316 = vunpack.c.h.b16 %v302
        %v317 = vunpack.c.l.b16 %v303
        %v318 = vunpack.c.h.b16 %v303
        %v319 = vunpack.c.l.b16 %v304
        %v320 = vunpack.c.h.b16 %v304
        %v321 = vunpack.c.l.b16 %v305
        %v322 = vunpack.c.h.b16 %v305
        %v323 = vpack.c.b16 %v319, %v315
        %v324 = vpack.c.b16 %v320, %v316
        %v325 = vpack.c.b16 %v321, %v317
        %v326 = vpack.c.b16 %v322, %v318
        %vm331 = vcmask 130048
        %v333 = vsel %vm331, %v310, 0
        %335 = vmatprep.subr.bf16.mxu0 %v324
        %336 = vmatpush1.bf16.msra.mxu0 %v323
        %337 = vmatprep.subr.bf16.mxu0 0
        %338 = vmatpush1.bf16.msra.mxu0 0
        %339 = vmatprep.subr.bf16.mxu0 0
        %340 = vmatpush1.bf16.msra.mxu0 0
        %341 = vmatprep.subr.bf16.mxu0 0
        %342 = vmatpush1.bf16.msra.mxu0 0
        %343 = vmatprep.subr.bf16.mxu0 0
        %344 = vmatpush1.bf16.msra.mxu0 0
        %345 = vmatprep.subr.bf16.mxu0 0
        %346 = vmatpush1.bf16.msra.mxu0 0
        %347 = vmatprep.subr.bf16.mxu0 0
        %348 = vmatpush1.bf16.msra.mxu0 0
        %349 = vmatprep.subr.bf16.mxu0 0
        %350 = vmatpush1.bf16.msra.mxu0 0
        %351 = vmatprep.subr.bf16.mxu0 0
        %352 = vmatpush1.bf16.msra.mxu0 0
        %353 = vmatprep.subr.bf16.mxu0 0
        %354 = vmatpush1.bf16.msra.mxu0 0
        %355 = vmatprep.subr.bf16.mxu0 0
        %356 = vmatpush1.bf16.msra.mxu0 0
        %357 = vmatprep.subr.bf16.mxu0 0
        %358 = vmatpush1.bf16.msra.mxu0 0
        %359 = vmatprep.subr.bf16.mxu0 0
        %360 = vmatpush1.bf16.msra.mxu0 0
        %361 = vmatprep.subr.bf16.mxu0 0
        %362 = vmatpush1.bf16.msra.mxu0 0
        %363 = vmatprep.subr.bf16.mxu0 0
        %364 = vmatpush1.bf16.msra.mxu0 0
        %365 = vmatprep.subr.bf16.mxu0 0
        %366 = vmatpush1.bf16.msra.mxu0 0
        %367 = vmatprep.mubr.bf16.mxu0 0
        %368 = vmatmul.mubr.bf16.gmra.mrb[0].mxu0 %v333
        %v369 = vpop.f32.mrb[0].mxu0
        %v370 = vadd.f32 0.0, %v369
        %v371 = vpop.f32.mrb[0].mxu0
        %v372 = vadd.f32 0.0, %v371
        %v373 = vpop.f32.mrb[0].mxu0
        %v374 = vadd.f32 0.0, %v373
        %v375 = vpop.f32.mrb[0].mxu0
        %v376 = vadd.f32 0.0, %v375
        %377 = vdwg.mxu0
        %378 = vmatprep.subr.bf16.mxu0 %v326
        %379 = vmatpush1.bf16.msra.mxu0 %v325
        %380 = vmatprep.subr.bf16.mxu0 0
        %381 = vmatpush1.bf16.msra.mxu0 0
        %382 = vmatprep.subr.bf16.mxu0 0
        %383 = vmatpush1.bf16.msra.mxu0 0
        %384 = vmatprep.subr.bf16.mxu0 0
        %385 = vmatpush1.bf16.msra.mxu0 0
        %386 = vmatprep.subr.bf16.mxu0 0
        %387 = vmatpush1.bf16.msra.mxu0 0
        %388 = vmatprep.subr.bf16.mxu0 0
        %389 = vmatpush1.bf16.msra.mxu0 0
        %390 = vmatprep.subr.bf16.mxu0 0
        %391 = vmatpush1.bf16.msra.mxu0 0
        %392 = vmatprep.subr.bf16.mxu0 0
        %393 = vmatpush1.bf16.msra.mxu0 0
        %394 = vmatprep.subr.bf16.mxu0 0
        %395 = vmatpush1.bf16.msra.mxu0 0
        %396 = vmatprep.subr.bf16.mxu0 0
        %397 = vmatpush1.bf16.msra.mxu0 0
        %398 = vmatprep.subr.bf16.mxu0 0
        %399 = vmatpush1.bf16.msra.mxu0 0
        %400 = vmatprep.subr.bf16.mxu0 0
        %401 = vmatpush1.bf16.msra.mxu0 0
        %402 = vmatprep.subr.bf16.mxu0 0
        %403 = vmatpush1.bf16.msra.mxu0 0
        %404 = vmatprep.subr.bf16.mxu0 0
        %405 = vmatpush1.bf16.msra.mxu0 0
        %406 = vmatprep.subr.bf16.mxu0 0
        %407 = vmatpush1.bf16.msra.mxu0 0
        %408 = vmatprep.subr.bf16.mxu0 0
        %409 = vmatpush1.bf16.msra.mxu0 0
        %410 = vmatprep.mubr.bf16.mxu0 0
        %411 = vmatmul.mubr.bf16.gmra.mrb[0].mxu0 %v333
        %v412 = vpop.f32.mrb[0].mxu0
        %v413 = vadd.f32 0.0, %v412
        %v414 = vpop.f32.mrb[0].mxu0
        %v415 = vadd.f32 0.0, %v414
        %v416 = vpop.f32.mrb[0].mxu0
        %v417 = vadd.f32 0.0, %v416
        %v418 = vpop.f32.mrb[0].mxu0
        %v419 = vadd.f32 0.0, %v418
        %420 = vdwg.mxu0
        %v421 = vld [vmem:[%s2] sm:$0xff]
        %v422 = vld [vmem:[%s2 + $0x8] sm:$0xff]
        %424 = vset.pattern.permute.xlu0 0
        %425 = vperm.xlu0 %424, %v421
        %v426 = vpop.permute.xlu0 %425
        %429 = vset.pattern.permute.xlu0 0
        %430 = vperm.xlu0 %429, %v422
        %v431 = vpop.permute.xlu0 %430
        %v433 = vmul.f32 %v370, %v426
        %v434 = vmul.f32 %v372, %v426
        %v435 = vmul.f32 %v413, %v426
        %v436 = vmul.f32 %v415, %v426
        %v437 = vmul.f32 %v374, %v431
        %v438 = vmul.f32 %v376, %v431
        %v439 = vmul.f32 %v417, %v431
        %v440 = vmul.f32 %v419, %v431
        %v441 = vld [vmem:[%s3] sm:$0xff]
        %v442 = vld [vmem:[%s3 + $0x8] sm:$0xff]
        %444 = vset.pattern.permute.xlu0 0
        %445 = vperm.xlu0 %444, %v441
        %v446 = vpop.permute.xlu0 %445
        %449 = vset.pattern.permute.xlu0 0
        %450 = vperm.xlu0 %449, %v442
        %v451 = vpop.permute.xlu0 %450
        %v453 = vadd.f32 %v433, %v446
        %v454 = vadd.f32 %v434, %v446
        %v455 = vadd.f32 %v435, %v446
        %v456 = vadd.f32 %v436, %v446
        %v457 = vadd.f32 %v437, %v451
        %v458 = vadd.f32 %v438, %v451
        %v459 = vadd.f32 %v439, %v451
        %v460 = vadd.f32 %v440, %v451
        %v461 = vmax.f32 %v453, 0.0
        %v462 = vmax.f32 %v454, 0.0
        %v463 = vmax.f32 %v455, 0.0
        %v464 = vmax.f32 %v456, 0.0
        %v465 = vmax.f32 %v457, 0.0
        %v466 = vmax.f32 %v458, 0.0
        %v467 = vmax.f32 %v459, 0.0
        %v468 = vmax.f32 %v460, 0.0
        %v469 = vlaneseq
        %v470 = vand.u32 %v469, 127
        %v471 = vadd.s32 %v470, 128
        %v472 = vadd.s32 %v470, 256
        %v473 = vadd.s32 %v470, 384
        %s474 = smul.u32 %s18, 512
        %v475 = vstv %s474
        %v476 = vadd.s32 %v470, %v475
        %v477 = vadd.s32 %v471, %v475
        %v478 = vadd.s32 %v472, %v475
        %v479 = vadd.s32 %v473, %v475
        %vm480 = vcmp.lt.s32.totalorder %v476, 0
        %v481 = vsub.s32 0, %v476
        %v482 = vsel %vm480, %v481, %v476
        %v483 = vshrl.u32 %v482, 7
        %v484 = vand.u32 %v482, 127
        %v485 = vsub.s32 0, %v484
        %v486 = vsel %vm480, %v485, %v484
        %vm487 = vcmp.lt.s32.totalorder %v477, 0
        %v488 = vsub.s32 0, %v477
        %v489 = vsel %vm487, %v488, %v477
        %v490 = vshrl.u32 %v489, 7
        %v491 = vand.u32 %v489, 127
        %v492 = vsub.s32 0, %v491
        %v493 = vsel %vm487, %v492, %v491
        %vm494 = vcmp.lt.s32.totalorder %v478, 0
        %v495 = vsub.s32 0, %v478
        %v496 = vsel %vm494, %v495, %v478
        %v497 = vshrl.u32 %v496, 7
        %v498 = vand.u32 %v496, 127
        %v499 = vsub.s32 0, %v498
        %v500 = vsel %vm494, %v499, %v498
        %vm501 = vcmp.lt.s32.totalorder %v479, 0
        %v502 = vsub.s32 0, %v479
        %v503 = vsel %vm501, %v502, %v479
        %v504 = vshrl.u32 %v503, 7
        %v505 = vand.u32 %v503, 127
        %v506 = vsub.s32 0, %v505
        %v507 = vsel %vm501, %v506, %v505
        %vm508 = vcmp.ne.s32.totalorder %v486, 0
        %vm509 = vcmp.ne.s32.totalorder %v493, 0
        %vm510 = vcmp.ne.s32.totalorder %v500, 0
        %vm511 = vcmp.ne.s32.totalorder %v507, 0
        %vm512 = vcmp.lt.s32.totalorder %v486, 0
        %vm513 = vcmp.lt.s32.totalorder %v493, 0
        %vm514 = vcmp.lt.s32.totalorder %v500, 0
        %vm515 = vcmp.lt.s32.totalorder %v507, 0
        %vm516 = vmand %vm512, %vm508
        %vm517 = vmand %vm513, %vm509
        %vm518 = vmand %vm514, %vm510
        %vm519 = vmand %vm515, %vm511
        %v520 = vadd.s32 %v486, 128
        %v521 = vadd.s32 %v493, 128
        %v522 = vadd.s32 %v500, 128
        %v523 = vadd.s32 %v507, 128
        %v524 = vsel %vm516, %v520, %v486
        %v525 = vsel %vm517, %v521, %v493
        %v526 = vsel %vm518, %v522, %v500
        %v527 = vsel %vm519, %v523, %v507
        %vm528 = vcmp.lt.s32.totalorder %v524, 16
        %vm529 = vcmp.lt.s32.totalorder %v525, 16
        %vm530 = vcmp.lt.s32.totalorder %v526, 16
        %vm531 = vcmp.lt.s32.totalorder %v527, 16
        %v532 = vsel %vm528, 1, 0
        %v533 = vsel %vm529, 1, 0
        %v534 = vsel %vm530, 1, 0
        %v535 = vsel %vm531, 1, 0
        %vm536 = vcmp.eq.s32.totalorder %v532, 1
        %vm537 = vcmp.eq.s32.totalorder %v533, 1
        %vm538 = vcmp.eq.s32.totalorder %v534, 1
        %vm539 = vcmp.eq.s32.totalorder %v535, 1
        %v540 = vsel %vm536, %v461, 0.0
        %v541 = vsel %vm537, %v462, 0.0
        %v542 = vsel %vm538, %v463, 0.0
        %v543 = vsel %vm539, %v464, 0.0
        %v544 = vsel %vm536, %v465, 0.0
        %v545 = vsel %vm537, %v466, 0.0
        %v546 = vsel %vm538, %v467, 0.0
        %v547 = vsel %vm539, %v468, 0.0
        %v548 = vpack.c.bf16 %v544, %v540
        %v549 = vpack.c.bf16 %v545, %v541
        %v550 = vpack.c.bf16 %v546, %v542
        %v551 = vpack.c.bf16 %v547, %v543
        %v556 = vunpack.c.l.b16 %v548
        %v557 = vunpack.c.l.b16 %v549
        %v558 = vunpack.c.l.b16 %v550
        %v559 = vunpack.c.l.b16 %v551
        %v560 = vunpack.c.h.b16 %v548
        %v561 = vunpack.c.h.b16 %v549
        %v562 = vunpack.c.h.b16 %v550
        %v563 = vunpack.c.h.b16 %v551
        %v564 = vpack.c.b16 %v557, %v556
        %v565 = vpack.c.b16 %v559, %v558
        %v566 = vpack.c.b16 %v561, %v560
        %v567 = vpack.c.b16 %v563, %v562
        %572 = vst [vmem:[%s272] sm:$0xff] %v564
        %573 = vst [vmem:[%s272 + $0x8] sm:$0xff] %v565
        %574 = vst [vmem:[%s272 + $0x10] sm:$0xff] %v566
        %575 = vst [vmem:[%s272 + $0x18] sm:$0xff] %v567
        %576 = vmatprep.subr.bf16.mxu0 %v549
        %577 = vmatpush1.bf16.xpose.msra.mxu0 %v548
        %578 = vmatprep.subr.bf16.mxu0 0
        %579 = vmatpush1.bf16.xpose.msra.mxu0 0
        %580 = vmatprep.subr.bf16.mxu0 0
        %581 = vmatpush1.bf16.xpose.msra.mxu0 0
        %582 = vmatprep.subr.bf16.mxu0 0
        %583 = vmatpush1.bf16.xpose.msra.mxu0 0
        %584 = vmatprep.subr.bf16.mxu0 0
        %585 = vmatpush1.bf16.xpose.msra.mxu0 0
        %586 = vmatprep.subr.bf16.mxu0 0
        %587 = vmatpush1.bf16.xpose.msra.mxu0 0
        %588 = vmatprep.subr.bf16.mxu0 0
        %589 = vmatpush1.bf16.xpose.msra.mxu0 0
        %590 = vmatprep.subr.bf16.mxu0 0
        %591 = vmatpush1.bf16.xpose.msra.mxu0 0
        %592 = vmatprep.subr.bf16.mxu0 0
        %593 = vmatpush1.bf16.xpose.msra.mxu0 0
        %594 = vmatprep.subr.bf16.mxu0 0
        %595 = vmatpush1.bf16.xpose.msra.mxu0 0
        %596 = vmatprep.subr.bf16.mxu0 0
        %597 = vmatpush1.bf16.xpose.msra.mxu0 0
        %598 = vmatprep.subr.bf16.mxu0 0
        %599 = vmatpush1.bf16.xpose.msra.mxu0 0
        %600 = vmatprep.subr.bf16.mxu0 0
        %601 = vmatpush1.bf16.xpose.msra.mxu0 0
        %602 = vmatprep.subr.bf16.mxu0 0
        %603 = vmatpush1.bf16.xpose.msra.mxu0 0
        %604 = vmatprep.subr.bf16.mxu0 0
        %605 = vmatpush1.bf16.xpose.msra.mxu0 0
        %606 = vmatprep.subr.bf16.mxu0 0
        %607 = vmatpush1.bf16.xpose.msra.mxu0 0
        %608 = vmatprep.mubr.bf16.mxu0 %v549
        %609 = vmatmul.mubr.bf16.gmra.mrb[0].mxu0 %v548
        %v610 = vpop.f32.mrb[0].mxu0
        %v611 = vadd.f32 0.0, %v610
        %v612 = vpop.f32.mrb[0].mxu0
        %v613 = vpop.f32.mrb[0].mxu0
        %v614 = vadd.f32 0.0, %v613
        %v615 = vpop.f32.mrb[0].mxu0
        %616 = vdwg.mxu0
        %617 = vmatprep.subr.bf16.mxu0 %v551
        %618 = vmatpush1.bf16.xpose.msra.mxu0 %v550
        %619 = vmatprep.subr.bf16.mxu0 0
        %620 = vmatpush1.bf16.xpose.msra.mxu0 0
        %621 = vmatprep.subr.bf16.mxu0 0
        %622 = vmatpush1.bf16.xpose.msra.mxu0 0
        %623 = vmatprep.subr.bf16.mxu0 0
        %624 = vmatpush1.bf16.xpose.msra.mxu0 0
        %625 = vmatprep.subr.bf16.mxu0 0
        %626 = vmatpush1.bf16.xpose.msra.mxu0 0
        %627 = vmatprep.subr.bf16.mxu0 0
        %628 = vmatpush1.bf16.xpose.msra.mxu0 0
        %629 = vmatprep.subr.bf16.mxu0 0
        %630 = vmatpush1.bf16.xpose.msra.mxu0 0
        %631 = vmatprep.subr.bf16.mxu0 0
        %632 = vmatpush1.bf16.xpose.msra.mxu0 0
        %633 = vmatprep.subr.bf16.mxu0 0
        %634 = vmatpush1.bf16.xpose.msra.mxu0 0
        %635 = vmatprep.subr.bf16.mxu0 0
        %636 = vmatpush1.bf16.xpose.msra.mxu0 0
        %637 = vmatprep.subr.bf16.mxu0 0
        %638 = vmatpush1.bf16.xpose.msra.mxu0 0
        %639 = vmatprep.subr.bf16.mxu0 0
        %640 = vmatpush1.bf16.xpose.msra.mxu0 0
        %641 = vmatprep.subr.bf16.mxu0 0
        %642 = vmatpush1.bf16.xpose.msra.mxu0 0
        %643 = vmatprep.subr.bf16.mxu0 0
        %644 = vmatpush1.bf16.xpose.msra.mxu0 0
        %645 = vmatprep.subr.bf16.mxu0 0
        %646 = vmatpush1.bf16.xpose.msra.mxu0 0
        %647 = vmatprep.subr.bf16.mxu0 0
        %648 = vmatpush1.bf16.xpose.msra.mxu0 0
        %649 = vmatprep.mubr.bf16.mxu0 %v551
        %650 = vmatmul.mubr.bf16.gmra.mrb[0].mxu0 %v550
        %v651 = vpop.f32.mrb[0].mxu0
        %v652 = vadd.f32 %v611, %v651
        %v653 = vpop.f32.mrb[0].mxu0
        %v654 = vpop.f32.mrb[0].mxu0
        %v655 = vadd.f32 %v614, %v654
        %v656 = vpop.f32.mrb[0].mxu0
        %657 = vdwg.mxu0
        %658 = vst.msk [vmem:[%s293] sm:$0xff] %vm331, %v652
        %659 = vst.msk [vmem:[%s293 + $0x8] sm:$0xff] %vm331, %v655
        %v660 = vunpack.c.l.bf16 %v548
        %v661 = vunpack.c.l.bf16 %v549
        %v662 = vunpack.c.l.bf16 %v550
        %v663 = vunpack.c.l.bf16 %v551
        %v664 = vunpack.c.h.bf16 %v548
        %v665 = vunpack.c.h.bf16 %v549
        %v666 = vunpack.c.h.bf16 %v550
        %v667 = vunpack.c.h.bf16 %v551
        %v668 = vadd.f32 %v660, %v661
        %v669 = vadd.f32 %v668, %v662
        %v670 = vadd.f32 %v669, %v663
        %671 = vadd.xlane.f32.xlu0 %v670
        %v672 = vpop.xlane.xlu0 %671
        %v673 = vadd.f32 %v664, %v665
        %v674 = vadd.f32 %v673, %v666
        %v675 = vadd.f32 %v674, %v667
        %676 = vadd.xlane.f32.xlu0 %v675
        %v677 = vpop.xlane.xlu0 %676
        %vm678 = vcmask 7168
        %679 = vst.msk [vmem:[%s298] sm:$0xff] %vm678, %v672
        %680 = vst.msk [vmem:[%s298 + $0x8] sm:$0xff] %vm678, %v677
        %s681 = sand.u32 %s115, 1
        %s682 = sand.u32 %s115, 1
        %s683 = smul.addr %s682, 32
        %s684 = scalar_lea.vmem [#allocation3], %s683
        %p685 = scmp.lt.s32.totalorder %s18, 1
        %s686 = scalar_select %p685, %s18, 1
        %s687 = smul.addr %s686, 2
        %s688 = smul.addr %s687, 8
        %s689 = scalar_lea.vmem %s5, %s688
        %p690 = scmp.lt.s32.totalorder %s18, 1
        %s691 = scalar_select %p690, %s18, 1
        %s692 = smul.addr %s691, 2
        %s693 = smul.addr %s692, 8
        %s694 = scalar_lea.vmem %s6, %s693
        // Predicated region
        $region60: #{pointnet_set_abstraction.5} parent=54 // pred_check
          %p695 = pneg %p125
        $region61: #{pointnet_set_abstraction.5} parent=54 // pred_check_branch
          %697 = sbr.rel (%p695) target = $region63
        $region62: #{pointnet_set_abstraction.5} parent=54 // pred_region
          %s698 = smul.u32 4, %s18
          %s699 = smul.addr %s698, 4
          %s700 = scalar_lea.vmem %s4, %s699
          // Predicated region
          $region64: #{pointnet_set_abstraction.5} parent=62 // pred_check
            _
          $region65: #{pointnet_set_abstraction.5} parent=62 // pred_check_branch
            %702 = sbr.rel (0) target = $region67
          $region66: #{pointnet_set_abstraction.5} parent=62 // pred_region
            // Predicated region
            $region68: #{pointnet_set_abstraction.5} parent=66 // pred_check
              _
            $region69: #{pointnet_set_abstraction.5} parent=66 // pred_check_branch
              %704 = sbr.rel (0) target = $region71
            $region70: #{pointnet_set_abstraction.5} parent=66 // pred_region
              loop: start=0, step=1, limit=1
              $region72: #{pointnet_set_abstraction.5} parent=70 // loop_pre_header
                _
              $region73: #{pointnet_set_abstraction.5} parent=70 // loop_header
                %s706 = sphi 0, %s710
                %p707 = scmp.ge.s32.totalorder %s706, 1
                %s711 = sphi %s684, %s684
                %s712 = sphi %s700, %s700
              $region74: #{pointnet_set_abstraction.5} parent=70 // loop_header_branch
                %709 = sbr.rel (%p707) target = $region78
              $region75: #{pointnet_set_abstraction.5} parent=70 // loop_body
                %v713 = vld [vmem:[%s711] sm:$0xff]
                %714 = vst [vmem:[%s712] sm:$0xff] %v713
                %v715 = vld [vmem:[%s711 + $0x8] sm:$0xff]
                %716 = vst [vmem:[%s712 + $0x8] sm:$0xff] %v715
                %v717 = vld [vmem:[%s711 + $0x10] sm:$0xff]
                %718 = vst [vmem:[%s712 + $0x20] sm:$0xff] %v717
                %v719 = vld [vmem:[%s711 + $0x18] sm:$0xff]
                %720 = vst [vmem:[%s712 + $0x28] sm:$0xff] %v719
              $region76: #{pointnet_set_abstraction.5} parent=70 // loop_footer
                %s710 = sadd.s32 1, %s706
              $region77: #{pointnet_set_abstraction.5} parent=70 // loop_footer_branch
                %705 = sbr.rel target = $region73
              $region78: #{pointnet_set_abstraction.5} parent=70 // loop_exit
                _
            $region71: #{pointnet_set_abstraction.5} parent=66 // pred_fallthru
              _
            // Predicated region
            $region79: #{pointnet_set_abstraction.5} parent=66 // pred_check
              _
            $region80: #{pointnet_set_abstraction.5} parent=66 // pred_check_branch
              %722 = sbr.rel target = $region82
            $region81: #{pointnet_set_abstraction.5} parent=66 // pred_region
              _
            $region82: #{pointnet_set_abstraction.5} parent=66 // pred_fallthru
              _
          $region67: #{pointnet_set_abstraction.5} parent=62 // pred_fallthru
            _
          %723 = vnop
        $region63: #{pointnet_set_abstraction.5} parent=54 // pred_fallthru
          _
        // Predicated region
        $region83: #{pointnet_set_abstraction.5} parent=54 // pred_check
          %p724 = pneg %p151
        $region84: #{pointnet_set_abstraction.5} parent=54 // pred_check_branch
          %726 = sbr.rel (%p724) target = $region86
        $region85: #{pointnet_set_abstraction.5} parent=54 // pred_region
          _
        $region86: #{pointnet_set_abstraction.5} parent=54 // pred_fallthru
          _
        // Predicated region
        $region87: #{pointnet_set_abstraction.5} parent=54 // pred_check
          %p727 = pneg %p177
        $region88: #{pointnet_set_abstraction.5} parent=54 // pred_check_branch
          %729 = sbr.rel (%p727) target = $region90
        $region89: #{pointnet_set_abstraction.5} parent=54 // pred_region
          _
        $region90: #{pointnet_set_abstraction.5} parent=54 // pred_fallthru
          _
      $region55: #{pointnet_set_abstraction.5} parent=5 // pred_fallthru
        _
      %p730 = scmp.le.s32.totalorder 2, %s13
      // Predicated region
      $region91: #{pointnet_set_abstraction.5} parent=5 // pred_check
        %p731 = pneg %p730
      $region92: #{pointnet_set_abstraction.5} parent=5 // pred_check_branch
        %733 = sbr.rel (%p731) target = $region94
      $region93: #{pointnet_set_abstraction.5} parent=5 // pred_region
        %s734 = ssub.s32 %s13, 2
        // Predicated region
        $region95: #{pointnet_set_abstraction.5} parent=93 // pred_check
          %p735 = pneg %p131
        $region96: #{pointnet_set_abstraction.5} parent=93 // pred_check_branch
          %737 = sbr.rel (%p735) target = $region98
        $region97: #{pointnet_set_abstraction.5} parent=93 // pred_region
          %s738 = sand.u32 %s116, 1
          %s739 = sand.u32 %s116, 1
          %s740 = smul.addr %s739, 32
          %s741 = scalar_lea.vmem [#allocation3], %s740
        $region98: #{pointnet_set_abstraction.5} parent=93 // pred_fallthru
          _
        // Predicated region
        $region99: #{pointnet_set_abstraction.5} parent=93 // pred_check
          %p742 = pneg %p157
        $region100: #{pointnet_set_abstraction.5} parent=93 // pred_check_branch
          %744 = sbr.rel (%p742) target = $region102
        $region101: #{pointnet_set_abstraction.5} parent=93 // pred_region
          %p745 = scmp.lt.s32.totalorder %s19, 1
          %s746 = scalar_select %p745, %s19, 1
          %s747 = smul.addr %s746, 2
          %s748 = smul.addr %s747, 8
          %s749 = scalar_lea.vmem %s5, %s748
        $region102: #{pointnet_set_abstraction.5} parent=93 // pred_fallthru
          _
        // Predicated region
        $region103: #{pointnet_set_abstraction.5} parent=93 // pred_check
          %p750 = pneg %p183
        $region104: #{pointnet_set_abstraction.5} parent=93 // pred_check_branch
          %752 = sbr.rel (%p750) target = $region106
        $region105: #{pointnet_set_abstraction.5} parent=93 // pred_region
          %p753 = scmp.lt.s32.totalorder %s19, 1
          %s754 = scalar_select %p753, %s19, 1
          %s755 = smul.addr %s754, 2
          %s756 = smul.addr %s755, 8
          %s757 = scalar_lea.vmem %s6, %s756
        $region106: #{pointnet_set_abstraction.5} parent=93 // pred_fallthru
          _
      $region94: #{pointnet_set_abstraction.5} parent=5 // pred_fallthru
        _
    $region6: #{pointnet_set_abstraction.5} parent=1 // loop_footer
      %s17 = sadd.s32 1, %s13
    $region7: #{pointnet_set_abstraction.5} parent=1 // loop_footer_branch
      %12 = sbr.rel target = $region3
    $region8: #{pointnet_set_abstraction.5} parent=1 // loop_exit
      _

// kernel: pointnet_set_abstraction.6
$region0: #{pointnet_set_abstraction.6}
  #allocation0 [shape = 'u32[]', space=smem, size = 0x4, offset = 0x4, fixed_abs, tag = 'smem constant byte address 0x4 - core index']
  #allocation1 [shape = 'u32[144,128]{1,0:T(1,128)}', space=vmem, size = 0x12000, scoped, tag = 'internal scratch']
  %s0 = inlined_call_operand.vmem [shape: bf16[16,1024], index: 0, kind: input, shape index: {}]
  %s1 = inlined_call_operand.vmem [shape: bf16[32,16], index: 1, kind: input, shape index: {}]
  %s2 = inlined_call_operand.vmem [shape: f32[32,1], index: 2, kind: input, shape index: {}]
  %s3 = inlined_call_operand.vmem [shape: f32[32,1], index: 3, kind: input, shape index: {}]
  %s4 = inlined_call_operand.vmem [shape: bf16[32,1024], index: 4, kind: output, shape index: {0}]
  %s5 = inlined_call_operand.vmem [shape: f32[2,32,32], index: 5, kind: output, shape index: {1}]
  %s6 = inlined_call_operand.vmem [shape: f32[2,32,1], index: 6, kind: output, shape index: {2}]
  %7 = xla_tuple %s4, %s5, %s6
  %s8 = sld [smem:[#allocation0]]
  $region107: #{pointnet_set_abstraction.6} parent=0
    _
  %s10 = ssub.s32 1, %s8
  %s11 = scalar_select 0, %s10, %s8
  $region1: #{pointnet_set_abstraction.6} parent=0
    #allocation2 [shape = 'u8[32768]{0}', space=vmem, size = 0x8000, scoped, tag = 'input window, operand 0']
    #allocation3 [shape = 'u8[65536]{0}', space=vmem, size = 0x10000, scoped, tag = 'output window, operand 0']
    loop: start=0, step=1, limit=4
    $region2: #{pointnet_set_abstraction.6} parent=1 // loop_pre_header
      _
    $region3: #{pointnet_set_abstraction.6} parent=1 // loop_header
      %s13 = sphi 0, %s17
      %p14 = scmp.ge.s32.totalorder %s13, 4
      %s23 = sphi 0, %s25
      %s26 = sphi 0, %s23
      %s27 = sphi 0, %s26
      %s43 = sphi 0, %s27
      %s47 = sphi 0, %s47
      %s49 = sphi 0, %s47
      %s50 = sphi 0, %s49
      %s64 = sphi 0, %s50
      %s68 = sphi 0, %s68
      %s70 = sphi 0, %s68
      %s71 = sphi 0, %s70
      %s85 = sphi 0, %s71
      %s89 = sphi 0, %s89
      %s91 = sphi 0, %s89
      %s92 = sphi 0, %s91
      %s106 = sphi 0, %s92
      %s112 = sphi 0, %s114
      %s115 = sphi 0, %s112
      %s116 = sphi 0, %s115
      %s132 = sphi 0, %s116
      %s138 = sphi 0, %s140
      %s141 = sphi 0, %s138
      %s142 = sphi 0, %s141
      %s158 = sphi 0, %s142
      %s164 = sphi 0, %s166
      %s167 = sphi 0, %s164
      %s168 = sphi 0, %s167
      %s184 = sphi 0, %s168
    $region4: #{pointnet_set_abstraction.6} parent=1 // loop_header_branch
      %16 = sbr.rel (%p14) target = $region8
    $region5: #{pointnet_set_abstraction.6} parent=1 // loop_body
      %s18 = ssub.s32 %s13, 1
      %s19 = ssub.s32 %s13, 2
      %s20 = sadd.s32 %s13, 1
      %s21 = ssub.s32 %s13, %s20
      %p22 = scmp.eq.s32.totalorder %s21, 0
      %s24 = sadd.s32 %s23, 1
      %s25 = scalar_select %p22, %s23, %s24
      %p28 = pneg %p22
      %p29 = scmp.eq.s32.totalorder %s13, 1
      %p30 = por %p28, %p29
      %p31 = scmp.ne.s32.totalorder %s23, %s26
      %p32 = scmp.eq.s32.totalorder %s13, 0
      %p33 = por %p31, %p32
      %p34 = scmp.ne.s32.totalorder %s23, %s26
      %p35 = scmp.eq.s32.totalorder %s18, 1
      %p36 = por %p34, %p35
      %p37 = scmp.ne.s32.totalorder %s26, %s27
      %p38 = scmp.eq.s32.totalorder %s18, 0
      %p39 = por %p37, %p38
      %p40 = scmp.ne.s32.totalorder %s26, %s27
      %p41 = scmp.eq.s32.totalorder %s19, 1
      %p42 = por %p40, %p41
      %p44 = scmp.ne.s32.totalorder %s27, %s43
      %p45 = scmp.eq.s32.totalorder %s19, 0
      %p46 = por %p44, %p45
      %s48 = sadd.s32 %s47, 1
      %p51 = scmp.eq.s32.totalorder %s13, 1
      %p52 = scmp.ne.s32.totalorder %s47, %s49
      %p53 = scmp.eq.s32.totalorder %s13, 0
      %p54 = por %p52, %p53
      %p55 = scmp.ne.s32.totalorder %s47, %s49
      %p56 = scmp.eq.s32.totalorder %s18, 1
      %p57 = por %p55, %p56
      %p58 = scmp.ne.s32.totalorder %s49, %s50
      %p59 = scmp.eq.s32.totalorder %s18, 0
      %p60 = por %p58, %p59
      %p61 = scmp.ne.s32.totalorder %s49, %s50
      %p62 = scmp.eq.s32.totalorder %s19, 1
      %p63 = por %p61, %p62
      %p65 = scmp.ne.s32.totalorder %s50, %s64
      %p66 = scmp.eq.s32.totalorder %s19, 0
      %p67 = por %p65, %p66
      %s69 = sadd.s32 %s68, 1
      %p72 = scmp.eq.s32.totalorder %s13, 1
      %p73 = scmp.ne.s32.totalorder %s68, %s70
      %p74 = scmp.eq.s32.totalorder %s13, 0
      %p75 = por %p73, %p74
      %p76 = scmp.ne.s32.totalorder %s68, %s70
      %p77 = scmp.eq.s32.totalorder %s18, 1
      %p78 = por %p76, %p77
      %p79 = scmp.ne.s32.totalorder %s70, %s71
      %p80 = scmp.eq.s32.totalorder %s18, 0
      %p81 = por %p79, %p80
      %p82 = scmp.ne.s32.totalorder %s70, %s71
      %p83 = scmp.eq.s32.totalorder %s19, 1
      %p84 = por %p82, %p83
      %p86 = scmp.ne.s32.totalorder %s71, %s85
      %p87 = scmp.eq.s32.totalorder %s19, 0
      %p88 = por %p86, %p87
      %s90 = sadd.s32 %s89, 1
      %p93 = scmp.eq.s32.totalorder %s13, 1
      %p94 = scmp.ne.s32.totalorder %s89, %s91
      %p95 = scmp.eq.s32.totalorder %s13, 0
      %p96 = por %p94, %p95
      %p97 = scmp.ne.s32.totalorder %s89, %s91
      %p98 = scmp.eq.s32.totalorder %s18, 1
      %p99 = por %p97, %p98
      %p100 = scmp.ne.s32.totalorder %s91, %s92
      %p101 = scmp.eq.s32.totalorder %s18, 0
      %p102 = por %p100, %p101
      %p103 = scmp.ne.s32.totalorder %s91, %s92
      %p104 = scmp.eq.s32.totalorder %s19, 1
      %p105 = por %p103, %p104
      %p107 = scmp.ne.s32.totalorder %s92, %s106
      %p108 = scmp.eq.s32.totalorder %s19, 0
      %p109 = por %p107, %p108
      %s110 = ssub.s32 %s13, %s20
      %p111 = scmp.eq.s32.totalorder %s110, 0
      %s113 = sadd.s32 %s112, 1
      %s114 = scalar_select %p111, %s112, %s113
      %p117 = pneg %p111
      %p118 = scmp.eq.s32.totalorder %s13, 1
      %p119 = por %p117, %p118
      %p120 = scmp.ne.s32.totalorder %s112, %s115
      %p121 = scmp.eq.s32.totalorder %s13, 0
      %p122 = por %p120, %p121
      %p123 = scmp.ne.s32.totalorder %s112, %s115
      %p124 = scmp.eq.s32.totalorder %s18, 1
      %p125 = por %p123, %p124
      %p126 = scmp.ne.s32.totalorder %s115, %s116
      %p127 = scmp.eq.s32.totalorder %s18, 0
      %p128 = por %p126, %p127
      %p129 = scmp.ne.s32.totalorder %s115, %s116
      %p130 = scmp.eq.s32.totalorder %s19, 1
      %p131 = por %p129, %p130
      %p133 = scmp.ne.s32.totalorder %s116, %s132
      %p134 = scmp.eq.s32.totalorder %s19, 0
      %p135 = por %p133, %p134
      %s136 = ssub.s32 %s13, %s20
      %p137 = scmp.eq.s32.totalorder %s136, 0
      %s139 = sadd.s32 %s138, 1
      %s140 = scalar_select %p137, %s138, %s139
      %p143 = pneg %p137
      %p144 = scmp.eq.s32.totalorder %s13, 1
      %p145 = por %p143, %p144
      %p146 = scmp.ne.s32.totalorder %s138, %s141
      %p147 = scmp.eq.s32.totalorder %s13, 0
      %p148 = por %p146, %p147
      %p149 = scmp.ne.s32.totalorder %s138, %s141
      %p150 = scmp.eq.s32.totalorder %s18, 1
      %p151 = por %p149, %p150
      %p152 = scmp.ne.s32.totalorder %s141, %s142
      %p153 = scmp.eq.s32.totalorder %s18, 0
      %p154 = por %p152, %p153
      %p155 = scmp.ne.s32.totalorder %s141, %s142
      %p156 = scmp.eq.s32.totalorder %s19, 1
      %p157 = por %p155, %p156
      %p159 = scmp.ne.s32.totalorder %s142, %s158
      %p160 = scmp.eq.s32.totalorder %s19, 0
      %p161 = por %p159, %p160
      %s162 = ssub.s32 %s13, %s20
      %p163 = scmp.eq.s32.totalorder %s162, 0
      %s165 = sadd.s32 %s164, 1
      %s166 = scalar_select %p163, %s164, %s165
      %p169 = pneg %p163
      %p170 = scmp.eq.s32.totalorder %s13, 1
      %p171 = por %p169, %p170
      %p172 = scmp.ne.s32.totalorder %s164, %s167
      %p173 = scmp.eq.s32.totalorder %s13, 0
      %p174 = por %p172, %p173
      %p175 = scmp.ne.s32.totalorder %s164, %s167
      %p176 = scmp.eq.s32.totalorder %s18, 1
      %p177 = por %p175, %p176
      %p178 = scmp.ne.s32.totalorder %s167, %s168
      %p179 = scmp.eq.s32.totalorder %s18, 0
      %p180 = por %p178, %p179
      %p181 = scmp.ne.s32.totalorder %s167, %s168
      %p182 = scmp.eq.s32.totalorder %s19, 1
      %p183 = por %p181, %p182
      %p185 = scmp.ne.s32.totalorder %s168, %s184
      %p186 = scmp.eq.s32.totalorder %s19, 0
      %p187 = por %p185, %p186
      %p188 = scmp.le.s32.totalorder 1, %s13
      %p189 = scmp.lt.s32.totalorder %s13, 3
      %p190 = pnand %p188, %p189
      %p191 = pneg %p190
      // Predicated region
      $region9: #{pointnet_set_abstraction.6} parent=5 // pred_check
        _
      $region10: #{pointnet_set_abstraction.6} parent=5 // pred_check_branch
        %193 = sbr.rel (%p190) target = $region12
      $region11: #{pointnet_set_abstraction.6} parent=5 // pred_region
        %s194 = ssub.s32 %s13, 1
        // Predicated region
        $region13: #{pointnet_set_abstraction.6} parent=11 // pred_check
          %p195 = pneg %p60
        $region14: #{pointnet_set_abstraction.6} parent=11 // pred_check_branch
          %197 = sbr.rel (%p195) target = $region16
        $region15: #{pointnet_set_abstraction.6} parent=11 // pred_region
          _
        $region16: #{pointnet_set_abstraction.6} parent=11 // pred_fallthru
          _
        // Predicated region
        $region17: #{pointnet_set_abstraction.6} parent=11 // pred_check
          %p198 = pneg %p81
        $region18: #{pointnet_set_abstraction.6} parent=11 // pred_check_branch
          %200 = sbr.rel (%p198) target = $region20
        $region19: #{pointnet_set_abstraction.6} parent=11 // pred_region
          _
        $region20: #{pointnet_set_abstraction.6} parent=11 // pred_fallthru
          _
        // Predicated region
        $region21: #{pointnet_set_abstraction.6} parent=11 // pred_check
          %p201 = pneg %p102
        $region22: #{pointnet_set_abstraction.6} parent=11 // pred_check_branch
          %203 = sbr.rel (%p201) target = $region24
        $region23: #{pointnet_set_abstraction.6} parent=11 // pred_region
          _
        $region24: #{pointnet_set_abstraction.6} parent=11 // pred_fallthru
          _
      $region12: #{pointnet_set_abstraction.6} parent=5 // pred_fallthru
        _
      %p204 = scmp.lt.s32.totalorder %s13, 2
      // Predicated region
      $region25: #{pointnet_set_abstraction.6} parent=5 // pred_check
        %p205 = pneg %p204
      $region26: #{pointnet_set_abstraction.6} parent=5 // pred_check_branch
        %207 = sbr.rel (%p205) target = $region28
      $region27: #{pointnet_set_abstraction.6} parent=5 // pred_region
        // Predicated region
        $region29: #{pointnet_set_abstraction.6} parent=27 // pred_check
          %p208 = pneg %p33
        $region30: #{pointnet_set_abstraction.6} parent=27 // pred_check_branch
          %210 = sbr.rel (%p208) target = $region32
        $region31: #{pointnet_set_abstraction.6} parent=27 // pred_region
          %s211 = sand.u32 %s23, 1
          %s212 = sand.u32 %s23, 1
          %s213 = smul.addr %s212, 32
          %s214 = scalar_lea.vmem [#allocation2], %s213
          %s215 = smul.u32 4, %s13
          %s216 = smul.addr %s215, 4
          %s217 = scalar_lea.vmem %s0, %s216
          // Predicated region
          $region33: #{pointnet_set_abstraction.6} parent=31 // pred_check
            _
          $region34: #{pointnet_set_abstraction.6} parent=31 // pred_check_branch
            %219 = sbr.rel (0) target = $region36
          $region35: #{pointnet_set_abstraction.6} parent=31 // pred_region
            // Predicated region
            $region37: #{pointnet_set_abstraction.6} parent=35 // pred_check
              _
            $region38: #{pointnet_set_abstraction.6} parent=35 // pred_check_branch
              %221 = sbr.rel (0) target = $region40
            $region39: #{pointnet_set_abstraction.6} parent=35 // pred_region
              loop: start=0, step=1, limit=1
              $region41: #{pointnet_set_abstraction.6} parent=39 // loop_pre_header
                _
              $region42: #{pointnet_set_abstraction.6} parent=39 // loop_header
                %s223 = sphi 0, %s227
                %p224 = scmp.ge.s32.totalorder %s223, 1
                %s228 = sphi %s217, %s217
                %s229 = sphi %s214, %s214
              $region43: #{pointnet_set_abstraction.6} parent=39 // loop_header_branch
                %226 = sbr.rel (%p224) target = $region47
              $region44: #{pointnet_set_abstraction.6} parent=39 // loop_body
                %v230 = vld [vmem:[%s228] sm:$0xff]
                %231 = vst [vmem:[%s229] sm:$0xff] %v230
                %v232 = vld [vmem:[%s228 + $0x8] sm:$0xff]
                %233 = vst [vmem:[%s229 + $0x8] sm:$0xff] %v232
                %v234 = vld [vmem:[%s228 + $0x20] sm:$0xff]
                %235 = vst [vmem:[%s229 + $0x10] sm:$0xff] %v234
                %v236 = vld [vmem:[%s228 + $0x28] sm:$0xff]
                %237 = vst [vmem:[%s229 + $0x18] sm:$0xff] %v236
              $region45: #{pointnet_set_abstraction.6} parent=39 // loop_footer
                %s227 = sadd.s32 1, %s223
              $region46: #{pointnet_set_abstraction.6} parent=39 // loop_footer_branch
                %222 = sbr.rel target = $region42
              $region47: #{pointnet_set_abstraction.6} parent=39 // loop_exit
                _
            $region40: #{pointnet_set_abstraction.6} parent=35 // pred_fallthru
              _
            // Predicated region
            $region48: #{pointnet_set_abstraction.6} parent=35 // pred_check
              _
            $region49: #{pointnet_set_abstraction.6} parent=35 // pred_check_branch
              %239 = sbr.rel target = $region51
            $region50: #{pointnet_set_abstraction.6} parent=35 // pred_region
              _
            $region51: #{pointnet_set_abstraction.6} parent=35 // pred_fallthru
              _
          $region36: #{pointnet_set_abstraction.6} parent=31 // pred_fallthru
            _
          %240 = vnop
        $region32: #{pointnet_set_abstraction.6} parent=27 // pred_fallthru
          _
      $region28: #{pointnet_set_abstraction.6} parent=5 // pred_fallthru
        _
      %p241 = scmp.le.s32.totalorder 1, %s13
      %p242 = scmp.lt.s32.totalorder %s13, 3
      %p243 = pnand %p241, %p242
      %p244 = pneg %p243
      // Predicated region
      $region52: #{pointnet_set_abstraction.6} parent=5 // pred_check
        _
      $region53: #{pointnet_set_abstraction.6} parent=5 // pred_check_branch
        %246 = sbr.rel (%p243) target = $region55
      $region54: #{pointnet_set_abstraction.6} parent=5 // pred_region
        %s247 = ssub.s32 %s13, 1
        %s248 = sand.u32 %s26, 1
        %s249 = sand.u32 %s26, 1
        %s250 = smul.addr %s249, 32
        %s251 = scalar_lea.vmem [#allocation2], %s250
        // Predicated region
        $region56: #{pointnet_set_abstraction.6} parent=54 // pred_check
          %p252 = pneg %p39
        $region57: #{pointnet_set_abstraction.6} parent=54 // pred_check_branch
          %254 = sbr.rel (%p252) target = $region59
        $region58: #{pointnet_set_abstraction.6} parent=54 // pred_region
          _
        $region59: #{pointnet_set_abstraction.6} parent=54 // pred_fallthru
          _
        %s255 = sand.u32 %s26, 1
        %s256 = sand.u32 %s26, 1
        %s257 = smul.addr %s256, 32
        %s258 = scalar_lea.vmem [#allocation2], %s257
        %p259 = pneg %p39
        %p260 = pneg %p36
        %p261 = pneg %p60
        %p262 = pneg %p57
        %p263 = pneg %p81
        %p264 = pneg %p78
        %p265 = pneg %p102
        %p266 = pneg %p99
        %p267 = pneg %p128
        %p268 = pneg %p125
        %s269 = sand.u32 %s115, 1
        %s270 = sand.u32 %s115, 1
        %s271 = smul.addr %s270, 64
        %s272 = scalar_lea.vmem [#allocation3], %s271
        %p273 = pneg %p154
        %p274 = pneg %p151
        %p275 = scmp.lt.s32.totalorder %s18, 1
        %s276 = scalar_select %p275, %s18, 1
        %s277 = smul.addr %s276, 4
        %s278 = smul.addr %s277, 8
        %s279 = scalar_lea.vmem %s5, %s278
        %p280 = pneg %p180
        %p281 = pneg %p177
        %p282 = scmp.lt.s32.totalorder %s18, 1
        %s283 = scalar_select %p282, %s18, 1
        %s284 = smul.addr %s283, 4
        %s285 = smul.addr %s284, 8
        %s286 = scalar_lea.vmem %s6, %s285
        %s287 = smul.u32 4, %s18
        %s288 = smul.u32 4, %s18
        %p289 = scmp.lt.s32.totalorder %s18, 1
        %s290 = scalar_select %p289, %s18, 1
        %s291 = smul.addr %s290, 4
        %s292 = smul.addr %s291, 8
        %s293 = scalar_lea.vmem %s5, %s292
        %p294 = scmp.lt.s32.totalorder %s18, 1
        %s295 = scalar_select %p294, %s18, 1
        %s296 = smul.addr %s295, 4
        %s297 = smul.addr %s296, 8
        %s298 = scalar_lea.vmem %s6, %s297
        %v300 = vld [vmem:[%s1] sm:$0xf]
        %v301 = vld [vmem:[%s1 + $0x4] sm:$0xf]
        %v302 = vld [vmem:[%s1 + $0x8] sm:$0xf]
        %v303 = vld [vmem:[%s1 + $0xc] sm:$0xf]
        %v304 = vld [vmem:[%s251] sm:$0xff]
        %v305 = vld [vmem:[%s251 + $0x8] sm:$0xff]
        %v306 = vld [vmem:[%s251 + $0x10] sm:$0xff]
        %v307 = vld [vmem:[%s251 + $0x18] sm:$0xff]
        %v312 = vunpack.c.l.b16 %v300
        %v313 = vunpack.c.l.b16 %v301
        %v314 = vunpack.c.l.b16 %v302
        %v315 = vunpack.c.l.b16 %v303
        %v316 = vpack.c.b16 %v313, %v312
        %v317 = vpack.c.b16 %v315, %v314
        %v322 = vunpack.c.l.b16 %v304
        %v323 = vunpack.c.h.b16 %v304
        %v324 = vunpack.c.l.b16 %v305
        %v325 = vunpack.c.h.b16 %v305
        %v326 = vunpack.c.l.b16 %v306
        %v327 = vunpack.c.h.b16 %v306
        %v328 = vunpack.c.l.b16 %v307
        %v329 = vunpack.c.h.b16 %v307
        %v330 = vpack.c.b16 %v326, %v322
        %v331 = vpack.c.b16 %v327, %v323
        %v332 = vpack.c.b16 %v328, %v324
        %v333 = vpack.c.b16 %v329, %v325
        %vm338 = vcmask 130048
        %v340 = vsel %vm338, %v316, 0
        %v343 = vsel %vm338, %v317, 0
        %345 = vmatprep.subr.bf16.mxu0 %v331
        %346 = vmatpush1.bf16.msra.mxu0 %v330
        %347 = vmatprep.subr.bf16.mxu0 0
        %348 = vmatpush1.bf16.msra.mxu0 0
        %349 = vmatprep.subr.bf16.mxu0 0
        %350 = vmatpush1.bf16.msra.mxu0 0
        %351 = vmatprep.subr.bf16.mxu0 0
        %352 = vmatpush1.bf16.msra.mxu0 0
        %353 = vmatprep.subr.bf16.mxu0 0
        %354 = vmatpush1.bf16.msra.mxu0 0
        %355 = vmatprep.subr.bf16.mxu0 0
        %356 = vmatpush1.bf16.msra.mxu0 0
        %357 = vmatprep.subr.bf16.mxu0 0
        %358 = vmatpush1.bf16.msra.mxu0 0
        %359 = vmatprep.subr.bf16.mxu0 0
        %360 = vmatpush1.bf16.msra.mxu0 0
        %361 = vmatprep.subr.bf16.mxu0 0
        %362 = vmatpush1.bf16.msra.mxu0 0
        %363 = vmatprep.subr.bf16.mxu0 0
        %364 = vmatpush1.bf16.msra.mxu0 0
        %365 = vmatprep.subr.bf16.mxu0 0
        %366 = vmatpush1.bf16.msra.mxu0 0
        %367 = vmatprep.subr.bf16.mxu0 0
        %368 = vmatpush1.bf16.msra.mxu0 0
        %369 = vmatprep.subr.bf16.mxu0 0
        %370 = vmatpush1.bf16.msra.mxu0 0
        %371 = vmatprep.subr.bf16.mxu0 0
        %372 = vmatpush1.bf16.msra.mxu0 0
        %373 = vmatprep.subr.bf16.mxu0 0
        %374 = vmatpush1.bf16.msra.mxu0 0
        %375 = vmatprep.subr.bf16.mxu0 0
        %376 = vmatpush1.bf16.msra.mxu0 0
        %377 = vmatprep.mubr.bf16.mxu0 0
        %378 = vmatmul.mubr.bf16.gmra.mrb[0].mxu0 %v340
        %v379 = vpop.f32.mrb[0].mxu0
        %v380 = vadd.f32 0.0, %v379
        %v381 = vpop.f32.mrb[0].mxu0
        %v382 = vadd.f32 0.0, %v381
        %v383 = vpop.f32.mrb[0].mxu0
        %v384 = vadd.f32 0.0, %v383
        %v385 = vpop.f32.mrb[0].mxu0
        %v386 = vadd.f32 0.0, %v385
        %387 = vmatprep.mubr.bf16.mxu0 0
        %388 = vmatmul.mubr.bf16.gmra.mrb[0].mxu0 %v343
        %v389 = vpop.f32.mrb[0].mxu0
        %v390 = vadd.f32 0.0, %v389
        %v391 = vpop.f32.mrb[0].mxu0
        %v392 = vadd.f32 0.0, %v391
        %v393 = vpop.f32.mrb[0].mxu0
        %v394 = vadd.f32 0.0, %v393
        %v395 = vpop.f32.mrb[0].mxu0
        %v396 = vadd.f32 0.0, %v395
        %397 = vdwg.mxu0
        %398 = vmatprep.subr.bf16.mxu0 %v333
        %399 = vmatpush1.bf16.msra.mxu0 %v332
        %400 = vmatprep.subr.bf16.mxu0 0
        %401 = vmatpush1.bf16.msra.mxu0 0
        %402 = vmatprep.subr.bf16.mxu0 0
        %403 = vmatpush1.bf16.msra.mxu0 0
        %404 = vmatprep.subr.bf16.mxu0 0
        %405 = vmatpush1.bf16.msra.mxu0 0
        %406 = vmatprep.subr.bf16.mxu0 0
        %407 = vmatpush1.bf16.msra.mxu0 0
        %408 = vmatprep.subr.bf16.mxu0 0
        %409 = vmatpush1.bf16.msra.mxu0 0
        %410 = vmatprep.subr.bf16.mxu0 0
        %411 = vmatpush1.bf16.msra.mxu0 0
        %412 = vmatprep.subr.bf16.mxu0 0
        %413 = vmatpush1.bf16.msra.mxu0 0
        %414 = vmatprep.subr.bf16.mxu0 0
        %415 = vmatpush1.bf16.msra.mxu0 0
        %416 = vmatprep.subr.bf16.mxu0 0
        %417 = vmatpush1.bf16.msra.mxu0 0
        %418 = vmatprep.subr.bf16.mxu0 0
        %419 = vmatpush1.bf16.msra.mxu0 0
        %420 = vmatprep.subr.bf16.mxu0 0
        %421 = vmatpush1.bf16.msra.mxu0 0
        %422 = vmatprep.subr.bf16.mxu0 0
        %423 = vmatpush1.bf16.msra.mxu0 0
        %424 = vmatprep.subr.bf16.mxu0 0
        %425 = vmatpush1.bf16.msra.mxu0 0
        %426 = vmatprep.subr.bf16.mxu0 0
        %427 = vmatpush1.bf16.msra.mxu0 0
        %428 = vmatprep.subr.bf16.mxu0 0
        %429 = vmatpush1.bf16.msra.mxu0 0
        %430 = vmatprep.mubr.bf16.mxu0 0
        %431 = vmatmul.mubr.bf16.gmra.mrb[0].mxu0 %v340
        %v432 = vpop.f32.mrb[0].mxu0
        %v433 = vadd.f32 0.0, %v432
        %v434 = vpop.f32.mrb[0].mxu0
        %v435 = vadd.f32 0.0, %v434
        %v436 = vpop.f32.mrb[0].mxu0
        %v437 = vadd.f32 0.0, %v436
        %v438 = vpop.f32.mrb[0].mxu0
        %v439 = vadd.f32 0.0, %v438
        %440 = vmatprep.mubr.bf16.mxu0 0
        %441 = vmatmul.mubr.bf16.gmra.mrb[0].mxu0 %v343
        %v442 = vpop.f32.mrb[0].mxu0
        %v443 = vadd.f32 0.0, %v442
        %v444 = vpop.f32.mrb[0].mxu0
        %v445 = vadd.f32 0.0, %v444
        %v446 = vpop.f32.mrb[0].mxu0
        %v447 = vadd.f32 0.0, %v446
        %v448 = vpop.f32.mrb[0].mxu0
        %v449 = vadd.f32 0.0, %v448
        %450 = vdwg.mxu0
        %v451 = vld [vmem:[%s2] sm:$0xff]
        %v452 = vld [vmem:[%s2 + $0x8] sm:$0xff]
        %v453 = vld [vmem:[%s2 + $0x10] sm:$0xff]
        %v454 = vld [vmem:[%s2 + $0x18] sm:$0xff]
        %456 = vset.pattern.permute.xlu0 0
        %457 = vperm.xlu0 %456, %v451
        %v458 = vpop.permute.xlu0 %457
        %461 = vset.pattern.permute.xlu0 0
        %462 = vperm.xlu0 %461, %v452
        %v463 = vpop.permute.xlu0 %462
        %466 = vset.pattern.permute.xlu0 0
        %467 = vperm.xlu0 %466, %v453
        %v468 = vpop.permute.xlu0 %467
        %471 = vset.pattern.permute.xlu0 0
        %472 = vperm.xlu0 %471, %v454
        %v473 = vpop.permute.xlu0 %472
        %v475 = vmul.f32 %v380, %v458
        %v476 = vmul.f32 %v382, %v458
        %v477 = vmul.f32 %v433, %v458
        %v478 = vmul.f32 %v435, %v458
        %v479 = vmul.f32 %v384, %v463
        %v480 = vmul.f32 %v386, %v463
        %v481 = vmul.f32 %v437, %v463
        %v482 = vmul.f32 %v439, %v463
        %v483 = vmul.f32 %v390, %v468
        %v484 = vmul.f32 %v392, %v468
        %v485 = vmul.f32 %v443, %v468
        %v486 = vmul.f32 %v445, %v468
        %v487 = vmul.f32 %v394, %v473
        %v488 = vmul.f32 %v396, %v473
        %v489 = vmul.f32 %v447, %v473
        %v490 = vmul.f32 %v449, %v473
        %v491 = vld [vmem:[%s3] sm:$0xff]
        %v492 = vld [vmem:[%s3 + $0x8] sm:$0xff]
        %v493 = vld [vmem:[%s3 + $0x10] sm:$0xff]
        %v494 = vld [vmem:[%s3 + $0x18] sm:$0xff]
        %496 = vset.pattern.permute.xlu0 0
        %497 = vperm.xlu0 %496, %v491
        %v498 = vpop.permute.xlu0 %497
        %501 = vset.pattern.permute.xlu0 0
        %502 = vperm.xlu0 %501, %v492
        %v503 = vpop.permute.xlu0 %502
        %506 = vset.pattern.permute.xlu0 0
        %507 = vperm.xlu0 %506, %v493
        %v508 = vpop.permute.xlu0 %507
        %511 = vset.pattern.permute.xlu0 0
        %512 = vperm.xlu0 %511, %v494
        %v513 = vpop.permute.xlu0 %512
        %v515 = vadd.f32 %v475, %v498
        %v516 = vadd.f32 %v476, %v498
        %v517 = vadd.f32 %v477, %v498
        %v518 = vadd.f32 %v478, %v498
        %v519 = vadd.f32 %v479, %v503
        %v520 = vadd.f32 %v480, %v503
        %v521 = vadd.f32 %v481, %v503
        %v522 = vadd.f32 %v482, %v503
        %v523 = vadd.f32 %v483, %v508
        %v524 = vadd.f32 %v484, %v508
        %v525 = vadd.f32 %v485, %v508
        %v526 = vadd.f32 %v486, %v508
        %v527 = vadd.f32 %v487, %v513
        %v528 = vadd.f32 %v488, %v513
        %v529 = vadd.f32 %v489, %v513
        %v530 = vadd.f32 %v490, %v513
        %v531 = vmax.f32 %v515, 0.0
        %v532 = vmax.f32 %v516, 0.0
        %v533 = vmax.f32 %v517, 0.0
        %v534 = vmax.f32 %v518, 0.0
        %v535 = vmax.f32 %v519, 0.0
        %v536 = vmax.f32 %v520, 0.0
        %v537 = vmax.f32 %v521, 0.0
        %v538 = vmax.f32 %v522, 0.0
        %v539 = vmax.f32 %v523, 0.0
        %v540 = vmax.f32 %v524, 0.0
        %v541 = vmax.f32 %v525, 0.0
        %v542 = vmax.f32 %v526, 0.0
        %v543 = vmax.f32 %v527, 0.0
        %v544 = vmax.f32 %v528, 0.0
        %v545 = vmax.f32 %v529, 0.0
        %v546 = vmax.f32 %v530, 0.0
        %v547 = vlaneseq
        %v548 = vand.u32 %v547, 127
        %v549 = vadd.s32 %v548, 128
        %v550 = vadd.s32 %v548, 256
        %v551 = vadd.s32 %v548, 384
        %s552 = smul.u32 %s18, 512
        %v553 = vstv %s552
        %v554 = vadd.s32 %v548, %v553
        %v555 = vadd.s32 %v549, %v553
        %v556 = vadd.s32 %v550, %v553
        %v557 = vadd.s32 %v551, %v553
        %vm558 = vcmp.lt.s32.totalorder %v554, 0
        %v559 = vsub.s32 0, %v554
        %v560 = vsel %vm558, %v559, %v554
        %v561 = vshrl.u32 %v560, 7
        %v562 = vand.u32 %v560, 127
        %v563 = vsub.s32 0, %v562
        %v564 = vsel %vm558, %v563, %v562
        %vm565 = vcmp.lt.s32.totalorder %v555, 0
        %v566 = vsub.s32 0, %v555
        %v567 = vsel %vm565, %v566, %v555
        %v568 = vshrl.u32 %v567, 7
        %v569 = vand.u32 %v567, 127
        %v570 = vsub.s32 0, %v569
        %v571 = vsel %vm565, %v570, %v569
        %vm572 = vcmp.lt.s32.totalorder %v556, 0
        %v573 = vsub.s32 0, %v556
        %v574 = vsel %vm572, %v573, %v556
        %v575 = vshrl.u32 %v574, 7
        %v576 = vand.u32 %v574, 127
        %v577 = vsub.s32 0, %v576
        %v578 = vsel %vm572, %v577, %v576
        %vm579 = vcmp.lt.s32.totalorder %v557, 0
        %v580 = vsub.s32 0, %v557
        %v581 = vsel %vm579, %v580, %v557
        %v582 = vshrl.u32 %v581, 7
        %v583 = vand.u32 %v581, 127
        %v584 = vsub.s32 0, %v583
        %v585 = vsel %vm579, %v584, %v583
        %vm586 = vcmp.ne.s32.totalorder %v564, 0
        %vm587 = vcmp.ne.s32.totalorder %v571, 0
        %vm588 = vcmp.ne.s32.totalorder %v578, 0
        %vm589 = vcmp.ne.s32.totalorder %v585, 0
        %vm590 = vcmp.lt.s32.totalorder %v564, 0
        %vm591 = vcmp.lt.s32.totalorder %v571, 0
        %vm592 = vcmp.lt.s32.totalorder %v578, 0
        %vm593 = vcmp.lt.s32.totalorder %v585, 0
        %vm594 = vmand %vm590, %vm586
        %vm595 = vmand %vm591, %vm587
        %vm596 = vmand %vm592, %vm588
        %vm597 = vmand %vm593, %vm589
        %v598 = vadd.s32 %v564, 128
        %v599 = vadd.s32 %v571, 128
        %v600 = vadd.s32 %v578, 128
        %v601 = vadd.s32 %v585, 128
        %v602 = vsel %vm594, %v598, %v564
        %v603 = vsel %vm595, %v599, %v571
        %v604 = vsel %vm596, %v600, %v578
        %v605 = vsel %vm597, %v601, %v585
        %vm606 = vcmp.lt.s32.totalorder %v602, 16
        %vm607 = vcmp.lt.s32.totalorder %v603, 16
        %vm608 = vcmp.lt.s32.totalorder %v604, 16
        %vm609 = vcmp.lt.s32.totalorder %v605, 16
        %v610 = vsel %vm606, 1, 0
        %v611 = vsel %vm607, 1, 0
        %v612 = vsel %vm608, 1, 0
        %v613 = vsel %vm609, 1, 0
        %vm614 = vcmp.eq.s32.totalorder %v610, 1
        %vm615 = vcmp.eq.s32.totalorder %v611, 1
        %vm616 = vcmp.eq.s32.totalorder %v612, 1
        %vm617 = vcmp.eq.s32.totalorder %v613, 1
        %v618 = vsel %vm614, %v531, 0.0
        %v619 = vsel %vm615, %v532, 0.0
        %v620 = vsel %vm616, %v533, 0.0
        %v621 = vsel %vm617, %v534, 0.0
        %v622 = vsel %vm614, %v535, 0.0
        %v623 = vsel %vm615, %v536, 0.0
        %v624 = vsel %vm616, %v537, 0.0
        %v625 = vsel %vm617, %v538, 0.0
        %v626 = vsel %vm614, %v539, 0.0
        %v627 = vsel %vm615, %v540, 0.0
        %v628 = vsel %vm616, %v541, 0.0
        %v629 = vsel %vm617, %v542, 0.0
        %v630 = vsel %vm614, %v543, 0.0
        %v631 = vsel %vm615, %v544, 0.0
        %v632 = vsel %vm616, %v545, 0.0
        %v633 = vsel %vm617, %v546, 0.0
        %v634 = vpack.c.bf16 %v622, %v618
        %v635 = vpack.c.bf16 %v623, %v619
        %v636 = vpack.c.bf16 %v624, %v620
        %v637 = vpack.c.bf16 %v625, %v621
        %v638 = vpack.c.bf16 %v630, %v626
        %v639 = vpack.c.bf16 %v631, %v627
        %v640 = vpack.c.bf16 %v632, %v628
        %v641 = vpack.c.bf16 %v633, %v629
        %v650 = vunpack.c.l.b16 %v634
        %v651 = vunpack.c.l.b16 %v635
        %v652 = vunpack.c.l.b16 %v636
        %v653 = vunpack.c.l.b16 %v637
        %v654 = vunpack.c.h.b16 %v634
        %v655 = vunpack.c.h.b16 %v635
        %v656 = vunpack.c.h.b16 %v636
        %v657 = vunpack.c.h.b16 %v637
        %v658 = vunpack.c.l.b16 %v638
        %v659 = vunpack.c.l.b16 %v639
        %v660 = vunpack.c.l.b16 %v640
        %v661 = vunpack.c.l.b16 %v641
        %v662 = vunpack.c.h.b16 %v638
        %v663 = vunpack.c.h.b16 %v639
        %v664 = vunpack.c.h.b16 %v640
        %v665 = vunpack.c.h.b16 %v641
        %v666 = vpack.c.b16 %v651, %v650
        %v667 = vpack.c.b16 %v653, %v652
        %v668 = vpack.c.b16 %v655, %v654
        %v669 = vpack.c.b16 %v657, %v656
        %v670 = vpack.c.b16 %v659, %v658
        %v671 = vpack.c.b16 %v661, %v660
        %v672 = vpack.c.b16 %v663, %v662
        %v673 = vpack.c.b16 %v665, %v664
        %682 = vst [vmem:[%s272] sm:$0xff] %v666
        %683 = vst [vmem:[%s272 + $0x8] sm:$0xff] %v667
        %684 = vst [vmem:[%s272 + $0x10] sm:$0xff] %v668
        %685 = vst [vmem:[%s272 + $0x18] sm:$0xff] %v669
        %686 = vst [vmem:[%s272 + $0x20] sm:$0xff] %v670
        %687 = vst [vmem:[%s272 + $0x28] sm:$0xff] %v671
        %688 = vst [vmem:[%s272 + $0x30] sm:$0xff] %v672
        %689 = vst [vmem:[%s272 + $0x38] sm:$0xff] %v673
        %690 = vmatprep.subr.bf16.mxu0 %v635
        %691 = vmatpush1.bf16.xpose.msra.mxu0 %v634
        %692 = vmatprep.subr.bf16.mxu0 %v639
        %693 = vmatpush1.bf16.xpose.msra.mxu0 %v638
        %694 = vmatprep.subr.bf16.mxu0 0
        %695 = vmatpush1.bf16.xpose.msra.mxu0 0
        %696 = vmatprep.subr.bf16.mxu0 0
        %697 = vmatpush1.bf16.xpose.msra.mxu0 0
        %698 = vmatprep.subr.bf16.mxu0 0
        %699 = vmatpush1.bf16.xpose.msra.mxu0 0
        %700 = vmatprep.subr.bf16.mxu0 0
        %701 = vmatpush1.bf16.xpose.msra.mxu0 0
        %702 = vmatprep.subr.bf16.mxu0 0
        %703 = vmatpush1.bf16.xpose.msra.mxu0 0
        %704 = vmatprep.subr.bf16.mxu0 0
        %705 = vmatpush1.bf16.xpose.msra.mxu0 0
        %706 = vmatprep.subr.bf16.mxu0 0
        %707 = vmatpush1.bf16.xpose.msra.mxu0 0
        %708 = vmatprep.subr.bf16.mxu0 0
        %709 = vmatpush1.bf16.xpose.msra.mxu0 0
        %710 = vmatprep.subr.bf16.mxu0 0
        %711 = vmatpush1.bf16.xpose.msra.mxu0 0
        %712 = vmatprep.subr.bf16.mxu0 0
        %713 = vmatpush1.bf16.xpose.msra.mxu0 0
        %714 = vmatprep.subr.bf16.mxu0 0
        %715 = vmatpush1.bf16.xpose.msra.mxu0 0
        %716 = vmatprep.subr.bf16.mxu0 0
        %717 = vmatpush1.bf16.xpose.msra.mxu0 0
        %718 = vmatprep.subr.bf16.mxu0 0
        %719 = vmatpush1.bf16.xpose.msra.mxu0 0
        %720 = vmatprep.subr.bf16.mxu0 0
        %721 = vmatpush1.bf16.xpose.msra.mxu0 0
        %722 = vmatprep.mubr.bf16.mxu0 %v635
        %723 = vmatmul.mubr.bf16.gmra.mrb[0].mxu0 %v634
        %v724 = vpop.f32.mrb[0].mxu0
        %v725 = vadd.f32 0.0, %v724
        %v726 = vpop.f32.mrb[0].mxu0
        %v727 = vpop.f32.mrb[0].mxu0
        %v728 = vadd.f32 0.0, %v727
        %v729 = vpop.f32.mrb[0].mxu0
        %730 = vmatprep.mubr.bf16.mxu0 %v639
        %731 = vmatmul.mubr.bf16.gmra.mrb[0].mxu0 %v638
        %v732 = vpop.f32.mrb[0].mxu0
        %v733 = vadd.f32 0.0, %v732
        %v734 = vpop.f32.mrb[0].mxu0
        %v735 = vpop.f32.mrb[0].mxu0
        %v736 = vadd.f32 0.0, %v735
        %v737 = vpop.f32.mrb[0].mxu0
        %738 = vdwg.mxu0
        %739 = vmatprep.subr.bf16.mxu0 %v637
        %740 = vmatpush1.bf16.xpose.msra.mxu0 %v636
        %741 = vmatprep.subr.bf16.mxu0 %v641
        %742 = vmatpush1.bf16.xpose.msra.mxu0 %v640
        %743 = vmatprep.subr.bf16.mxu0 0
        %744 = vmatpush1.bf16.xpose.msra.mxu0 0
        %745 = vmatprep.subr.bf16.mxu0 0
        %746 = vmatpush1.bf16.xpose.msra.mxu0 0
        %747 = vmatprep.subr.bf16.mxu0 0
        %748 = vmatpush1.bf16.xpose.msra.mxu0 0
        %749 = vmatprep.subr.bf16.mxu0 0
        %750 = vmatpush1.bf16.xpose.msra.mxu0 0
        %751 = vmatprep.subr.bf16.mxu0 0
        %752 = vmatpush1.bf16.xpose.msra.mxu0 0
        %753 = vmatprep.subr.bf16.mxu0 0
        %754 = vmatpush1.bf16.xpose.msra.mxu0 0
        %755 = vmatprep.subr.bf16.mxu0 0
        %756 = vmatpush1.bf16.xpose.msra.mxu0 0
        %757 = vmatprep.subr.bf16.mxu0 0
        %758 = vmatpush1.bf16.xpose.msra.mxu0 0
        %759 = vmatprep.subr.bf16.mxu0 0
        %760 = vmatpush1.bf16.xpose.msra.mxu0 0
        %761 = vmatprep.subr.bf16.mxu0 0
        %762 = vmatpush1.bf16.xpose.msra.mxu0 0
        %763 = vmatprep.subr.bf16.mxu0 0
        %764 = vmatpush1.bf16.xpose.msra.mxu0 0
        %765 = vmatprep.subr.bf16.mxu0 0
        %766 = vmatpush1.bf16.xpose.msra.mxu0 0
        %767 = vmatprep.subr.bf16.mxu0 0
        %768 = vmatpush1.bf16.xpose.msra.mxu0 0
        %769 = vmatprep.subr.bf16.mxu0 0
        %770 = vmatpush1.bf16.xpose.msra.mxu0 0
        %771 = vmatprep.mubr.bf16.mxu0 %v637
        %772 = vmatmul.mubr.bf16.gmra.mrb[0].mxu0 %v636
        %v773 = vpop.f32.mrb[0].mxu0
        %v774 = vadd.f32 %v725, %v773
        %v775 = vpop.f32.mrb[0].mxu0
        %v776 = vpop.f32.mrb[0].mxu0
        %v777 = vadd.f32 %v728, %v776
        %v778 = vpop.f32.mrb[0].mxu0
        %779 = vmatprep.mubr.bf16.mxu0 %v641
        %780 = vmatmul.mubr.bf16.gmra.mrb[0].mxu0 %v640
        %v781 = vpop.f32.mrb[0].mxu0
        %v782 = vadd.f32 %v733, %v781
        %v783 = vpop.f32.mrb[0].mxu0
        %v784 = vpop.f32.mrb[0].mxu0
        %v785 = vadd.f32 %v736, %v784
        %v786 = vpop.f32.mrb[0].mxu0
        %787 = vdwg.mxu0
        %vm788 = vcmask 261120
        %789 = vst.msk [vmem:[%s293] sm:$0xff] %vm788, %v774
        %790 = vst.msk [vmem:[%s293 + $0x8] sm:$0xff] %vm788, %v777
        %791 = vst.msk [vmem:[%s293 + $0x10] sm:$0xff] %vm788, %v782
        %792 = vst.msk [vmem:[%s293 + $0x18] sm:$0xff] %vm788, %v785
        %v793 = vunpack.c.l.bf16 %v634
        %v794 = vunpack.c.l.bf16 %v635
        %v795 = vunpack.c.l.bf16 %v636
        %v796 = vunpack.c.l.bf16 %v637
        %v797 = vunpack.c.h.bf16 %v634
        %v798 = vunpack.c.h.bf16 %v635
        %v799 = vunpack.c.h.bf16 %v636
        %v800 = vunpack.c.h.bf16 %v637
        %v801 = vunpack.c.l.bf16 %v638
        %v802 = vunpack.c.l.bf16 %v639
        %v803 = vunpack.c.l.bf16 %v640
        %v804 = vunpack.c.l.bf16 %v641
        %v805 = vunpack.c.h.bf16 %v638
        %v806 = vunpack.c.h.bf16 %v639
        %v807 = vunpack.c.h.bf16 %v640
        %v808 = vunpack.c.h.bf16 %v641
        %v809 = vadd.f32 %v793, %v794
        %v810 = vadd.f32 %v809, %v795
        %v811 = vadd.f32 %v810, %v796
        %812 = vadd.xlane.f32.xlu0 %v811
        %v813 = vpop.xlane.xlu0 %812
        %v814 = vadd.f32 %v797, %v798
        %v815 = vadd.f32 %v814, %v799
        %v816 = vadd.f32 %v815, %v800
        %817 = vadd.xlane.f32.xlu0 %v816
        %v818 = vpop.xlane.xlu0 %817
        %v819 = vadd.f32 %v801, %v802
        %v820 = vadd.f32 %v819, %v803
        %v821 = vadd.f32 %v820, %v804
        %822 = vadd.xlane.f32.xlu0 %v821
        %v823 = vpop.xlane.xlu0 %822
        %v824 = vadd.f32 %v805, %v806
        %v825 = vadd.f32 %v824, %v807
        %v826 = vadd.f32 %v825, %v808
        %827 = vadd.xlane.f32.xlu0 %v826
        %v828 = vpop.xlane.xlu0 %827
        %vm829 = vcmask 7168
        %830 = vst.msk [vmem:[%s298] sm:$0xff] %vm829, %v813
        %831 = vst.msk [vmem:[%s298 + $0x8] sm:$0xff] %vm829, %v818
        %832 = vst.msk [vmem:[%s298 + $0x10] sm:$0xff] %vm829, %v823
        %833 = vst.msk [vmem:[%s298 + $0x18] sm:$0xff] %vm829, %v828
        %s834 = sand.u32 %s115, 1
        %s835 = sand.u32 %s115, 1
        %s836 = smul.addr %s835, 64
        %s837 = scalar_lea.vmem [#allocation3], %s836
        %p838 = scmp.lt.s32.totalorder %s18, 1
        %s839 = scalar_select %p838, %s18, 1
        %s840 = smul.addr %s839, 4
        %s841 = smul.addr %s840, 8
        %s842 = scalar_lea.vmem %s5, %s841
        %p843 = scmp.lt.s32.totalorder %s18, 1
        %s844 = scalar_select %p843, %s18, 1
        %s845 = smul.addr %s844, 4
        %s846 = smul.addr %s845, 8
        %s847 = scalar_lea.vmem %s6, %s846
        // Predicated region
        $region60: #{pointnet_set_abstraction.6} parent=54 // pred_check
          %p848 = pneg %p125
        $region61: #{pointnet_set_abstraction.6} parent=54 // pred_check_branch
          %850 = sbr.rel (%p848) target = $region63
        $region62: #{pointnet_set_abstraction.6} parent=54 // pred_region
          %s851 = smul.u32 4, %s18
          %s852 = smul.addr %s851, 4
          %s853 = scalar_lea.vmem %s4, %s852
          // Predicated region
          $region64: #{pointnet_set_abstraction.6} parent=62 // pred_check
            _
          $region65: #{pointnet_set_abstraction.6} parent=62 // pred_check_branch
            %855 = sbr.rel (0) target = $region67
          $region66: #{pointnet_set_abstraction.6} parent=62 // pred_region
            // Predicated region
            $region68: #{pointnet_set_abstraction.6} parent=66 // pred_check
              _
            $region69: #{pointnet_set_abstraction.6} parent=66 // pred_check_branch
              %857 = sbr.rel (0) target = $region71
            $region70: #{pointnet_set_abstraction.6} parent=66 // pred_region
              loop: start=0, step=1, limit=1
              $region72: #{pointnet_set_abstraction.6} parent=70 // loop_pre_header
                _
              $region73: #{pointnet_set_abstraction.6} parent=70 // loop_header
                %s859 = sphi 0, %s863
                %p860 = scmp.ge.s32.totalorder %s859, 1
                %s864 = sphi %s837, %s837
                %s865 = sphi %s853, %s853
              $region74: #{pointnet_set_abstraction.6} parent=70 // loop_header_branch
                %862 = sbr.rel (%p860) target = $region78
              $region75: #{pointnet_set_abstraction.6} parent=70 // loop_body
                %v866 = vld [vmem:[%s864] sm:$0xff]
                %867 = vst [vmem:[%s865] sm:$0xff] %v866
                %v868 = vld [vmem:[%s864 + $0x8] sm:$0xff]
                %869 = vst [vmem:[%s865 + $0x8] sm:$0xff] %v868
                %v870 = vld [vmem:[%s864 + $0x10] sm:$0xff]
                %871 = vst [vmem:[%s865 + $0x20] sm:$0xff] %v870
                %v872 = vld [vmem:[%s864 + $0x18] sm:$0xff]
                %873 = vst [vmem:[%s865 + $0x28] sm:$0xff] %v872
                %v874 = vld [vmem:[%s864 + $0x20] sm:$0xff]
                %875 = vst [vmem:[%s865 + $0x40] sm:$0xff] %v874
                %v876 = vld [vmem:[%s864 + $0x28] sm:$0xff]
                %877 = vst [vmem:[%s865 + $0x48] sm:$0xff] %v876
                %v878 = vld [vmem:[%s864 + $0x30] sm:$0xff]
                %879 = vst [vmem:[%s865 + $0x60] sm:$0xff] %v878
                %v880 = vld [vmem:[%s864 + $0x38] sm:$0xff]
                %881 = vst [vmem:[%s865 + $0x68] sm:$0xff] %v880
              $region76: #{pointnet_set_abstraction.6} parent=70 // loop_footer
                %s863 = sadd.s32 1, %s859
              $region77: #{pointnet_set_abstraction.6} parent=70 // loop_footer_branch
                %858 = sbr.rel target = $region73
              $region78: #{pointnet_set_abstraction.6} parent=70 // loop_exit
                _
            $region71: #{pointnet_set_abstraction.6} parent=66 // pred_fallthru
              _
            // Predicated region
            $region79: #{pointnet_set_abstraction.6} parent=66 // pred_check
              _
            $region80: #{pointnet_set_abstraction.6} parent=66 // pred_check_branch
              %883 = sbr.rel target = $region82
            $region81: #{pointnet_set_abstraction.6} parent=66 // pred_region
              _
            $region82: #{pointnet_set_abstraction.6} parent=66 // pred_fallthru
              _
          $region67: #{pointnet_set_abstraction.6} parent=62 // pred_fallthru
            _
          %884 = vnop
        $region63: #{pointnet_set_abstraction.6} parent=54 // pred_fallthru
          _
        // Predicated region
        $region83: #{pointnet_set_abstraction.6} parent=54 // pred_check
          %p885 = pneg %p151
        $region84: #{pointnet_set_abstraction.6} parent=54 // pred_check_branch
          %887 = sbr.rel (%p885) target = $region86
        $region85: #{pointnet_set_abstraction.6} parent=54 // pred_region
          _
        $region86: #{pointnet_set_abstraction.6} parent=54 // pred_fallthru
          _
        // Predicated region
        $region87: #{pointnet_set_abstraction.6} parent=54 // pred_check
          %p888 = pneg %p177
        $region88: #{pointnet_set_abstraction.6} parent=54 // pred_check_branch
          %890 = sbr.rel (%p888) target = $region90
        $region89: #{pointnet_set_abstraction.6} parent=54 // pred_region
          _
        $region90: #{pointnet_set_abstraction.6} parent=54 // pred_fallthru
          _
      $region55: #{pointnet_set_abstraction.6} parent=5 // pred_fallthru
        _
      %p891 = scmp.le.s32.totalorder 2, %s13
      // Predicated region
      $region91: #{pointnet_set_abstraction.6} parent=5 // pred_check
        %p892 = pneg %p891
      $region92: #{pointnet_set_abstraction.6} parent=5 // pred_check_branch
        %894 = sbr.rel (%p892) target = $region94
      $region93: #{pointnet_set_abstraction.6} parent=5 // pred_region
        %s895 = ssub.s32 %s13, 2
        // Predicated region
        $region95: #{pointnet_set_abstraction.6} parent=93 // pred_check
          %p896 = pneg %p131
        $region96: #{pointnet_set_abstraction.6} parent=93 // pred_check_branch
          %898 = sbr.rel (%p896) target = $region98
        $region97: #{pointnet_set_abstraction.6} parent=93 // pred_region
          %s899 = sand.u32 %s116, 1
          %s900 = sand.u32 %s116, 1
          %s901 = smul.addr %s900, 64
          %s902 = scalar_lea.vmem [#allocation3], %s901
        $region98: #{pointnet_set_abstraction.6} parent=93 // pred_fallthru
          _
        // Predicated region
        $region99: #{pointnet_set_abstraction.6} parent=93 // pred_check
          %p903 = pneg %p157
        $region100: #{pointnet_set_abstraction.6} parent=93 // pred_check_branch
          %905 = sbr.rel (%p903) target = $region102
        $region101: #{pointnet_set_abstraction.6} parent=93 // pred_region
          %p906 = scmp.lt.s32.totalorder %s19, 1
          %s907 = scalar_select %p906, %s19, 1
          %s908 = smul.addr %s907, 4
          %s909 = smul.addr %s908, 8
          %s910 = scalar_lea.vmem %s5, %s909
        $region102: #{pointnet_set_abstraction.6} parent=93 // pred_fallthru
          _
        // Predicated region
        $region103: #{pointnet_set_abstraction.6} parent=93 // pred_check
          %p911 = pneg %p183
        $region104: #{pointnet_set_abstraction.6} parent=93 // pred_check_branch
          %913 = sbr.rel (%p911) target = $region106
        $region105: #{pointnet_set_abstraction.6} parent=93 // pred_region
          %p914 = scmp.lt.s32.totalorder %s19, 1
          %s915 = scalar_select %p914, %s19, 1
          %s916 = smul.addr %s915, 4
          %s917 = smul.addr %s916, 8
          %s918 = scalar_lea.vmem %s6, %s917
        $region106: #{pointnet_set_abstraction.6} parent=93 // pred_fallthru
          _
      $region94: #{pointnet_set_abstraction.6} parent=5 // pred_fallthru
        _
    $region6: #{pointnet_set_abstraction.6} parent=1 // loop_footer
      %s17 = sadd.s32 1, %s13
    $region7: #{pointnet_set_abstraction.6} parent=1 // loop_footer_branch
      %12 = sbr.rel target = $region3
    $region8: #{pointnet_set_abstraction.6} parent=1 // loop_exit
      _

// kernel: pointnet_set_abstraction.7
$region0: #{pointnet_set_abstraction.7}
  #allocation0 [shape = 'u32[]', space=smem, size = 0x4, offset = 0x4, fixed_abs, tag = 'smem constant byte address 0x4 - core index']
  #allocation1 [shape = 'u32[144,128]{1,0:T(1,128)}', space=vmem, size = 0x12000, scoped, tag = 'internal scratch']
  %s0 = inlined_call_operand.vmem [shape: bf16[32,1024], index: 0, kind: input, shape index: {}]
  %s1 = inlined_call_operand.vmem [shape: bf16[32,32], index: 1, kind: input, shape index: {}]
  %s2 = inlined_call_operand.vmem [shape: f32[32,1], index: 2, kind: input, shape index: {}]
  %s3 = inlined_call_operand.vmem [shape: f32[32,1], index: 3, kind: input, shape index: {}]
  %s4 = inlined_call_operand.vmem [shape: f32[32,128], index: 4, kind: output, shape index: {}]
  %s5 = sld [smem:[#allocation0]]
  $region98: #{pointnet_set_abstraction.7} parent=0
    _
  %s7 = ssub.s32 1, %s5
  %s8 = scalar_select 0, %s7, %s5
  $region1: #{pointnet_set_abstraction.7} parent=0
    #allocation2 [shape = 'u8[16384]{0}', space=vmem, size = 0x4000, scoped, tag = 'input window, operand 0']
    loop: start=0, step=1, limit=10
    $region2: #{pointnet_set_abstraction.7} parent=1 // loop_pre_header
      _
    $region3: #{pointnet_set_abstraction.7} parent=1 // loop_header
      %s10 = sphi 0, %s14
      %p11 = scmp.ge.s32.totalorder %s10, 10
      %s17 = sphi 0, %s29
      %s18 = sphi 0, %s25
      %s19 = sphi 0, %s17
      %s20 = sphi 0, %s18
      %s21 = sphi 0, %s19
      %s22 = sphi 0, %s20
      %s34 = sphi 0, %s36
      %s37 = sphi 0, %s34
      %s38 = sphi 0, %s37
      %s54 = sphi 0, %s38
      %s58 = sphi 0, %s58
      %s60 = sphi 0, %s58
      %s61 = sphi 0, %s60
      %s75 = sphi 0, %s61
      %s79 = sphi 0, %s79
      %s81 = sphi 0, %s79
      %s82 = sphi 0, %s81
      %s96 = sphi 0, %s82
      %s100 = sphi 0, %s100
      %s102 = sphi 0, %s100
      %s103 = sphi 0, %s102
      %s117 = sphi 0, %s103
      %s123 = sphi 0, %s125
      %s126 = sphi 0, %s123
      %s127 = sphi 0, %s126
      %s143 = sphi 0, %s127
    $region4: #{pointnet_set_abstraction.7} parent=1 // loop_header_branch
      %13 = sbr.rel (%p11) target = $region8
    $region5: #{pointnet_set_abstraction.7} parent=1 // loop_body
      %s15 = ssub.s32 %s10, 1
      %s16 = ssub.s32 %s10, 2
      %s23 = sadd.s32 1, %s18
      %p24 = scmp.ge.s32.totalorder %s23, 8
      %s25 = scalar_select %p24, 0, %s23
      %s26 = sadd.s32 1, %s17
      %s27 = scalar_select %p24, %s26, %s17
      %p28 = scmp.ge.s32.totalorder %s27, 1
      %s29 = scalar_select %p28, 0, %s27
      %s30 = sadd.s32 %s18, %s17
      %s31 = sadd.s32 %s25, %s29
      %s32 = ssub.s32 %s30, %s31
      %p33 = scmp.eq.s32.totalorder %s32, 0
      %s35 = sadd.s32 %s34, 1
      %s36 = scalar_select %p33, %s34, %s35
      %p39 = pneg %p33
      %p40 = scmp.eq.s32.totalorder %s10, 7
      %p41 = por %p39, %p40
      %p42 = scmp.ne.s32.totalorder %s34, %s37
      %p43 = scmp.eq.s32.totalorder %s10, 0
      %p44 = por %p42, %p43
      %p45 = scmp.ne.s32.totalorder %s34, %s37
      %p46 = scmp.eq.s32.totalorder %s15, 7
      %p47 = por %p45, %p46
      %p48 = scmp.ne.s32.totalorder %s37, %s38
      %p49 = scmp.eq.s32.totalorder %s15, 0
      %p50 = por %p48, %p49
      %p51 = scmp.ne.s32.totalorder %s37, %s38
      %p52 = scmp.eq.s32.totalorder %s16, 7
      %p53 = por %p51, %p52
      %p55 = scmp.ne.s32.totalorder %s38, %s54
      %p56 = scmp.eq.s32.totalorder %s16, 0
      %p57 = por %p55, %p56
      %s59 = sadd.s32 %s58, 1
      %p62 = scmp.eq.s32.totalorder %s10, 7
      %p63 = scmp.ne.s32.totalorder %s58, %s60
      %p64 = scmp.eq.s32.totalorder %s10, 0
      %p65 = por %p63, %p64
      %p66 = scmp.ne.s32.totalorder %s58, %s60
      %p67 = scmp.eq.s32.totalorder %s15, 7
      %p68 = por %p66, %p67
      %p69 = scmp.ne.s32.totalorder %s60, %s61
      %p70 = scmp.eq.s32.totalorder %s15, 0
      %p71 = por %p69, %p70
      %p72 = scmp.ne.s32.totalorder %s60, %s61
      %p73 = scmp.eq.s32.totalorder %s16, 7
      %p74 = por %p72, %p73
      %p76 = scmp.ne.s32.totalorder %s61, %s75
      %p77 = scmp.eq.s32.totalorder %s16, 0
      %p78 = por %p76, %p77
      %s80 = sadd.s32 %s79, 1
      %p83 = scmp.eq.s32.totalorder %s10, 7
      %p84 = scmp.ne.s32.totalorder %s79, %s81
      %p85 = scmp.eq.s32.totalorder %s10, 0
      %p86 = por %p84, %p85
      %p87 = scmp.ne.s32.totalorder %s79, %s81
      %p88 = scmp.eq.s32.totalorder %s15, 7
      %p89 = por %p87, %p88
      %p90 = scmp.ne.s32.totalorder %s81, %s82
      %p91 = scmp.eq.s32.totalorder %s15, 0
      %p92 = por %p90, %p91
      %p93 = scmp.ne.s32.totalorder %s81, %s82
      %p94 = scmp.eq.s32.totalorder %s16, 7
      %p95 = por %p93, %p94
      %p97 = scmp.ne.s32.totalorder %s82, %s96
      %p98 = scmp.eq.s32.totalorder %s16, 0
      %p99 = por %p97, %p98
      %s101 = sadd.s32 %s100, 1
      %p104 = scmp.eq.s32.totalorder %s10, 7
      %p105 = scmp.ne.s32.totalorder %s100, %s102
      %p106 = scmp.eq.s32.totalorder %s10, 0
      %p107 = por %p105, %p106
      %p108 = scmp.ne.s32.totalorder %s100, %s102
      %p109 = scmp.eq.s32.totalorder %s15, 7
      %p110 = por %p108, %p109
      %p111 = scmp.ne.s32.totalorder %s102, %s103
      %p112 = scmp.eq.s32.totalorder %s15, 0
      %p113 = por %p111, %p112
      %p114 = scmp.ne.s32.totalorder %s102, %s103
      %p115 = scmp.eq.s32.totalorder %s16, 7
      %p116 = por %p114, %p115
      %p118 = scmp.ne.s32.totalorder %s103, %s117
      %p119 = scmp.eq.s32.totalorder %s16, 0
      %p120 = por %p118, %p119
      %s121 = ssub.s32 %s17, %s29
      %p122 = scmp.eq.s32.totalorder %s121, 0
      %s124 = sadd.s32 %s123, 1
      %s125 = scalar_select %p122, %s123, %s124
      %p128 = pneg %p122
      %p129 = scmp.eq.s32.totalorder %s10, 7
      %p130 = por %p128, %p129
      %p131 = scmp.ne.s32.totalorder %s123, %s126
      %p132 = scmp.eq.s32.totalorder %s10, 0
      %p133 = por %p131, %p132
      %p134 = scmp.ne.s32.totalorder %s123, %s126
      %p135 = scmp.eq.s32.totalorder %s15, 7
      %p136 = por %p134, %p135
      %p137 = scmp.ne.s32.totalorder %s126, %s127
      %p138 = scmp.eq.s32.totalorder %s15, 0
      %p139 = por %p137, %p138
      %p140 = scmp.ne.s32.totalorder %s126, %s127
      %p141 = scmp.eq.s32.totalorder %s16, 7
      %p142 = por %p140, %p141
      %p144 = scmp.ne.s32.totalorder %s127, %s143
      %p145 = scmp.eq.s32.totalorder %s16, 0
      %p146 = por %p144, %p145
      %p147 = scmp.le.s32.totalorder 1, %s10
      %p148 = scmp.lt.s32.totalorder %s10, 9
      %p149 = pnand %p147, %p148
      %p150 = pneg %p149
      // Predicated region
      $region9: #{pointnet_set_abstraction.7} parent=5 // pred_check
        _
      $region10: #{pointnet_set_abstraction.7} parent=5 // pred_check_branch
        %152 = sbr.rel (%p149) target = $region12
      $region11: #{pointnet_set_abstraction.7} parent=5 // pred_region
        %s153 = ssub.s32 %s10, 1
        // Predicated region
        $region13: #{pointnet_set_abstraction.7} parent=11 // pred_check
          %p154 = pneg %p71
        $region14: #{pointnet_set_abstraction.7} parent=11 // pred_check_branch
          %156 = sbr.rel (%p154) target = $region16
        $region15: #{pointnet_set_abstraction.7} parent=11 // pred_region
          _
        $region16: #{pointnet_set_abstraction.7} parent=11 // pred_fallthru
          _
        // Predicated region
        $region17: #{pointnet_set_abstraction.7} parent=11 // pred_check
          %p157 = pneg %p92
        $region18: #{pointnet_set_abstraction.7} parent=11 // pred_check_branch
          %159 = sbr.rel (%p157) target = $region20
        $region19: #{pointnet_set_abstraction.7} parent=11 // pred_region
          _
        $region20: #{pointnet_set_abstraction.7} parent=11 // pred_fallthru
          _
        // Predicated region
        $region21: #{pointnet_set_abstraction.7} parent=11 // pred_check
          %p160 = pneg %p113
        $region22: #{pointnet_set_abstraction.7} parent=11 // pred_check_branch
          %162 = sbr.rel (%p160) target = $region24
        $region23: #{pointnet_set_abstraction.7} parent=11 // pred_region
          _
        $region24: #{pointnet_set_abstraction.7} parent=11 // pred_fallthru
          _
      $region12: #{pointnet_set_abstraction.7} parent=5 // pred_fallthru
        _
      %p163 = scmp.lt.s32.totalorder %s10, 8
      // Predicated region
      $region25: #{pointnet_set_abstraction.7} parent=5 // pred_check
        %p164 = pneg %p163
      $region26: #{pointnet_set_abstraction.7} parent=5 // pred_check_branch
        %166 = sbr.rel (%p164) target = $region28
      $region27: #{pointnet_set_abstraction.7} parent=5 // pred_region
        // Predicated region
        $region29: #{pointnet_set_abstraction.7} parent=27 // pred_check
          %p167 = pneg %p44
        $region30: #{pointnet_set_abstraction.7} parent=27 // pred_check_branch
          %169 = sbr.rel (%p167) target = $region32
        $region31: #{pointnet_set_abstraction.7} parent=27 // pred_region
          %s170 = sand.u32 %s34, 1
          %s171 = sand.u32 %s34, 1
          %s172 = smul.addr %s171, 16
          %s173 = scalar_lea.vmem [#allocation2], %s172
          %s174 = sadd.s32 %s18, %s17
          %s175 = smul.addr %s174, 4
          %s176 = scalar_lea.vmem %s0, %s175
          // Predicated region
          $region33: #{pointnet_set_abstraction.7} parent=31 // pred_check
            _
          $region34: #{pointnet_set_abstraction.7} parent=31 // pred_check_branch
            %178 = sbr.rel (0) target = $region36
          $region35: #{pointnet_set_abstraction.7} parent=31 // pred_region
            // Predicated region
            $region37: #{pointnet_set_abstraction.7} parent=35 // pred_check
              _
            $region38: #{pointnet_set_abstraction.7} parent=35 // pred_check_branch
              %180 = sbr.rel target = $region40
            $region39: #{pointnet_set_abstraction.7} parent=35 // pred_region
              // Predicated region
              $region52: #{pointnet_set_abstraction.7} parent=39 // pred_check
                _
              $region53: #{pointnet_set_abstraction.7} parent=39 // pred_check_branch
                %201 = sbr.rel (0) target = $region55
              $region54: #{pointnet_set_abstraction.7} parent=39 // pred_region
                loop: start=0, step=1, limit=1
                $region56: #{pointnet_set_abstraction.7} parent=54 // loop_pre_header
                  _
                $region57: #{pointnet_set_abstraction.7} parent=54 // loop_header
                  %s203 = sphi 0, %s207
                  %p204 = scmp.ge.s32.totalorder %s203, 1
                  %s208 = sphi %s176, %s176
                  %s209 = sphi %s173, %s173
                $region58: #{pointnet_set_abstraction.7} parent=54 // loop_header_branch
                  %206 = sbr.rel (%p204) target = $region62
                $region59: #{pointnet_set_abstraction.7} parent=54 // loop_body
                  _
                $region60: #{pointnet_set_abstraction.7} parent=54 // loop_footer
                  %s207 = sadd.s32 1, %s203
                $region61: #{pointnet_set_abstraction.7} parent=54 // loop_footer_branch
                  %202 = sbr.rel target = $region57
                $region62: #{pointnet_set_abstraction.7} parent=54 // loop_exit
                  _
                loop: start=0, step=1, limit=1
                $region63: #{pointnet_set_abstraction.7} parent=54 // loop_pre_header
                  _
                $region64: #{pointnet_set_abstraction.7} parent=54 // loop_header
                  %s212 = sphi 0, %s216
                  %p213 = scmp.ge.s32.totalorder %s212, 1
                  %s217 = sphi %s176, %s176
                  %s218 = sphi %s173, %s173
                $region65: #{pointnet_set_abstraction.7} parent=54 // loop_header_branch
                  %215 = sbr.rel (%p213) target = $region69
                $region66: #{pointnet_set_abstraction.7} parent=54 // loop_body
                  %v219 = vld [vmem:[%s217] sm:$0xf]
                  %220 = vst [vmem:[%s218] sm:$0xf] %v219
                  %v221 = vld [vmem:[%s217 + $0x20] sm:$0xf]
                  %222 = vst [vmem:[%s218 + $0x4] sm:$0xf] %v221
                  %v223 = vld [vmem:[%s217 + $0x40] sm:$0xf]
                  %224 = vst [vmem:[%s218 + $0x8] sm:$0xf] %v223
                  %v225 = vld [vmem:[%s217 + $0x60] sm:$0xf]
                  %226 = vst [vmem:[%s218 + $0xc] sm:$0xf] %v225
                $region67: #{pointnet_set_abstraction.7} parent=54 // loop_footer
                  %s216 = sadd.s32 1, %s212
                $region68: #{pointnet_set_abstraction.7} parent=54 // loop_footer_branch
                  %211 = sbr.rel target = $region64
                $region69: #{pointnet_set_abstraction.7} parent=54 // loop_exit
                  _
              $region55: #{pointnet_set_abstraction.7} parent=39 // pred_fallthru
                _
            $region40: #{pointnet_set_abstraction.7} parent=35 // pred_fallthru
              _
            // Predicated region
            $region41: #{pointnet_set_abstraction.7} parent=35 // pred_check
              _
            $region42: #{pointnet_set_abstraction.7} parent=35 // pred_check_branch
              %182 = sbr.rel (0) target = $region44
            $region43: #{pointnet_set_abstraction.7} parent=35 // pred_region
              loop: start=0, step=1, limit=1
              $region45: #{pointnet_set_abstraction.7} parent=43 // loop_pre_header
                _
              $region46: #{pointnet_set_abstraction.7} parent=43 // loop_header
                %s185 = sphi 0, %s189
                %p186 = scmp.ge.s32.totalorder %s185, 1
                %s190 = sphi %s176, %s176
                %s191 = sphi %s173, %s173
              $region47: #{pointnet_set_abstraction.7} parent=43 // loop_header_branch
                %188 = sbr.rel (%p186) target = $region51
              $region48: #{pointnet_set_abstraction.7} parent=43 // loop_body
                %v192 = vld [vmem:[%s190] sm:$0xf]
                %193 = vst [vmem:[%s191] sm:$0xf] %v192
                %v194 = vld [vmem:[%s190 + $0x20] sm:$0xf]
                %195 = vst [vmem:[%s191 + $0x4] sm:$0xf] %v194
                %v196 = vld [vmem:[%s190 + $0x40] sm:$0xf]
                %197 = vst [vmem:[%s191 + $0x8] sm:$0xf] %v196
                %v198 = vld [vmem:[%s190 + $0x60] sm:$0xf]
                %199 = vst [vmem:[%s191 + $0xc] sm:$0xf] %v198
              $region49: #{pointnet_set_abstraction.7} parent=43 // loop_footer
                %s189 = sadd.s32 1, %s185
              $region50: #{pointnet_set_abstraction.7} parent=43 // loop_footer_branch
                %184 = sbr.rel target = $region46
              $region51: #{pointnet_set_abstraction.7} parent=43 // loop_exit
                _
            $region44: #{pointnet_set_abstraction.7} parent=35 // pred_fallthru
              _
          $region36: #{pointnet_set_abstraction.7} parent=31 // pred_fallthru
            _
          %227 = vnop
        $region32: #{pointnet_set_abstraction.7} parent=27 // pred_fallthru
          _
      $region28: #{pointnet_set_abstraction.7} parent=5 // pred_fallthru
        _
      %p228 = scmp.le.s32.totalorder 1, %s10
      %p229 = scmp.lt.s32.totalorder %s10, 9
      %p230 = pnand %p228, %p229
      %p231 = pneg %p230
      // Predicated region
      $region70: #{pointnet_set_abstraction.7} parent=5 // pred_check
        _
      $region71: #{pointnet_set_abstraction.7} parent=5 // pred_check_branch
        %233 = sbr.rel (%p230) target = $region73
      $region72: #{pointnet_set_abstraction.7} parent=5 // pred_region
        %s234 = ssub.s32 %s10, 1
        %s235 = sand.u32 %s37, 1
        %s236 = sand.u32 %s37, 1
        %s237 = smul.addr %s236, 16
        %s238 = scalar_lea.vmem [#allocation2], %s237
        // Predicated region
        $region74: #{pointnet_set_abstraction.7} parent=72 // pred_check
          %p239 = pneg %p50
        $region75: #{pointnet_set_abstraction.7} parent=72 // pred_check_branch
          %241 = sbr.rel (%p239) target = $region77
        $region76: #{pointnet_set_abstraction.7} parent=72 // pred_region
          _
        $region77: #{pointnet_set_abstraction.7} parent=72 // pred_fallthru
          _
        %s242 = sand.u32 %s37, 1
        %s243 = sand.u32 %s37, 1
        %s244 = smul.addr %s243, 16
        %s245 = scalar_lea.vmem [#allocation2], %s244
        %p246 = pneg %p50
        %p247 = pneg %p47
        %p248 = pneg %p71
        %p249 = pneg %p68
        %p250 = pneg %p92
        %p251 = pneg %p89
        %p252 = pneg %p113
        %p253 = pneg %p110
        %p254 = pneg %p139
        %p255 = pneg %p136
        %p256 = scmp.lt.s32.totalorder %s19, 0
        %s257 = scalar_select %p256, %s19, 0
        %s258 = smul.addr %s257, 8
        %s259 = scalar_lea.vmem %s4, %s258
        %s260 = sadd.s32 %s20, %s19
        %p261 = scmp.lt.s32.totalorder %s19, 0
        %s262 = scalar_select %p261, %s19, 0
        %s263 = smul.addr %s262, 8
        %s264 = scalar_lea.vmem %s4, %s263
        %v266 = vld [vmem:[%s1] sm:$0xf]
        %v267 = vld [vmem:[%s1 + $0x4] sm:$0xf]
        %v268 = vld [vmem:[%s1 + $0x8] sm:$0xf]
        %v269 = vld [vmem:[%s1 + $0xc] sm:$0xf]
        %v270 = vld [vmem:[%s238] sm:$0xf]
        %v271 = vld [vmem:[%s238 + $0x4] sm:$0xf]
        %v272 = vld [vmem:[%s238 + $0x8] sm:$0xf]
        %v273 = vld [vmem:[%s238 + $0xc] sm:$0xf]
        %v278 = vunpack.c.l.b16 %v266
        %v279 = vunpack.c.l.b16 %v267
        %v280 = vunpack.c.l.b16 %v268
        %v281 = vunpack.c.l.b16 %v269
        %v282 = vpack.c.b16 %v279, %v278
        %v283 = vpack.c.b16 %v281, %v280
        %v288 = vunpack.c.l.b16 %v270
        %v289 = vunpack.c.l.b16 %v271
        %v290 = vunpack.c.l.b16 %v272
        %v291 = vunpack.c.l.b16 %v273
        %v292 = vpack.c.b16 %v289, %v288
        %v293 = vpack.c.b16 %v291, %v290
        %vm296 = vcmask 261120
        %v298 = vsel %vm296, %v282, 0
        %v301 = vsel %vm296, %v283, 0
        %303 = vmatprep.subr.bf16.mxu0 0
        %304 = vmatpush1.bf16.msra.mxu0 %v292
        %305 = vmatprep.subr.bf16.mxu0 0
        %306 = vmatpush1.bf16.msra.mxu0 %v293
        %307 = vmatprep.subr.bf16.mxu0 0
        %308 = vmatpush1.bf16.msra.mxu0 0
        %309 = vmatprep.subr.bf16.mxu0 0
        %310 = vmatpush1.bf16.msra.mxu0 0
        %311 = vmatprep.subr.bf16.mxu0 0
        %312 = vmatpush1.bf16.msra.mxu0 0
        %313 = vmatprep.subr.bf16.mxu0 0
        %314 = vmatpush1.bf16.msra.mxu0 0
        %315 = vmatprep.subr.bf16.mxu0 0
        %316 = vmatpush1.bf16.msra.mxu0 0
        %317 = vmatprep.subr.bf16.mxu0 0
        %318 = vmatpush1.bf16.msra.mxu0 0
        %319 = vmatprep.subr.bf16.mxu0 0
        %320 = vmatpush1.bf16.msra.mxu0 0
        %321 = vmatprep.subr.bf16.mxu0 0
        %322 = vmatpush1.bf16.msra.mxu0 0
        %323 = vmatprep.subr.bf16.mxu0 0
        %324 = vmatpush1.bf16.msra.mxu0 0
        %325 = vmatprep.subr.bf16.mxu0 0
        %326 = vmatpush1.bf16.msra.mxu0 0
        %327 = vmatprep.subr.bf16.mxu0 0
        %328 = vmatpush1.bf16.msra.mxu0 0
        %329 = vmatprep.subr.bf16.mxu0 0
        %330 = vmatpush1.bf16.msra.mxu0 0
        %331 = vmatprep.subr.bf16.mxu0 0
        %332 = vmatpush1.bf16.msra.mxu0 0
        %333 = vmatprep.subr.bf16.mxu0 0
        %334 = vmatpush1.bf16.msra.mxu0 0
        %335 = vmatprep.mubr.bf16.mxu0 0
        %336 = vmatmul.mubr.bf16.gmra.mrb[0].mxu0 %v298
        %v337 = vpop.f32.mrb[0].mxu0
        %v338 = vadd.f32 0.0, %v337
        %v339 = vpop.f32.mrb[0].mxu0
        %v340 = vpop.f32.mrb[0].mxu0
        %v341 = vadd.f32 0.0, %v340
        %v342 = vpop.f32.mrb[0].mxu0
        %343 = vmatprep.mubr.bf16.mxu0 0
        %344 = vmatmul.mubr.bf16.gmra.mrb[0].mxu0 %v301
        %v345 = vpop.f32.mrb[0].mxu0
        %v346 = vadd.f32 0.0, %v345
        %v347 = vpop.f32.mrb[0].mxu0
        %v348 = vpop.f32.mrb[0].mxu0
        %v349 = vadd.f32 0.0, %v348
        %v350 = vpop.f32.mrb[0].mxu0
        %351 = vdwg.mxu0
        %v352 = vld [vmem:[%s2] sm:$0xff]
        %v353 = vld [vmem:[%s2 + $0x8] sm:$0xff]
        %v354 = vld [vmem:[%s2 + $0x10] sm:$0xff]
        %v355 = vld [vmem:[%s2 + $0x18] sm:$0xff]
        %357 = vset.pattern.permute.xlu0 0
        %358 = vperm.xlu0 %357, %v352
        %v359 = vpop.permute.xlu0 %358
        %362 = vset.pattern.permute.xlu0 0
        %363 = vperm.xlu0 %362, %v353
        %v364 = vpop.permute.xlu0 %363
        %367 = vset.pattern.permute.xlu0 0
        %368 = vperm.xlu0 %367, %v354
        %v369 = vpop.permute.xlu0 %368
        %372 = vset.pattern.permute.xlu0 0
        %373 = vperm.xlu0 %372, %v355
        %v374 = vpop.permute.xlu0 %373
        %v376 = vmul.f32 %v338, %v359
        %v377 = vmul.f32 %v341, %v364
        %v378 = vmul.f32 %v346, %v369
        %v379 = vmul.f32 %v349, %v374
        %v380 = vld [vmem:[%s3] sm:$0xff]
        %v381 = vld [vmem:[%s3 + $0x8] sm:$0xff]
        %v382 = vld [vmem:[%s3 + $0x10] sm:$0xff]
        %v383 = vld [vmem:[%s3 + $0x18] sm:$0xff]
        %385 = vset.pattern.permute.xlu0 0
        %386 = vperm.xlu0 %385, %v380
        %v387 = vpop.permute.xlu0 %386
        %390 = vset.pattern.permute.xlu0 0
        %391 = vperm.xlu0 %390, %v381
        %v392 = vpop.permute.xlu0 %391
        %395 = vset.pattern.permute.xlu0 0
        %396 = vperm.xlu0 %395, %v382
        %v397 = vpop.permute.xlu0 %396
        %400 = vset.pattern.permute.xlu0 0
        %401 = vperm.xlu0 %400, %v383
        %v402 = vpop.permute.xlu0 %401
        %v404 = vadd.f32 %v376, %v387
        %v405 = vadd.f32 %v377, %v392
        %v406 = vadd.f32 %v378, %v397
        %v407 = vadd.f32 %v379, %v402
        %v408 = vmax.f32 %v404, 0.0
        %v409 = vmax.f32 %v405, 0.0
        %v410 = vmax.f32 %v406, 0.0
        %v411 = vmax.f32 %v407, 0.0
        %p412 = scmp.eq.s32.totalorder %s20, 0
        // Predicated region
        $region78: #{pointnet_set_abstraction.7} parent=72 // pred_check
          %p413 = pneg %p412
        $region79: #{pointnet_set_abstraction.7} parent=72 // pred_check_branch
          %415 = sbr.rel (%p413) target = $region81
        $region80: #{pointnet_set_abstraction.7} parent=72 // pred_region
          %416 = vst [vmem:[%s264] sm:$0xff] %v408
          %417 = vst [vmem:[%s264 + $0x8] sm:$0xff] %v409
          %418 = vst [vmem:[%s264 + $0x10] sm:$0xff] %v410
          %419 = vst [vmem:[%s264 + $0x18] sm:$0xff] %v411
        $region81: #{pointnet_set_abstraction.7} parent=72 // pred_fallthru
          _
        %p420 = scmp.gt.s32.totalorder %s20, 0
        // Predicated region
        $region82: #{pointnet_set_abstraction.7} parent=72 // pred_check
          %p421 = pneg %p420
        $region83: #{pointnet_set_abstraction.7} parent=72 // pred_check_branch
          %423 = sbr.rel (%p421) target = $region85
        $region84: #{pointnet_set_abstraction.7} parent=72 // pred_region
          %v424 = vld [vmem:[%s264] sm:$0xff]
          %v425 = vld [vmem:[%s264 + $0x8] sm:$0xff]
          %v426 = vld [vmem:[%s264 + $0x10] sm:$0xff]
          %v427 = vld [vmem:[%s264 + $0x18] sm:$0xff]
          %v428 = vmax.f32 %v424, %v408
          %v429 = vmax.f32 %v425, %v409
          %v430 = vmax.f32 %v426, %v410
          %v431 = vmax.f32 %v427, %v411
          %432 = vst [vmem:[%s264] sm:$0xff] %v428
          %433 = vst [vmem:[%s264 + $0x8] sm:$0xff] %v429
          %434 = vst [vmem:[%s264 + $0x10] sm:$0xff] %v430
          %435 = vst [vmem:[%s264 + $0x18] sm:$0xff] %v431
        $region85: #{pointnet_set_abstraction.7} parent=72 // pred_fallthru
          _
        %p436 = scmp.lt.s32.totalorder %s19, 0
        %s437 = scalar_select %p436, %s19, 0
        %s438 = smul.addr %s437, 8
        %s439 = scalar_lea.vmem %s4, %s438
        // Predicated region
        $region86: #{pointnet_set_abstraction.7} parent=72 // pred_check
          %p440 = pneg %p136
        $region87: #{pointnet_set_abstraction.7} parent=72 // pred_check_branch
          %442 = sbr.rel (%p440) target = $region89
        $region88: #{pointnet_set_abstraction.7} parent=72 // pred_region
          _
        $region89: #{pointnet_set_abstraction.7} parent=72 // pred_fallthru
          _
        // Predicated region
        $region90: #{pointnet_set_abstraction.7} parent=72 // pred_check
          %p443 = pneg %p136
        $region91: #{pointnet_set_abstraction.7} parent=72 // pred_check_branch
          %445 = sbr.rel (%p443) target = $region93
        $region92: #{pointnet_set_abstraction.7} parent=72 // pred_region
          %p446 = scmp.lt.s32.totalorder %s19, 0
          %s447 = scalar_select %p446, %s19, 0
          %s448 = smul.addr %s447, 8
          %s449 = scalar_lea.vmem %s4, %s448
        $region93: #{pointnet_set_abstraction.7} parent=72 // pred_fallthru
          _
      $region73: #{pointnet_set_abstraction.7} parent=5 // pred_fallthru
        _
      %p450 = scmp.le.s32.totalorder 2, %s10
      // Predicated region
      $region94: #{pointnet_set_abstraction.7} parent=5 // pred_check
        %p451 = pneg %p450
      $region95: #{pointnet_set_abstraction.7} parent=5 // pred_check_branch
        %453 = sbr.rel (%p451) target = $region97
      $region96: #{pointnet_set_abstraction.7} parent=5 // pred_region
        %s454 = ssub.s32 %s10, 2
      $region97: #{pointnet_set_abstraction.7} parent=5 // pred_fallthru
        _
    $region6: #{pointnet_set_abstraction.7} parent=1 // loop_footer
      %s14 = sadd.s32 1, %s10
    $region7: #{pointnet_set_abstraction.7} parent=1 // loop_footer_branch
      %9 = sbr.rel target = $region3
    $region8: #{pointnet_set_abstraction.7} parent=1 // loop_exit
      _

</llo_original>
